<compile_context>
chip_gen: v7x
topology: tpu7x:2x2x1
jax: 0.10.0
libtpu: 0.0.40
codegen_flags: <defaults>
</compile_context>

<pallas_src>
import numpy as np

import jax
import jax.numpy as jnp
from jax.experimental import pallas as pl
from jax.experimental.pallas import tpu as pltpu

_EPS = 1e-5
_LANE = 128
_NEG_INF = -1e30


def _rup(v, m=_LANE):
    return ((v + m - 1) // m) * m


# ---------------------------------------------------------------------------
# Fused Pallas kernel (one grid step per batch element)
# ---------------------------------------------------------------------------

def _dualgcn_kernel(
        x_ref, g1_ref, g2_ref, g3_ref, dww_ref, dwsh_ref, a_ref,
        wqkv_ref, bqkv_ref, swgw_ref, swgsh_ref, soutw_ref, soutsh_ref,
        amask_ref,
        wphi_ref, sphi_ref, wth_ref, sth_ref, wadj_ref, sadj_ref,
        gwgw_ref, gwgsh_ref, w3_ref, s3_ref,
        fw1_ref, fw2_ref, fsh_ref,
        o_ref):
    f32 = jnp.float32
    bf16 = jnp.bfloat16

    x_b = x_ref[0]                       # (HW, Cp) bf16 -- read from HBM once
    x_f = x_b.astype(f32)

    # ---- local = self.local(feat): 3 fused depthwise 3x3 stride-2 + BN ----
    # Each stage: taps = G_s @ cur  (lane-dense matmul, 9 tap-blocks stacked
    # along rows), then a per-channel weighted 9-tap sum + folded BN shift.
    dww = dww_ref[...]                   # (3, 9, Cp)  BN scale folded in
    dwsh = dwsh_ref[...]                 # (3, Cp)
    cur = x_b
    for s, g_ref in enumerate((g1_ref, g2_ref, g3_ref)):
        lo = g_ref.shape[0] // 9
        taps = jnp.dot(g_ref[...], cur.astype(bf16),
                       preferred_element_type=f32)      # (9*lo, Cp)
        acc = dwsh[s:s + 1, :]                          # (1, Cp)
        for k in range(9):
            acc = acc + taps[k * lo:(k + 1) * lo, :] * dww[s, k:k + 1, :]
        cur = acc                                       # (lo, Cp) f32
    loc = cur                                           # (Ls, Cp)

    # ---- SpatialGCN on the local feature (all intermediates in VMEM) ----
    ip = swgw_ref.shape[0]
    loc_b = loc.astype(bf16)
    qkv = (jnp.dot(loc_b, wqkv_ref[...], preferred_element_type=f32)
           + bqkv_ref[...])                             # (Ls, 3*Ip), one pass
    q_p = qkv[:, :ip]
    v_p = qkv[:, ip:2 * ip]
    k_p = qkv[:, 2 * ip:]
    # AV = softmax(node_q @ node_v, dim=-1)  -> (inter, inter)
    s_mat = jax.lax.dot_general(q_p.astype(bf16), v_p.astype(bf16),
                                (((0,), (0,)), ((), ())),
                                preferred_element_type=f32)
    s_mat = s_mat + amask_ref[...]        # mask padded inter columns
    s_mat = s_mat - jnp.max(s_mat, axis=-1, keepdims=True)
    e = jnp.exp(s_mat)
    attn = e * pl.reciprocal(jnp.sum(e, axis=-1, keepdims=True), approx=True)
    av = jnp.dot(k_p.astype(bf16), attn.astype(bf16),
                 preferred_element_type=f32)            # (Ls, Ip)
    # conv_wg (+bn_wg, scale folded)
    avw = (jnp.dot(av.astype(bf16), swgw_ref[...], preferred_element_type=f32)
           + swgsh_ref[...])
    # out conv (+bias+BN folded) + residual + relu
    sg = jnp.maximum(
        jnp.dot(avw.astype(bf16), soutw_ref[...], preferred_element_type=f32)
        + soutsh_ref[...] + loc, 0.0)                   # (Ls, Cp)

    # bilinear upsample (align_corners=True) + x*local + x
    up = jnp.dot(a_ref[...], sg, preferred_element_type=f32)   # (HW, Cp)
    slf = x_f * up + x_f

    # ---- global (feature) GCN branch ----
    phi = jnp.dot(x_b, wphi_ref[...], preferred_element_type=f32) + sphi_ref[...]
    th = jnp.dot(x_b, wth_ref[...], preferred_element_type=f32) + sth_ref[...]
    z_idt = jax.lax.dot_general(phi.astype(bf16), th.astype(bf16),
                                (((0,), (0,)), ((), ())),
                                preferred_element_type=f32)     # (2m, m)
    # conv_adj (+bn_adj, scale folded), then z += z_idt
    z = (z_idt
         + jnp.dot(z_idt.astype(bf16), wadj_ref[...], preferred_element_type=f32)
         + sadj_ref[...])
    # conv_wg (+bn_wg, scale folded)
    z = (jnp.dot(gwgw_ref[...], z.astype(bf16), preferred_element_type=f32)
         + gwgsh_ref[...])
    # y = z @ b  (channels-last: (HW, 2m))
    y = jax.lax.dot_general(th.astype(bf16), z.astype(bf16),
                            (((1,), (1,)), ((), ())),
                            preferred_element_type=f32)
    # conv3 + bn3 + residual + relu
    g_out = jnp.maximum(
        x_f + jnp.dot(y.astype(bf16), w3_ref[...], preferred_element_type=f32)
        + s3_ref[...], 0.0)

    # ---- final: 1x1 conv over channel-concat via split weights + BN ----
    o_ref[0] = (jnp.dot(slf.astype(bf16), fw1_ref[...], preferred_element_type=f32)
                + jnp.dot(g_out.astype(bf16), fw2_ref[...], preferred_element_type=f32)
                + fsh_ref[...])


# ---------------------------------------------------------------------------
# Wrapper
# ---------------------------------------------------------------------------

def _const_spec(arr):
    rank = arr.ndim
    return pl.BlockSpec(arr.shape, lambda i, _r=rank: (0,) * _r)


def _dw_gather_matrix(hi, wi):
    """Selection matrix for depthwise 3x3/s2/p1: rows = 9 tap-blocks of ho*wo."""
    ho, wo = hi // 2, wi // 2
    g = np.zeros((9 * ho * wo, hi * wi), np.float32)
    for kh in range(3):
        for kw in range(3):
            base = (kh * 3 + kw) * ho * wo
            for i in range(ho):
                r = 2 * i + kh - 1
                if r < 0 or r >= hi:
                    continue
                for j in range(wo):
                    c = 2 * j + kw - 1
                    if 0 <= c < wi:
                        g[base + i * wo + j, r * wi + c] = 1.0
    return g


def bilinear_matrix_1d(out_size, in_size):
    """1-D bilinear interp matrix, align_corners=True semantics."""
    a = np.zeros((out_size, in_size), dtype=np.float32)
    for i in range(out_size):
        s = 0.0 if out_size == 1 else i * (in_size - 1) / (out_size - 1)
        i0 = min(int(np.floor(s)), in_size - 1)
        i1 = min(i0 + 1, in_size - 1)
        frac = float(s - i0)
        a[i, i0] += 1.0 - frac
        a[i, i1] += frac
    return a


def dual_gcn_forward(x_nchw, fp):
    n, c, h, w = x_nchw.shape
    cp = fp["final_w1"].shape[0]
    hw = h * w
    assert h % 8 == 0 and w % 8 == 0, "three stride-2 stages need /8 spatial dims"

    x_cl = jnp.transpose(x_nchw, (0, 2, 3, 1)).reshape(n, hw, c).astype(jnp.float32)
    x_pad = jnp.pad(x_cl, ((0, 0), (0, 0), (0, cp - c))).astype(jnp.bfloat16)

    # trace-time spatial operators (downsample taps + upsample)
    h1, w1 = h // 2, w // 2
    h2, w2 = h1 // 2, w1 // 2
    h3, w3 = h2 // 2, w2 // 2
    g1 = jnp.asarray(_dw_gather_matrix(h, w), dtype=jnp.bfloat16)
    g2 = jnp.asarray(_dw_gather_matrix(h1, w1), dtype=jnp.bfloat16)
    g3 = jnp.asarray(_dw_gather_matrix(h2, w2), dtype=jnp.bfloat16)
    a_up = jnp.asarray(np.kron(bilinear_matrix_1d(h, h3),
                               bilinear_matrix_1d(w, w3)), dtype=jnp.float32)

    operands = (
        x_pad, g1, g2, g3, fp["dw_w"], fp["dw_sh"], a_up,
        fp["qkv_w"], fp["qkv_b"], fp["swg_w"], fp["swg_sh"],
        fp["sout_w"], fp["sout_sh"], fp["attn_mask"],
        fp["phi_w"], fp["phi_sh"], fp["theta_w"], fp["theta_sh"],
        fp["adj_w"], fp["adj_sh"], fp["gwg_w"], fp["gwg_sh"],
        fp["conv3_w"], fp["conv3_sh"],
        fp["final_w1"], fp["final_w2"], fp["final_sh"],
    )
    in_specs = [pl.BlockSpec((1, hw, cp), lambda i: (i, 0, 0))]
    in_specs += [_const_spec(op) for op in operands[1:]]

    out = pl.pallas_call(
        _dualgcn_kernel,
        out_shape=jax.ShapeDtypeStruct((n, hw, cp), jnp.float32),
        grid=(n,),
        in_specs=in_specs,
        out_specs=pl.BlockSpec((1, hw, cp), lambda i: (i, 0, 0)),
        compiler_params=pltpu.CompilerParams(
            dimension_semantics=("parallel",)),
    )(*operands)

    return out[:, :, :c].reshape(n, h, w, c).transpose(0, 3, 1, 2)


# ---------------------------------------------------------------------------
# Parameters (deterministic synthetic init) + BN folding + lane padding
# ---------------------------------------------------------------------------

def bn_fold(bn, conv_bias=None):
    gamma, beta, mean, var = bn
    scale = gamma / jnp.sqrt(var + _EPS)
    bias = conv_bias if conv_bias is not None else jnp.zeros_like(mean)
    shift = (bias - mean) * scale + beta
    return scale, shift


class _Init:
    def __init__(self, seed=0):
        self.key = jax.random.PRNGKey(seed)
        self.i = 0

    def _k(self):
        self.i += 1
        return jax.random.fold_in(self.key, self.i)

    def w(self, shape, scale=0.1):
        return scale * jax.random.normal(self._k(), shape, dtype=jnp.float32)

    def bn(self, c):
        gamma = 1.0 + 0.1 * jax.random.normal(self._k(), (c,), dtype=jnp.float32)
        beta = 0.1 * jax.random.normal(self._k(), (c,), dtype=jnp.float32)
        mean = 0.1 * jax.random.normal(self._k(), (c,), dtype=jnp.float32)
        var = 0.5 + jax.random.uniform(self._k(), (c,), dtype=jnp.float32)
        return gamma, beta, mean, var


def make_params(planes, ratio=4):
    c = planes
    m = c // ratio
    m2 = 2 * m
    inter = c // 2
    init = _Init(0)
    p = {}
    # global (feature) GCN branch; linear weights stored as (Cin, Cout)
    p["phi_w"] = init.w((c, m2)); p["phi_bn"] = init.bn(m2)
    p["theta_w"] = init.w((c, m)); p["theta_bn"] = init.bn(m)
    p["adj_w"] = init.w((m, m)); p["adj_bn"] = init.bn(m)       # (out, in)
    p["wg_w"] = init.w((m2, m2)); p["wg_bn"] = init.bn(m2)      # (out, in)
    p["conv3_w"] = init.w((m2, c)); p["bn3"] = init.bn(c)
    # local branch: 3 x (depthwise conv3x3 s2 + BN)
    for i in range(3):
        p[f"dw{i}_w"] = init.w((3, 3, c)); p[f"dw{i}_bn"] = init.bn(c)
    # SpatialGCN(plane=C), inter = C // 2
    p["sg_k_w"] = init.w((c, inter)); p["sg_k_b"] = init.w((inter,))
    p["sg_v_w"] = init.w((c, inter)); p["sg_v_b"] = init.w((inter,))
    p["sg_q_w"] = init.w((c, inter)); p["sg_q_b"] = init.w((inter,))
    p["sg_wg_w"] = init.w((inter, inter)); p["sg_wg_bn"] = init.bn(inter)
    p["sg_out_w"] = init.w((inter, c)); p["sg_out_b"] = init.w((c,))
    p["sg_out_bn"] = init.bn(c)
    # final: Conv2d(2C -> C, 1x1, bias=False) + BN
    p["final_w"] = init.w((2 * c, c)); p["final_bn"] = init.bn(c)
    return p


def _pad_to(a, shape):
    pads = [(0, t - s) for s, t in zip(a.shape, shape)]
    return jnp.pad(a, pads)


def fold_params(p, planes, ratio=4):
    """Fold BN scales into weights, zero-pad every channel axis to 128 lanes,
    cast matmul operands to bf16 (shifts stay f32)."""
    c = planes
    m = c // ratio
    m2 = 2 * m
    inter = c // 2
    cp, mp, m2p, ip = _rup(c), _rup(m), _rup(m2), _rup(inter)
    bf16, f32 = jnp.bfloat16, jnp.float32
    f = {}
    # local branch depthwise convs (3 stages stacked)
    dw_w, dw_sh = [], []
    for i in range(3):
        sc, sh = bn_fold(p[f"dw{i}_bn"])
        wf = (p[f"dw{i}_w"] * sc[None, None, :]).reshape(9, c)
        dw_w.append(_pad_to(wf, (9, cp)))
        dw_sh.append(_pad_to(sh[None, :], (1, cp)))
    f["dw_w"] = jnp.stack(dw_w, 0).astype(f32)           # (3, 9, Cp)
    f["dw_sh"] = jnp.concatenate(dw_sh, 0).astype(f32)   # (3, Cp)
    # SpatialGCN: q/v/k fused along the output-channel axis
    f["qkv_w"] = jnp.concatenate(
        [_pad_to(p["sg_q_w"], (cp, ip)),
         _pad_to(p["sg_v_w"], (cp, ip)),
         _pad_to(p["sg_k_w"], (cp, ip))], axis=1).astype(bf16)
    f["qkv_b"] = jnp.concatenate(
        [_pad_to(p["sg_q_b"][None, :], (1, ip)),
         _pad_to(p["sg_v_b"][None, :], (1, ip)),
         _pad_to(p["sg_k_b"][None, :], (1, ip))], axis=1).astype(f32)
    sc, sh = bn_fold(p["sg_wg_bn"])
    f["swg_w"] = _pad_to(p["sg_wg_w"] * sc[None, :], (ip, ip)).astype(bf16)
    f["swg_sh"] = _pad_to(sh[None, :], (1, ip)).astype(f32)
    sc, sh = bn_fold(p["sg_out_bn"], conv_bias=p["sg_out_b"])
    f["sout_w"] = _pad_to(p["sg_out_w"] * sc[None, :], (ip, cp)).astype(bf16)
    f["sout_sh"] = _pad_to(sh[None, :], (1, cp)).astype(f32)
    f["attn_mask"] = jnp.where(jnp.arange(ip)[None, :] < inter,
                               0.0, _NEG_INF).astype(f32)
    # global GCN branch
    sc, sh = bn_fold(p["phi_bn"])
    f["phi_w"] = _pad_to(p["phi_w"] * sc[None, :], (cp, m2p)).astype(bf16)
    f["phi_sh"] = _pad_to(sh[None, :], (1, m2p)).astype(f32)
    sc, sh = bn_fold(p["theta_bn"])
    f["theta_w"] = _pad_to(p["theta_w"] * sc[None, :], (cp, mp)).astype(bf16)
    f["theta_sh"] = _pad_to(sh[None, :], (1, mp)).astype(f32)
    sc, sh = bn_fold(p["adj_bn"])
    f["adj_w"] = _pad_to(p["adj_w"].T * sc[None, :], (mp, mp)).astype(bf16)
    f["adj_sh"] = _pad_to(sh[None, :], (1, mp)).astype(f32)
    sc, sh = bn_fold(p["wg_bn"])
    f["gwg_w"] = _pad_to(p["wg_w"] * sc[:, None], (m2p, m2p)).astype(bf16)
    f["gwg_sh"] = _pad_to(sh[:, None], (m2p, 1)).astype(f32)
    sc, sh = bn_fold(p["bn3"])
    f["conv3_w"] = _pad_to(p["conv3_w"] * sc[None, :], (m2p, cp)).astype(bf16)
    f["conv3_sh"] = _pad_to(sh[None, :], (1, cp)).astype(f32)
    # final conv split into the two concat halves (spatial_local_feat, g_out)
    sc, sh = bn_fold(p["final_bn"])
    fw = p["final_w"] * sc[None, :]
    f["final_w1"] = _pad_to(fw[:c], (cp, cp)).astype(bf16)
    f["final_w2"] = _pad_to(fw[c:], (cp, cp)).astype(bf16)
    f["final_sh"] = _pad_to(sh[None, :], (1, cp)).astype(f32)
    return f


# ---------------------------------------------------------------------------
# Pure-JAX reference (mirrors the PyTorch graph, f32, eval-mode BN)
# ---------------------------------------------------------------------------

def _bn_apply(x, bn):
    gamma, beta, mean, var = bn
    return (x - mean) * (gamma / jnp.sqrt(var + _EPS)) + beta


def _dw_conv_s2_ref(x, w):
    n, h, ww, c = x.shape
    ho, wo = h // 2, ww // 2
    xp = jnp.pad(x, ((0, 0), (1, 1), (1, 1), (0, 0)))
    out = jnp.zeros((n, ho, wo, c), jnp.float32)
    for kh in range(3):
        for kw in range(3):
            out = out + xp[:, kh:kh + 2 * ho:2, kw:kw + 2 * wo:2, :] * w[kh, kw]
    return out


def reference_forward(x_nchw, p):
    x = jnp.transpose(x_nchw, (0, 2, 3, 1)).astype(jnp.float32)
    n, h, w, c = x.shape
    xm = x.reshape(n, h * w, c)
    # local branch
    t = x
    for i in range(3):
        t = _bn_apply(_dw_conv_s2_ref(t, p[f"dw{i}_w"]), p[f"dw{i}_bn"])
    hl, wl = t.shape[1], t.shape[2]
    loc = t.reshape(n, hl * wl, c)
    # SpatialGCN
    q = loc @ p["sg_q_w"] + p["sg_q_b"]
    v = loc @ p["sg_v_w"] + p["sg_v_b"]
    k = loc @ p["sg_k_w"] + p["sg_k_b"]
    s = jnp.einsum("npi,npj->nij", q, v)
    attn = jax.nn.softmax(s, axis=-1)
    av = jnp.einsum("npi,nij->npj", k, attn)
    avw = _bn_apply(av @ p["sg_wg_w"], p["sg_wg_bn"])
    sg = jax.nn.relu(
        _bn_apply(avw @ p["sg_out_w"] + p["sg_out_b"], p["sg_out_bn"]) + loc)
    a = jnp.asarray(np.kron(bilinear_matrix_1d(h, hl), bilinear_matrix_1d(w, wl)))
    up = jnp.einsum("pq,nqc->npc", a, sg)
    slf = xm * up + xm
    # global GCN
    phi = _bn_apply(xm @ p["phi_w"], p["phi_bn"])
    th = _bn_apply(xm @ p["theta_w"], p["theta_bn"])
    z_idt = jnp.einsum("npi,npj->nij", phi, th)
    z = z_idt + _bn_apply(jnp.einsum("nlk,ck->nlc", z_idt, p["adj_w"]),
                          p["adj_bn"])
    zw = jnp.einsum("ck,nkl->ncl", p["wg_w"], z)
    zw = jnp.swapaxes(_bn_apply(jnp.swapaxes(zw, 1, 2), p["wg_bn"]), 1, 2)
    y = jnp.einsum("npc,nkc->npk", th, zw)
    g_out = jax.nn.relu(xm + _bn_apply(y @ p["conv3_w"], p["bn3"]))
    out = _bn_apply(jnp.concatenate([slf, g_out], axis=-1) @ p["final_w"],
                    p["final_bn"])
    return out.reshape(n, h, w, c).transpose(0, 3, 1, 2)


if __name__ == "__main__":
    planes, ratio = 16, 4
    n, h, w = 2, 16, 16

    key = jax.random.PRNGKey(0)
    feat = jax.random.normal(key, (n, planes, h, w), dtype=jnp.float32)

    params = make_params(planes, ratio=ratio)
    fp = fold_params(params, planes, ratio=ratio)

    fwd = jax.jit(dual_gcn_forward)
    out = jax.block_until_ready(fwd(feat, fp))

    assert out.shape == (n, planes, h, w), out.shape
    assert bool(jnp.isfinite(out).all())

    ref = reference_forward(feat, params)
    np.testing.assert_allclose(np.asarray(out), np.asarray(ref),
                               rtol=0.1, atol=0.1)
    print("KERNEL_OK")
</pallas_src>

<mosaic_0001>
module attributes {stable_mosaic.version = 11 : i64} {
  func.func @_dualgcn_kernel(%arg0: i32, %arg1: memref<1x256x128xbf16, #tpu.memory_space<vmem>>, %arg2: memref<576x256xbf16, #tpu.memory_space<vmem>>, %arg3: memref<144x64xbf16, #tpu.memory_space<vmem>>, %arg4: memref<36x16xbf16, #tpu.memory_space<vmem>>, %arg5: memref<3x9x128xf32, #tpu.memory_space<vmem>>, %arg6: memref<3x128xf32, #tpu.memory_space<vmem>>, %arg7: memref<256x4xf32, #tpu.memory_space<vmem>>, %arg8: memref<128x384xbf16, #tpu.memory_space<vmem>>, %arg9: memref<1x384xf32, #tpu.memory_space<vmem>>, %arg10: memref<128x128xbf16, #tpu.memory_space<vmem>>, %arg11: memref<1x128xf32, #tpu.memory_space<vmem>>, %arg12: memref<128x128xbf16, #tpu.memory_space<vmem>>, %arg13: memref<1x128xf32, #tpu.memory_space<vmem>>, %arg14: memref<1x128xf32, #tpu.memory_space<vmem>>, %arg15: memref<128x128xbf16, #tpu.memory_space<vmem>>, %arg16: memref<1x128xf32, #tpu.memory_space<vmem>>, %arg17: memref<128x128xbf16, #tpu.memory_space<vmem>>, %arg18: memref<1x128xf32, #tpu.memory_space<vmem>>, %arg19: memref<128x128xbf16, #tpu.memory_space<vmem>>, %arg20: memref<1x128xf32, #tpu.memory_space<vmem>>, %arg21: memref<128x128xbf16, #tpu.memory_space<vmem>>, %arg22: memref<128x1xf32, #tpu.memory_space<vmem>>, %arg23: memref<128x128xbf16, #tpu.memory_space<vmem>>, %arg24: memref<1x128xf32, #tpu.memory_space<vmem>>, %arg25: memref<128x128xbf16, #tpu.memory_space<vmem>>, %arg26: memref<128x128xbf16, #tpu.memory_space<vmem>>, %arg27: memref<1x128xf32, #tpu.memory_space<vmem>>, %arg28: memref<1x256x128xf32, #tpu.memory_space<vmem>>) attributes {dimension_semantics = [#tpu.dimension_semantics<parallel>], iteration_bounds = array<i64: 2>, scalar_prefetch = 0 : i64, scratch_operands = 0 : i64, tpu.core_type = #tpu.core_type<tc>, window_params = [{transform_indices = @transform_0, window_bounds = array<i64: 1, 256, 128>}, {pipeline_mode = #tpu.pipeline_mode<synchronous>, transform_indices = @transform_1, window_bounds = array<i64: 576, 256>}, {pipeline_mode = #tpu.pipeline_mode<synchronous>, transform_indices = @transform_2, window_bounds = array<i64: 144, 64>}, {pipeline_mode = #tpu.pipeline_mode<synchronous>, transform_indices = @transform_3, window_bounds = array<i64: 36, 16>}, {pipeline_mode = #tpu.pipeline_mode<synchronous>, transform_indices = @transform_4, window_bounds = array<i64: 3, 9, 128>}, {pipeline_mode = #tpu.pipeline_mode<synchronous>, transform_indices = @transform_5, window_bounds = array<i64: 3, 128>}, {pipeline_mode = #tpu.pipeline_mode<synchronous>, transform_indices = @transform_6, window_bounds = array<i64: 256, 4>}, {pipeline_mode = #tpu.pipeline_mode<synchronous>, transform_indices = @transform_7, window_bounds = array<i64: 128, 384>}, {pipeline_mode = #tpu.pipeline_mode<synchronous>, transform_indices = @transform_8, window_bounds = array<i64: 1, 384>}, {pipeline_mode = #tpu.pipeline_mode<synchronous>, transform_indices = @transform_9, window_bounds = array<i64: 128, 128>}, {pipeline_mode = #tpu.pipeline_mode<synchronous>, transform_indices = @transform_10, window_bounds = array<i64: 1, 128>}, {pipeline_mode = #tpu.pipeline_mode<synchronous>, transform_indices = @transform_11, window_bounds = array<i64: 128, 128>}, {pipeline_mode = #tpu.pipeline_mode<synchronous>, transform_indices = @transform_12, window_bounds = array<i64: 1, 128>}, {pipeline_mode = #tpu.pipeline_mode<synchronous>, transform_indices = @transform_13, window_bounds = array<i64: 1, 128>}, {pipeline_mode = #tpu.pipeline_mode<synchronous>, transform_indices = @transform_14, window_bounds = array<i64: 128, 128>}, {pipeline_mode = #tpu.pipeline_mode<synchronous>, transform_indices = @transform_15, window_bounds = array<i64: 1, 128>}, {pipeline_mode = #tpu.pipeline_mode<synchronous>, transform_indices = @transform_16, window_bounds = array<i64: 128, 128>}, {pipeline_mode = #tpu.pipeline_mode<synchronous>, transform_indices = @transform_17, window_bounds = array<i64: 1, 128>}, {pipeline_mode = #tpu.pipeline_mode<synchronous>, transform_indices = @transform_18, window_bounds = array<i64: 128, 128>}, {pipeline_mode = #tpu.pipeline_mode<synchronous>, transform_indices = @transform_19, window_bounds = array<i64: 1, 128>}, {pipeline_mode = #tpu.pipeline_mode<synchronous>, transform_indices = @transform_20, window_bounds = array<i64: 128, 128>}, {pipeline_mode = #tpu.pipeline_mode<synchronous>, transform_indices = @transform_21, window_bounds = array<i64: 128, 1>}, {pipeline_mode = #tpu.pipeline_mode<synchronous>, transform_indices = @transform_22, window_bounds = array<i64: 128, 128>}, {pipeline_mode = #tpu.pipeline_mode<synchronous>, transform_indices = @transform_23, window_bounds = array<i64: 1, 128>}, {pipeline_mode = #tpu.pipeline_mode<synchronous>, transform_indices = @transform_24, window_bounds = array<i64: 128, 128>}, {pipeline_mode = #tpu.pipeline_mode<synchronous>, transform_indices = @transform_25, window_bounds = array<i64: 128, 128>}, {pipeline_mode = #tpu.pipeline_mode<synchronous>, transform_indices = @transform_26, window_bounds = array<i64: 1, 128>}, {transform_indices = @transform_27, window_bounds = array<i64: 1, 256, 128>}]} {
    %c0 = arith.constant 0 : index
    %c0_0 = arith.constant 0 : index
    %c0_1 = arith.constant 0 : index
    %0 = vector.load %arg1[%c0, %c0_0, %c0_1] : memref<1x256x128xbf16, #tpu.memory_space<vmem>>, vector<1x256x128xbf16>
    %1 = vector.shape_cast %0 : vector<1x256x128xbf16> to vector<256x128xbf16>
    %2 = arith.extf %1 : vector<256x128xbf16> to vector<256x128xf32>
    %c0_2 = arith.constant 0 : index
    %c0_3 = arith.constant 0 : index
    %c0_4 = arith.constant 0 : index
    %3 = vector.load %arg5[%c0_2, %c0_3, %c0_4] : memref<3x9x128xf32, #tpu.memory_space<vmem>>, vector<3x9x128xf32>
    %c0_5 = arith.constant 0 : index
    %c0_6 = arith.constant 0 : index
    %4 = vector.load %arg6[%c0_5, %c0_6] : memref<3x128xf32, #tpu.memory_space<vmem>>, vector<3x128xf32>
    %c0_7 = arith.constant 0 : index
    %c0_8 = arith.constant 0 : index
    %5 = vector.load %arg2[%c0_7, %c0_8] : memref<576x256xbf16, #tpu.memory_space<vmem>>, vector<576x256xbf16>
    %cst = arith.constant dense<0.000000e+00> : vector<576x128xf32>
    %6 = tpu.matmul %5, %1, %cst {dimension_numbers = #tpu.dot_dimension_numbers<[1], [0], [0], [1], [0, 0, 1, 1], [], []>} : vector<576x256xbf16>, vector<256x128xbf16>, vector<576x128xf32> -> vector<576x128xf32>
    %7 = vector.extract_strided_slice %4 {offsets = [0, 0], sizes = [1, 128], strides = [1, 1]} : vector<3x128xf32> to vector<1x128xf32>
    %8 = vector.extract_strided_slice %6 {offsets = [0, 0], sizes = [64, 128], strides = [1, 1]} : vector<576x128xf32> to vector<64x128xf32>
    %9 = vector.extract_strided_slice %3 {offsets = [0, 0, 0], sizes = [1, 1, 128], strides = [1, 1, 1]} : vector<3x9x128xf32> to vector<1x1x128xf32>
    %10 = vector.shape_cast %9 : vector<1x1x128xf32> to vector<1x128xf32>
    %11 = vector.broadcast %10 : vector<1x128xf32> to vector<64x128xf32>
    %12 = arith.mulf %8, %11 : vector<64x128xf32>
    %13 = vector.broadcast %7 : vector<1x128xf32> to vector<64x128xf32>
    %14 = arith.addf %13, %12 : vector<64x128xf32>
    %15 = vector.extract_strided_slice %6 {offsets = [64, 0], sizes = [64, 128], strides = [1, 1]} : vector<576x128xf32> to vector<64x128xf32>
    %16 = vector.extract_strided_slice %3 {offsets = [0, 1, 0], sizes = [1, 1, 128], strides = [1, 1, 1]} : vector<3x9x128xf32> to vector<1x1x128xf32>
    %17 = vector.shape_cast %16 : vector<1x1x128xf32> to vector<1x128xf32>
    %18 = vector.broadcast %17 : vector<1x128xf32> to vector<64x128xf32>
    %19 = arith.mulf %15, %18 : vector<64x128xf32>
    %20 = arith.addf %14, %19 : vector<64x128xf32>
    %21 = vector.extract_strided_slice %6 {offsets = [128, 0], sizes = [64, 128], strides = [1, 1]} : vector<576x128xf32> to vector<64x128xf32>
    %22 = vector.extract_strided_slice %3 {offsets = [0, 2, 0], sizes = [1, 1, 128], strides = [1, 1, 1]} : vector<3x9x128xf32> to vector<1x1x128xf32>
    %23 = vector.shape_cast %22 : vector<1x1x128xf32> to vector<1x128xf32>
    %24 = vector.broadcast %23 : vector<1x128xf32> to vector<64x128xf32>
    %25 = arith.mulf %21, %24 : vector<64x128xf32>
    %26 = arith.addf %20, %25 : vector<64x128xf32>
    %27 = vector.extract_strided_slice %6 {offsets = [192, 0], sizes = [64, 128], strides = [1, 1]} : vector<576x128xf32> to vector<64x128xf32>
    %28 = vector.extract_strided_slice %3 {offsets = [0, 3, 0], sizes = [1, 1, 128], strides = [1, 1, 1]} : vector<3x9x128xf32> to vector<1x1x128xf32>
    %29 = vector.shape_cast %28 : vector<1x1x128xf32> to vector<1x128xf32>
    %30 = vector.broadcast %29 : vector<1x128xf32> to vector<64x128xf32>
    %31 = arith.mulf %27, %30 : vector<64x128xf32>
    %32 = arith.addf %26, %31 : vector<64x128xf32>
    %33 = vector.extract_strided_slice %6 {offsets = [256, 0], sizes = [64, 128], strides = [1, 1]} : vector<576x128xf32> to vector<64x128xf32>
    %34 = vector.extract_strided_slice %3 {offsets = [0, 4, 0], sizes = [1, 1, 128], strides = [1, 1, 1]} : vector<3x9x128xf32> to vector<1x1x128xf32>
    %35 = vector.shape_cast %34 : vector<1x1x128xf32> to vector<1x128xf32>
    %36 = vector.broadcast %35 : vector<1x128xf32> to vector<64x128xf32>
    %37 = arith.mulf %33, %36 : vector<64x128xf32>
    %38 = arith.addf %32, %37 : vector<64x128xf32>
    %39 = vector.extract_strided_slice %6 {offsets = [320, 0], sizes = [64, 128], strides = [1, 1]} : vector<576x128xf32> to vector<64x128xf32>
    %40 = vector.extract_strided_slice %3 {offsets = [0, 5, 0], sizes = [1, 1, 128], strides = [1, 1, 1]} : vector<3x9x128xf32> to vector<1x1x128xf32>
    %41 = vector.shape_cast %40 : vector<1x1x128xf32> to vector<1x128xf32>
    %42 = vector.broadcast %41 : vector<1x128xf32> to vector<64x128xf32>
    %43 = arith.mulf %39, %42 : vector<64x128xf32>
    %44 = arith.addf %38, %43 : vector<64x128xf32>
    %45 = vector.extract_strided_slice %6 {offsets = [384, 0], sizes = [64, 128], strides = [1, 1]} : vector<576x128xf32> to vector<64x128xf32>
    %46 = vector.extract_strided_slice %3 {offsets = [0, 6, 0], sizes = [1, 1, 128], strides = [1, 1, 1]} : vector<3x9x128xf32> to vector<1x1x128xf32>
    %47 = vector.shape_cast %46 : vector<1x1x128xf32> to vector<1x128xf32>
    %48 = vector.broadcast %47 : vector<1x128xf32> to vector<64x128xf32>
    %49 = arith.mulf %45, %48 : vector<64x128xf32>
    %50 = arith.addf %44, %49 : vector<64x128xf32>
    %51 = vector.extract_strided_slice %6 {offsets = [448, 0], sizes = [64, 128], strides = [1, 1]} : vector<576x128xf32> to vector<64x128xf32>
    %52 = vector.extract_strided_slice %3 {offsets = [0, 7, 0], sizes = [1, 1, 128], strides = [1, 1, 1]} : vector<3x9x128xf32> to vector<1x1x128xf32>
    %53 = vector.shape_cast %52 : vector<1x1x128xf32> to vector<1x128xf32>
    %54 = vector.broadcast %53 : vector<1x128xf32> to vector<64x128xf32>
    %55 = arith.mulf %51, %54 : vector<64x128xf32>
    %56 = arith.addf %50, %55 : vector<64x128xf32>
    %57 = vector.extract_strided_slice %6 {offsets = [512, 0], sizes = [64, 128], strides = [1, 1]} : vector<576x128xf32> to vector<64x128xf32>
    %58 = vector.extract_strided_slice %3 {offsets = [0, 8, 0], sizes = [1, 1, 128], strides = [1, 1, 1]} : vector<3x9x128xf32> to vector<1x1x128xf32>
    %59 = vector.shape_cast %58 : vector<1x1x128xf32> to vector<1x128xf32>
    %60 = vector.broadcast %59 : vector<1x128xf32> to vector<64x128xf32>
    %61 = arith.mulf %57, %60 : vector<64x128xf32>
    %62 = arith.addf %56, %61 : vector<64x128xf32>
    %c0_9 = arith.constant 0 : index
    %c0_10 = arith.constant 0 : index
    %63 = vector.load %arg3[%c0_9, %c0_10] : memref<144x64xbf16, #tpu.memory_space<vmem>>, vector<144x64xbf16>
    %64 = arith.truncf %62 : vector<64x128xf32> to vector<64x128xbf16>
    %cst_11 = arith.constant dense<0.000000e+00> : vector<144x128xf32>
    %65 = tpu.matmul %63, %64, %cst_11 {dimension_numbers = #tpu.dot_dimension_numbers<[1], [0], [0], [1], [0, 0, 1, 1], [], []>} : vector<144x64xbf16>, vector<64x128xbf16>, vector<144x128xf32> -> vector<144x128xf32>
    %66 = vector.extract_strided_slice %4 {offsets = [1, 0], sizes = [1, 128], strides = [1, 1]} : vector<3x128xf32> to vector<1x128xf32>
    %67 = vector.extract_strided_slice %65 {offsets = [0, 0], sizes = [16, 128], strides = [1, 1]} : vector<144x128xf32> to vector<16x128xf32>
    %68 = vector.extract_strided_slice %3 {offsets = [1, 0, 0], sizes = [1, 1, 128], strides = [1, 1, 1]} : vector<3x9x128xf32> to vector<1x1x128xf32>
    %69 = vector.shape_cast %68 : vector<1x1x128xf32> to vector<1x128xf32>
    %70 = vector.broadcast %69 : vector<1x128xf32> to vector<16x128xf32>
    %71 = arith.mulf %67, %70 : vector<16x128xf32>
    %72 = vector.broadcast %66 : vector<1x128xf32> to vector<16x128xf32>
    %73 = arith.addf %72, %71 : vector<16x128xf32>
    %74 = vector.extract_strided_slice %65 {offsets = [16, 0], sizes = [16, 128], strides = [1, 1]} : vector<144x128xf32> to vector<16x128xf32>
    %75 = vector.extract_strided_slice %3 {offsets = [1, 1, 0], sizes = [1, 1, 128], strides = [1, 1, 1]} : vector<3x9x128xf32> to vector<1x1x128xf32>
    %76 = vector.shape_cast %75 : vector<1x1x128xf32> to vector<1x128xf32>
    %77 = vector.broadcast %76 : vector<1x128xf32> to vector<16x128xf32>
    %78 = arith.mulf %74, %77 : vector<16x128xf32>
    %79 = arith.addf %73, %78 : vector<16x128xf32>
    %80 = vector.extract_strided_slice %65 {offsets = [32, 0], sizes = [16, 128], strides = [1, 1]} : vector<144x128xf32> to vector<16x128xf32>
    %81 = vector.extract_strided_slice %3 {offsets = [1, 2, 0], sizes = [1, 1, 128], strides = [1, 1, 1]} : vector<3x9x128xf32> to vector<1x1x128xf32>
    %82 = vector.shape_cast %81 : vector<1x1x128xf32> to vector<1x128xf32>
    %83 = vector.broadcast %82 : vector<1x128xf32> to vector<16x128xf32>
    %84 = arith.mulf %80, %83 : vector<16x128xf32>
    %85 = arith.addf %79, %84 : vector<16x128xf32>
    %86 = vector.extract_strided_slice %65 {offsets = [48, 0], sizes = [16, 128], strides = [1, 1]} : vector<144x128xf32> to vector<16x128xf32>
    %87 = vector.extract_strided_slice %3 {offsets = [1, 3, 0], sizes = [1, 1, 128], strides = [1, 1, 1]} : vector<3x9x128xf32> to vector<1x1x128xf32>
    %88 = vector.shape_cast %87 : vector<1x1x128xf32> to vector<1x128xf32>
    %89 = vector.broadcast %88 : vector<1x128xf32> to vector<16x128xf32>
    %90 = arith.mulf %86, %89 : vector<16x128xf32>
    %91 = arith.addf %85, %90 : vector<16x128xf32>
    %92 = vector.extract_strided_slice %65 {offsets = [64, 0], sizes = [16, 128], strides = [1, 1]} : vector<144x128xf32> to vector<16x128xf32>
    %93 = vector.extract_strided_slice %3 {offsets = [1, 4, 0], sizes = [1, 1, 128], strides = [1, 1, 1]} : vector<3x9x128xf32> to vector<1x1x128xf32>
    %94 = vector.shape_cast %93 : vector<1x1x128xf32> to vector<1x128xf32>
    %95 = vector.broadcast %94 : vector<1x128xf32> to vector<16x128xf32>
    %96 = arith.mulf %92, %95 : vector<16x128xf32>
    %97 = arith.addf %91, %96 : vector<16x128xf32>
    %98 = vector.extract_strided_slice %65 {offsets = [80, 0], sizes = [16, 128], strides = [1, 1]} : vector<144x128xf32> to vector<16x128xf32>
    %99 = vector.extract_strided_slice %3 {offsets = [1, 5, 0], sizes = [1, 1, 128], strides = [1, 1, 1]} : vector<3x9x128xf32> to vector<1x1x128xf32>
    %100 = vector.shape_cast %99 : vector<1x1x128xf32> to vector<1x128xf32>
    %101 = vector.broadcast %100 : vector<1x128xf32> to vector<16x128xf32>
    %102 = arith.mulf %98, %101 : vector<16x128xf32>
    %103 = arith.addf %97, %102 : vector<16x128xf32>
    %104 = vector.extract_strided_slice %65 {offsets = [96, 0], sizes = [16, 128], strides = [1, 1]} : vector<144x128xf32> to vector<16x128xf32>
    %105 = vector.extract_strided_slice %3 {offsets = [1, 6, 0], sizes = [1, 1, 128], strides = [1, 1, 1]} : vector<3x9x128xf32> to vector<1x1x128xf32>
    %106 = vector.shape_cast %105 : vector<1x1x128xf32> to vector<1x128xf32>
    %107 = vector.broadcast %106 : vector<1x128xf32> to vector<16x128xf32>
    %108 = arith.mulf %104, %107 : vector<16x128xf32>
    %109 = arith.addf %103, %108 : vector<16x128xf32>
    %110 = vector.extract_strided_slice %65 {offsets = [112, 0], sizes = [16, 128], strides = [1, 1]} : vector<144x128xf32> to vector<16x128xf32>
    %111 = vector.extract_strided_slice %3 {offsets = [1, 7, 0], sizes = [1, 1, 128], strides = [1, 1, 1]} : vector<3x9x128xf32> to vector<1x1x128xf32>
    %112 = vector.shape_cast %111 : vector<1x1x128xf32> to vector<1x128xf32>
    %113 = vector.broadcast %112 : vector<1x128xf32> to vector<16x128xf32>
    %114 = arith.mulf %110, %113 : vector<16x128xf32>
    %115 = arith.addf %109, %114 : vector<16x128xf32>
    %116 = vector.extract_strided_slice %65 {offsets = [128, 0], sizes = [16, 128], strides = [1, 1]} : vector<144x128xf32> to vector<16x128xf32>
    %117 = vector.extract_strided_slice %3 {offsets = [1, 8, 0], sizes = [1, 1, 128], strides = [1, 1, 1]} : vector<3x9x128xf32> to vector<1x1x128xf32>
    %118 = vector.shape_cast %117 : vector<1x1x128xf32> to vector<1x128xf32>
    %119 = vector.broadcast %118 : vector<1x128xf32> to vector<16x128xf32>
    %120 = arith.mulf %116, %119 : vector<16x128xf32>
    %121 = arith.addf %115, %120 : vector<16x128xf32>
    %c0_12 = arith.constant 0 : index
    %c0_13 = arith.constant 0 : index
    %122 = vector.load %arg4[%c0_12, %c0_13] : memref<36x16xbf16, #tpu.memory_space<vmem>>, vector<36x16xbf16>
    %123 = arith.truncf %121 : vector<16x128xf32> to vector<16x128xbf16>
    %cst_14 = arith.constant dense<0.000000e+00> : vector<36x128xf32>
    %124 = tpu.matmul %122, %123, %cst_14 {dimension_numbers = #tpu.dot_dimension_numbers<[1], [0], [0], [1], [0, 0, 1, 1], [], []>} : vector<36x16xbf16>, vector<16x128xbf16>, vector<36x128xf32> -> vector<36x128xf32>
    %125 = vector.extract_strided_slice %4 {offsets = [2, 0], sizes = [1, 128], strides = [1, 1]} : vector<3x128xf32> to vector<1x128xf32>
    %126 = vector.extract_strided_slice %124 {offsets = [0, 0], sizes = [4, 128], strides = [1, 1]} : vector<36x128xf32> to vector<4x128xf32>
    %127 = vector.extract_strided_slice %3 {offsets = [2, 0, 0], sizes = [1, 1, 128], strides = [1, 1, 1]} : vector<3x9x128xf32> to vector<1x1x128xf32>
    %128 = vector.shape_cast %127 : vector<1x1x128xf32> to vector<1x128xf32>
    %129 = vector.broadcast %128 : vector<1x128xf32> to vector<4x128xf32>
    %130 = arith.mulf %126, %129 : vector<4x128xf32>
    %131 = vector.broadcast %125 : vector<1x128xf32> to vector<4x128xf32>
    %132 = arith.addf %131, %130 : vector<4x128xf32>
    %133 = vector.extract_strided_slice %124 {offsets = [4, 0], sizes = [4, 128], strides = [1, 1]} : vector<36x128xf32> to vector<4x128xf32>
    %134 = vector.extract_strided_slice %3 {offsets = [2, 1, 0], sizes = [1, 1, 128], strides = [1, 1, 1]} : vector<3x9x128xf32> to vector<1x1x128xf32>
    %135 = vector.shape_cast %134 : vector<1x1x128xf32> to vector<1x128xf32>
    %136 = vector.broadcast %135 : vector<1x128xf32> to vector<4x128xf32>
    %137 = arith.mulf %133, %136 : vector<4x128xf32>
    %138 = arith.addf %132, %137 : vector<4x128xf32>
    %139 = vector.extract_strided_slice %124 {offsets = [8, 0], sizes = [4, 128], strides = [1, 1]} : vector<36x128xf32> to vector<4x128xf32>
    %140 = vector.extract_strided_slice %3 {offsets = [2, 2, 0], sizes = [1, 1, 128], strides = [1, 1, 1]} : vector<3x9x128xf32> to vector<1x1x128xf32>
    %141 = vector.shape_cast %140 : vector<1x1x128xf32> to vector<1x128xf32>
    %142 = vector.broadcast %141 : vector<1x128xf32> to vector<4x128xf32>
    %143 = arith.mulf %139, %142 : vector<4x128xf32>
    %144 = arith.addf %138, %143 : vector<4x128xf32>
    %145 = vector.extract_strided_slice %124 {offsets = [12, 0], sizes = [4, 128], strides = [1, 1]} : vector<36x128xf32> to vector<4x128xf32>
    %146 = vector.extract_strided_slice %3 {offsets = [2, 3, 0], sizes = [1, 1, 128], strides = [1, 1, 1]} : vector<3x9x128xf32> to vector<1x1x128xf32>
    %147 = vector.shape_cast %146 : vector<1x1x128xf32> to vector<1x128xf32>
    %148 = vector.broadcast %147 : vector<1x128xf32> to vector<4x128xf32>
    %149 = arith.mulf %145, %148 : vector<4x128xf32>
    %150 = arith.addf %144, %149 : vector<4x128xf32>
    %151 = vector.extract_strided_slice %124 {offsets = [16, 0], sizes = [4, 128], strides = [1, 1]} : vector<36x128xf32> to vector<4x128xf32>
    %152 = vector.extract_strided_slice %3 {offsets = [2, 4, 0], sizes = [1, 1, 128], strides = [1, 1, 1]} : vector<3x9x128xf32> to vector<1x1x128xf32>
    %153 = vector.shape_cast %152 : vector<1x1x128xf32> to vector<1x128xf32>
    %154 = vector.broadcast %153 : vector<1x128xf32> to vector<4x128xf32>
    %155 = arith.mulf %151, %154 : vector<4x128xf32>
    %156 = arith.addf %150, %155 : vector<4x128xf32>
    %157 = vector.extract_strided_slice %124 {offsets = [20, 0], sizes = [4, 128], strides = [1, 1]} : vector<36x128xf32> to vector<4x128xf32>
    %158 = vector.extract_strided_slice %3 {offsets = [2, 5, 0], sizes = [1, 1, 128], strides = [1, 1, 1]} : vector<3x9x128xf32> to vector<1x1x128xf32>
    %159 = vector.shape_cast %158 : vector<1x1x128xf32> to vector<1x128xf32>
    %160 = vector.broadcast %159 : vector<1x128xf32> to vector<4x128xf32>
    %161 = arith.mulf %157, %160 : vector<4x128xf32>
    %162 = arith.addf %156, %161 : vector<4x128xf32>
    %163 = vector.extract_strided_slice %124 {offsets = [24, 0], sizes = [4, 128], strides = [1, 1]} : vector<36x128xf32> to vector<4x128xf32>
    %164 = vector.extract_strided_slice %3 {offsets = [2, 6, 0], sizes = [1, 1, 128], strides = [1, 1, 1]} : vector<3x9x128xf32> to vector<1x1x128xf32>
    %165 = vector.shape_cast %164 : vector<1x1x128xf32> to vector<1x128xf32>
    %166 = vector.broadcast %165 : vector<1x128xf32> to vector<4x128xf32>
    %167 = arith.mulf %163, %166 : vector<4x128xf32>
    %168 = arith.addf %162, %167 : vector<4x128xf32>
    %169 = vector.extract_strided_slice %124 {offsets = [28, 0], sizes = [4, 128], strides = [1, 1]} : vector<36x128xf32> to vector<4x128xf32>
    %170 = vector.extract_strided_slice %3 {offsets = [2, 7, 0], sizes = [1, 1, 128], strides = [1, 1, 1]} : vector<3x9x128xf32> to vector<1x1x128xf32>
    %171 = vector.shape_cast %170 : vector<1x1x128xf32> to vector<1x128xf32>
    %172 = vector.broadcast %171 : vector<1x128xf32> to vector<4x128xf32>
    %173 = arith.mulf %169, %172 : vector<4x128xf32>
    %174 = arith.addf %168, %173 : vector<4x128xf32>
    %175 = vector.extract_strided_slice %124 {offsets = [32, 0], sizes = [4, 128], strides = [1, 1]} : vector<36x128xf32> to vector<4x128xf32>
    %176 = vector.extract_strided_slice %3 {offsets = [2, 8, 0], sizes = [1, 1, 128], strides = [1, 1, 1]} : vector<3x9x128xf32> to vector<1x1x128xf32>
    %177 = vector.shape_cast %176 : vector<1x1x128xf32> to vector<1x128xf32>
    %178 = vector.broadcast %177 : vector<1x128xf32> to vector<4x128xf32>
    %179 = arith.mulf %175, %178 : vector<4x128xf32>
    %180 = arith.addf %174, %179 : vector<4x128xf32>
    %181 = arith.truncf %180 : vector<4x128xf32> to vector<4x128xbf16>
    %c0_15 = arith.constant 0 : index
    %c0_16 = arith.constant 0 : index
    %182 = vector.load %arg8[%c0_15, %c0_16] : memref<128x384xbf16, #tpu.memory_space<vmem>>, vector<128x384xbf16>
    %cst_17 = arith.constant dense<0.000000e+00> : vector<4x384xf32>
    %183 = tpu.matmul %181, %182, %cst_17 {dimension_numbers = #tpu.dot_dimension_numbers<[1], [0], [0], [1], [0, 0, 1, 1], [], []>} : vector<4x128xbf16>, vector<128x384xbf16>, vector<4x384xf32> -> vector<4x384xf32>
    %c0_18 = arith.constant 0 : index
    %c0_19 = arith.constant 0 : index
    %184 = vector.load %arg9[%c0_18, %c0_19] : memref<1x384xf32, #tpu.memory_space<vmem>>, vector<1x384xf32>
    %185 = vector.broadcast %184 : vector<1x384xf32> to vector<4x384xf32>
    %186 = arith.addf %183, %185 : vector<4x384xf32>
    %187 = vector.extract_strided_slice %186 {offsets = [0, 0], sizes = [4, 128], strides = [1, 1]} : vector<4x384xf32> to vector<4x128xf32>
    %188 = vector.extract_strided_slice %186 {offsets = [0, 128], sizes = [4, 128], strides = [1, 1]} : vector<4x384xf32> to vector<4x128xf32>
    %189 = vector.extract_strided_slice %186 {offsets = [0, 256], sizes = [4, 128], strides = [1, 1]} : vector<4x384xf32> to vector<4x128xf32>
    %190 = arith.truncf %187 : vector<4x128xf32> to vector<4x128xbf16>
    %191 = arith.truncf %188 : vector<4x128xf32> to vector<4x128xbf16>
    %cst_20 = arith.constant dense<0.000000e+00> : vector<128x128xf32>
    %192 = tpu.matmul %190, %191, %cst_20 {dimension_numbers = #tpu.dot_dimension_numbers<[0], [0], [1], [1], [0, 1, 1, 1], [], []>} : vector<4x128xbf16>, vector<4x128xbf16>, vector<128x128xf32> -> vector<128x128xf32>
    %c0_21 = arith.constant 0 : index
    %c0_22 = arith.constant 0 : index
    %193 = vector.load %arg14[%c0_21, %c0_22] : memref<1x128xf32, #tpu.memory_space<vmem>>, vector<1x128xf32>
    %194 = vector.broadcast %193 : vector<1x128xf32> to vector<128x128xf32>
    %195 = arith.addf %192, %194 : vector<128x128xf32>
    %cst_23 = arith.constant dense<0xFF800000> : vector<128xf32>
    %196 = vector.multi_reduction <maximumf>, %195, %cst_23 [1] : vector<128x128xf32> to vector<128xf32>
    %197 = vector.shape_cast %196 : vector<128xf32> to vector<128x1xf32>
    %198 = vector.broadcast %197 : vector<128x1xf32> to vector<128x128xf32>
    %199 = arith.subf %195, %198 : vector<128x128xf32>
    %200 = math.exp %199 : vector<128x128xf32>
    %cst_24 = arith.constant dense<0.000000e+00> : vector<128xf32>
    %201 = vector.multi_reduction <add>, %200, %cst_24 [1] : vector<128x128xf32> to vector<128xf32>
    %202 = vector.shape_cast %201 : vector<128xf32> to vector<128x1xf32>
    %203 = tpu.reciprocal %202 {approx = true} : vector<128x1xf32> -> vector<128x1xf32>
    %204 = vector.broadcast %203 : vector<128x1xf32> to vector<128x128xf32>
    %205 = arith.mulf %200, %204 : vector<128x128xf32>
    %206 = arith.truncf %189 : vector<4x128xf32> to vector<4x128xbf16>
    %207 = arith.truncf %205 : vector<128x128xf32> to vector<128x128xbf16>
    %cst_25 = arith.constant dense<0.000000e+00> : vector<4x128xf32>
    %208 = tpu.matmul %206, %207, %cst_25 {dimension_numbers = #tpu.dot_dimension_numbers<[1], [0], [0], [1], [0, 0, 1, 1], [], []>} : vector<4x128xbf16>, vector<128x128xbf16>, vector<4x128xf32> -> vector<4x128xf32>
    %209 = arith.truncf %208 : vector<4x128xf32> to vector<4x128xbf16>
    %c0_26 = arith.constant 0 : index
    %c0_27 = arith.constant 0 : index
    %210 = vector.load %arg10[%c0_26, %c0_27] : memref<128x128xbf16, #tpu.memory_space<vmem>>, vector<128x128xbf16>
    %cst_28 = arith.constant dense<0.000000e+00> : vector<4x128xf32>
    %211 = tpu.matmul %209, %210, %cst_28 {dimension_numbers = #tpu.dot_dimension_numbers<[1], [0], [0], [1], [0, 0, 1, 1], [], []>} : vector<4x128xbf16>, vector<128x128xbf16>, vector<4x128xf32> -> vector<4x128xf32>
    %c0_29 = arith.constant 0 : index
    %c0_30 = arith.constant 0 : index
    %212 = vector.load %arg11[%c0_29, %c0_30] : memref<1x128xf32, #tpu.memory_space<vmem>>, vector<1x128xf32>
    %213 = vector.broadcast %212 : vector<1x128xf32> to vector<4x128xf32>
    %214 = arith.addf %211, %213 : vector<4x128xf32>
    %215 = arith.truncf %214 : vector<4x128xf32> to vector<4x128xbf16>
    %c0_31 = arith.constant 0 : index
    %c0_32 = arith.constant 0 : index
    %216 = vector.load %arg12[%c0_31, %c0_32] : memref<128x128xbf16, #tpu.memory_space<vmem>>, vector<128x128xbf16>
    %cst_33 = arith.constant dense<0.000000e+00> : vector<4x128xf32>
    %217 = tpu.matmul %215, %216, %cst_33 {dimension_numbers = #tpu.dot_dimension_numbers<[1], [0], [0], [1], [0, 0, 1, 1], [], []>} : vector<4x128xbf16>, vector<128x128xbf16>, vector<4x128xf32> -> vector<4x128xf32>
    %c0_34 = arith.constant 0 : index
    %c0_35 = arith.constant 0 : index
    %218 = vector.load %arg13[%c0_34, %c0_35] : memref<1x128xf32, #tpu.memory_space<vmem>>, vector<1x128xf32>
    %219 = vector.broadcast %218 : vector<1x128xf32> to vector<4x128xf32>
    %220 = arith.addf %217, %219 : vector<4x128xf32>
    %221 = arith.addf %220, %180 : vector<4x128xf32>
    %cst_36 = arith.constant 0.000000e+00 : f32
    %222 = vector.broadcast %cst_36 : f32 to vector<4x128xf32>
    %223 = arith.maximumf %221, %222 : vector<4x128xf32>
    %c0_37 = arith.constant 0 : index
    %c0_38 = arith.constant 0 : index
    %224 = vector.load %arg7[%c0_37, %c0_38] : memref<256x4xf32, #tpu.memory_space<vmem>>, vector<256x4xf32>
    %cst_39 = arith.constant dense<0.000000e+00> : vector<256x128xf32>
    %225 = tpu.matmul %224, %223, %cst_39 {dimension_numbers = #tpu.dot_dimension_numbers<[1], [0], [0], [1], [0, 0, 1, 1], [], []>} : vector<256x4xf32>, vector<4x128xf32>, vector<256x128xf32> -> vector<256x128xf32>
    %226 = arith.mulf %2, %225 : vector<256x128xf32>
    %227 = arith.addf %226, %2 : vector<256x128xf32>
    %c0_40 = arith.constant 0 : index
    %c0_41 = arith.constant 0 : index
    %228 = vector.load %arg15[%c0_40, %c0_41] : memref<128x128xbf16, #tpu.memory_space<vmem>>, vector<128x128xbf16>
    %cst_42 = arith.constant dense<0.000000e+00> : vector<256x128xf32>
    %229 = tpu.matmul %1, %228, %cst_42 {dimension_numbers = #tpu.dot_dimension_numbers<[1], [0], [0], [1], [0, 0, 1, 1], [], []>} : vector<256x128xbf16>, vector<128x128xbf16>, vector<256x128xf32> -> vector<256x128xf32>
    %c0_43 = arith.constant 0 : index
    %c0_44 = arith.constant 0 : index
    %230 = vector.load %arg16[%c0_43, %c0_44] : memref<1x128xf32, #tpu.memory_space<vmem>>, vector<1x128xf32>
    %231 = vector.broadcast %230 : vector<1x128xf32> to vector<256x128xf32>
    %232 = arith.addf %229, %231 : vector<256x128xf32>
    %c0_45 = arith.constant 0 : index
    %c0_46 = arith.constant 0 : index
    %233 = vector.load %arg17[%c0_45, %c0_46] : memref<128x128xbf16, #tpu.memory_space<vmem>>, vector<128x128xbf16>
    %cst_47 = arith.constant dense<0.000000e+00> : vector<256x128xf32>
    %234 = tpu.matmul %1, %233, %cst_47 {dimension_numbers = #tpu.dot_dimension_numbers<[1], [0], [0], [1], [0, 0, 1, 1], [], []>} : vector<256x128xbf16>, vector<128x128xbf16>, vector<256x128xf32> -> vector<256x128xf32>
    %c0_48 = arith.constant 0 : index
    %c0_49 = arith.constant 0 : index
    %235 = vector.load %arg18[%c0_48, %c0_49] : memref<1x128xf32, #tpu.memory_space<vmem>>, vector<1x128xf32>
    %236 = vector.broadcast %235 : vector<1x128xf32> to vector<256x128xf32>
    %237 = arith.addf %234, %236 : vector<256x128xf32>
    %238 = arith.truncf %232 : vector<256x128xf32> to vector<256x128xbf16>
    %239 = arith.truncf %237 : vector<256x128xf32> to vector<256x128xbf16>
    %cst_50 = arith.constant dense<0.000000e+00> : vector<128x128xf32>
    %240 = tpu.matmul %238, %239, %cst_50 {dimension_numbers = #tpu.dot_dimension_numbers<[0], [0], [1], [1], [0, 1, 1, 1], [], []>} : vector<256x128xbf16>, vector<256x128xbf16>, vector<128x128xf32> -> vector<128x128xf32>
    %241 = arith.truncf %240 : vector<128x128xf32> to vector<128x128xbf16>
    %c0_51 = arith.constant 0 : index
    %c0_52 = arith.constant 0 : index
    %242 = vector.load %arg19[%c0_51, %c0_52] : memref<128x128xbf16, #tpu.memory_space<vmem>>, vector<128x128xbf16>
    %cst_53 = arith.constant dense<0.000000e+00> : vector<128x128xf32>
    %243 = tpu.matmul %241, %242, %cst_53 {dimension_numbers = #tpu.dot_dimension_numbers<[1], [0], [0], [1], [0, 0, 1, 1], [], []>} : vector<128x128xbf16>, vector<128x128xbf16>, vector<128x128xf32> -> vector<128x128xf32>
    %244 = arith.addf %240, %243 : vector<128x128xf32>
    %c0_54 = arith.constant 0 : index
    %c0_55 = arith.constant 0 : index
    %245 = vector.load %arg20[%c0_54, %c0_55] : memref<1x128xf32, #tpu.memory_space<vmem>>, vector<1x128xf32>
    %246 = vector.broadcast %245 : vector<1x128xf32> to vector<128x128xf32>
    %247 = arith.addf %244, %246 : vector<128x128xf32>
    %c0_56 = arith.constant 0 : index
    %c0_57 = arith.constant 0 : index
    %248 = vector.load %arg21[%c0_56, %c0_57] : memref<128x128xbf16, #tpu.memory_space<vmem>>, vector<128x128xbf16>
    %249 = arith.truncf %247 : vector<128x128xf32> to vector<128x128xbf16>
    %cst_58 = arith.constant dense<0.000000e+00> : vector<128x128xf32>
    %250 = tpu.matmul %248, %249, %cst_58 {dimension_numbers = #tpu.dot_dimension_numbers<[1], [0], [0], [1], [0, 0, 1, 1], [], []>} : vector<128x128xbf16>, vector<128x128xbf16>, vector<128x128xf32> -> vector<128x128xf32>
    %c0_59 = arith.constant 0 : index
    %c0_60 = arith.constant 0 : index
    %251 = vector.load %arg22[%c0_59, %c0_60] : memref<128x1xf32, #tpu.memory_space<vmem>>, vector<128x1xf32>
    %252 = vector.broadcast %251 : vector<128x1xf32> to vector<128x128xf32>
    %253 = arith.addf %250, %252 : vector<128x128xf32>
    %254 = arith.truncf %237 : vector<256x128xf32> to vector<256x128xbf16>
    %255 = arith.truncf %253 : vector<128x128xf32> to vector<128x128xbf16>
    %cst_61 = arith.constant dense<0.000000e+00> : vector<256x128xf32>
    %256 = tpu.matmul %254, %255, %cst_61 {dimension_numbers = #tpu.dot_dimension_numbers<[1], [1], [0], [0], [0, 0, 1, 0], [], []>} : vector<256x128xbf16>, vector<128x128xbf16>, vector<256x128xf32> -> vector<256x128xf32>
    %257 = arith.truncf %256 : vector<256x128xf32> to vector<256x128xbf16>
    %c0_62 = arith.constant 0 : index
    %c0_63 = arith.constant 0 : index
    %258 = vector.load %arg23[%c0_62, %c0_63] : memref<128x128xbf16, #tpu.memory_space<vmem>>, vector<128x128xbf16>
    %cst_64 = arith.constant dense<0.000000e+00> : vector<256x128xf32>
    %259 = tpu.matmul %257, %258, %cst_64 {dimension_numbers = #tpu.dot_dimension_numbers<[1], [0], [0], [1], [0, 0, 1, 1], [], []>} : vector<256x128xbf16>, vector<128x128xbf16>, vector<256x128xf32> -> vector<256x128xf32>
    %260 = arith.addf %2, %259 : vector<256x128xf32>
    %c0_65 = arith.constant 0 : index
    %c0_66 = arith.constant 0 : index
    %261 = vector.load %arg24[%c0_65, %c0_66] : memref<1x128xf32, #tpu.memory_space<vmem>>, vector<1x128xf32>
    %262 = vector.broadcast %261 : vector<1x128xf32> to vector<256x128xf32>
    %263 = arith.addf %260, %262 : vector<256x128xf32>
    %cst_67 = arith.constant 0.000000e+00 : f32
    %264 = vector.broadcast %cst_67 : f32 to vector<256x128xf32>
    %265 = arith.maximumf %263, %264 : vector<256x128xf32>
    %266 = arith.truncf %227 : vector<256x128xf32> to vector<256x128xbf16>
    %c0_68 = arith.constant 0 : index
    %c0_69 = arith.constant 0 : index
    %267 = vector.load %arg25[%c0_68, %c0_69] : memref<128x128xbf16, #tpu.memory_space<vmem>>, vector<128x128xbf16>
    %cst_70 = arith.constant dense<0.000000e+00> : vector<256x128xf32>
    %268 = tpu.matmul %266, %267, %cst_70 {dimension_numbers = #tpu.dot_dimension_numbers<[1], [0], [0], [1], [0, 0, 1, 1], [], []>} : vector<256x128xbf16>, vector<128x128xbf16>, vector<256x128xf32> -> vector<256x128xf32>
    %269 = arith.truncf %265 : vector<256x128xf32> to vector<256x128xbf16>
    %c0_71 = arith.constant 0 : index
    %c0_72 = arith.constant 0 : index
    %270 = vector.load %arg26[%c0_71, %c0_72] : memref<128x128xbf16, #tpu.memory_space<vmem>>, vector<128x128xbf16>
    %cst_73 = arith.constant dense<0.000000e+00> : vector<256x128xf32>
    %271 = tpu.matmul %269, %270, %cst_73 {dimension_numbers = #tpu.dot_dimension_numbers<[1], [0], [0], [1], [0, 0, 1, 1], [], []>} : vector<256x128xbf16>, vector<128x128xbf16>, vector<256x128xf32> -> vector<256x128xf32>
    %272 = arith.addf %268, %271 : vector<256x128xf32>
    %c0_74 = arith.constant 0 : index
    %c0_75 = arith.constant 0 : index
    %273 = vector.load %arg27[%c0_74, %c0_75] : memref<1x128xf32, #tpu.memory_space<vmem>>, vector<1x128xf32>
    %274 = vector.broadcast %273 : vector<1x128xf32> to vector<256x128xf32>
    %275 = arith.addf %272, %274 : vector<256x128xf32>
    %c0_76 = arith.constant 0 : index
    %c0_77 = arith.constant 0 : index
    %c0_78 = arith.constant 0 : index
    %276 = vector.load %arg28[%c0_76, %c0_77, %c0_78] : memref<1x256x128xf32, #tpu.memory_space<vmem>>, vector<1x256x128xf32>
    %277 = vector.shape_cast %276 : vector<1x256x128xf32> to vector<256x128xf32>
    %278 = vector.shape_cast %275 : vector<256x128xf32> to vector<1x256x128xf32>
    tpu.vector_store %arg28[%c0_76, %c0_77, %c0_78], %278 {strides = array<i32>} : memref<1x256x128xf32, #tpu.memory_space<vmem>>, vector<1x256x128xf32>,
    return
  }
  func.func @transform_0(%arg0: i32) -> (i32, i32, i32) {
    %c0_i32 = arith.constant 0 : i32
    %c0_i32_0 = arith.constant 0 : i32
    %c0_i32_1 = arith.constant 0 : i32
    return %arg0, %c0_i32, %c0_i32_0 : i32, i32, i32
  }
  func.func @transform_1(%arg0: i32) -> (i32, i32) {
    %c0_i32 = arith.constant 0 : i32
    %c0_i32_0 = arith.constant 0 : i32
    %c0_i32_1 = arith.constant 0 : i32
    return %c0_i32, %c0_i32_0 : i32, i32
  }
  func.func @transform_2(%arg0: i32) -> (i32, i32) {
    %c0_i32 = arith.constant 0 : i32
    %c0_i32_0 = arith.constant 0 : i32
    %c0_i32_1 = arith.constant 0 : i32
    return %c0_i32, %c0_i32_0 : i32, i32
  }
  func.func @transform_3(%arg0: i32) -> (i32, i32) {
    %c0_i32 = arith.constant 0 : i32
    %c0_i32_0 = arith.constant 0 : i32
    %c0_i32_1 = arith.constant 0 : i32
    return %c0_i32, %c0_i32_0 : i32, i32
  }
  func.func @transform_4(%arg0: i32) -> (i32, i32, i32) {
    %c0_i32 = arith.constant 0 : i32
    %c0_i32_0 = arith.constant 0 : i32
    %c0_i32_1 = arith.constant 0 : i32
    %c0_i32_2 = arith.constant 0 : i32
    return %c0_i32, %c0_i32_0, %c0_i32_1 : i32, i32, i32
  }
  func.func @transform_5(%arg0: i32) -> (i32, i32) {
    %c0_i32 = arith.constant 0 : i32
    %c0_i32_0 = arith.constant 0 : i32
    %c0_i32_1 = arith.constant 0 : i32
    return %c0_i32, %c0_i32_0 : i32, i32
  }
  func.func @transform_6(%arg0: i32) -> (i32, i32) {
    %c0_i32 = arith.constant 0 : i32
    %c0_i32_0 = arith.constant 0 : i32
    %c0_i32_1 = arith.constant 0 : i32
    return %c0_i32, %c0_i32_0 : i32, i32
  }
  func.func @transform_7(%arg0: i32) -> (i32, i32) {
    %c0_i32 = arith.constant 0 : i32
    %c0_i32_0 = arith.constant 0 : i32
    %c0_i32_1 = arith.constant 0 : i32
    return %c0_i32, %c0_i32_0 : i32, i32
  }
  func.func @transform_8(%arg0: i32) -> (i32, i32) {
    %c0_i32 = arith.constant 0 : i32
    %c0_i32_0 = arith.constant 0 : i32
    %c0_i32_1 = arith.constant 0 : i32
    return %c0_i32, %c0_i32_0 : i32, i32
  }
  func.func @transform_9(%arg0: i32) -> (i32, i32) {
    %c0_i32 = arith.constant 0 : i32
    %c0_i32_0 = arith.constant 0 : i32
    %c0_i32_1 = arith.constant 0 : i32
    return %c0_i32, %c0_i32_0 : i32, i32
  }
  func.func @transform_10(%arg0: i32) -> (i32, i32) {
    %c0_i32 = arith.constant 0 : i32
    %c0_i32_0 = arith.constant 0 : i32
    %c0_i32_1 = arith.constant 0 : i32
    return %c0_i32, %c0_i32_0 : i32, i32
  }
  func.func @transform_11(%arg0: i32) -> (i32, i32) {
    %c0_i32 = arith.constant 0 : i32
    %c0_i32_0 = arith.constant 0 : i32
    %c0_i32_1 = arith.constant 0 : i32
    return %c0_i32, %c0_i32_0 : i32, i32
  }
  func.func @transform_12(%arg0: i32) -> (i32, i32) {
    %c0_i32 = arith.constant 0 : i32
    %c0_i32_0 = arith.constant 0 : i32
    %c0_i32_1 = arith.constant 0 : i32
    return %c0_i32, %c0_i32_0 : i32, i32
  }
  func.func @transform_13(%arg0: i32) -> (i32, i32) {
    %c0_i32 = arith.constant 0 : i32
    %c0_i32_0 = arith.constant 0 : i32
    %c0_i32_1 = arith.constant 0 : i32
    return %c0_i32, %c0_i32_0 : i32, i32
  }
  func.func @transform_14(%arg0: i32) -> (i32, i32) {
    %c0_i32 = arith.constant 0 : i32
    %c0_i32_0 = arith.constant 0 : i32
    %c0_i32_1 = arith.constant 0 : i32
    return %c0_i32, %c0_i32_0 : i32, i32
  }
  func.func @transform_15(%arg0: i32) -> (i32, i32) {
    %c0_i32 = arith.constant 0 : i32
    %c0_i32_0 = arith.constant 0 : i32
    %c0_i32_1 = arith.constant 0 : i32
    return %c0_i32, %c0_i32_0 : i32, i32
  }
  func.func @transform_16(%arg0: i32) -> (i32, i32) {
    %c0_i32 = arith.constant 0 : i32
    %c0_i32_0 = arith.constant 0 : i32
    %c0_i32_1 = arith.constant 0 : i32
    return %c0_i32, %c0_i32_0 : i32, i32
  }
  func.func @transform_17(%arg0: i32) -> (i32, i32) {
    %c0_i32 = arith.constant 0 : i32
    %c0_i32_0 = arith.constant 0 : i32
    %c0_i32_1 = arith.constant 0 : i32
    return %c0_i32, %c0_i32_0 : i32, i32
  }
  func.func @transform_18(%arg0: i32) -> (i32, i32) {
    %c0_i32 = arith.constant 0 : i32
    %c0_i32_0 = arith.constant 0 : i32
    %c0_i32_1 = arith.constant 0 : i32
    return %c0_i32, %c0_i32_0 : i32, i32
  }
  func.func @transform_19(%arg0: i32) -> (i32, i32) {
    %c0_i32 = arith.constant 0 : i32
    %c0_i32_0 = arith.constant 0 : i32
    %c0_i32_1 = arith.constant 0 : i32
    return %c0_i32, %c0_i32_0 : i32, i32
  }
  func.func @transform_20(%arg0: i32) -> (i32, i32) {
    %c0_i32 = arith.constant 0 : i32
    %c0_i32_0 = arith.constant 0 : i32
    %c0_i32_1 = arith.constant 0 : i32
    return %c0_i32, %c0_i32_0 : i32, i32
  }
  func.func @transform_21(%arg0: i32) -> (i32, i32) {
    %c0_i32 = arith.constant 0 : i32
    %c0_i32_0 = arith.constant 0 : i32
    %c0_i32_1 = arith.constant 0 : i32
    return %c0_i32, %c0_i32_0 : i32, i32
  }
  func.func @transform_22(%arg0: i32) -> (i32, i32) {
    %c0_i32 = arith.constant 0 : i32
    %c0_i32_0 = arith.constant 0 : i32
    %c0_i32_1 = arith.constant 0 : i32
    return %c0_i32, %c0_i32_0 : i32, i32
  }
  func.func @transform_23(%arg0: i32) -> (i32, i32) {
    %c0_i32 = arith.constant 0 : i32
    %c0_i32_0 = arith.constant 0 : i32
    %c0_i32_1 = arith.constant 0 : i32
    return %c0_i32, %c0_i32_0 : i32, i32
  }
  func.func @transform_24(%arg0: i32) -> (i32, i32) {
    %c0_i32 = arith.constant 0 : i32
    %c0_i32_0 = arith.constant 0 : i32
    %c0_i32_1 = arith.constant 0 : i32
    return %c0_i32, %c0_i32_0 : i32, i32
  }
  func.func @transform_25(%arg0: i32) -> (i32, i32) {
    %c0_i32 = arith.constant 0 : i32
    %c0_i32_0 = arith.constant 0 : i32
    %c0_i32_1 = arith.constant 0 : i32
    return %c0_i32, %c0_i32_0 : i32, i32
  }
  func.func @transform_26(%arg0: i32) -> (i32, i32) {
    %c0_i32 = arith.constant 0 : i32
    %c0_i32_0 = arith.constant 0 : i32
    %c0_i32_1 = arith.constant 0 : i32
    return %c0_i32, %c0_i32_0 : i32, i32
  }
  func.func @transform_27(%arg0: i32) -> (i32, i32, i32) {
    %c0_i32 = arith.constant 0 : i32
    %c0_i32_0 = arith.constant 0 : i32
    %c0_i32_1 = arith.constant 0 : i32
    return %arg0, %c0_i32, %c0_i32_0 : i32, i32, i32
  }
}

</mosaic_0001>

<llo_original>
// kernel: dual_gcn_forward.1
$region0: #{dual_gcn_forward.1}
  #allocation0 [shape = 'u32[]', space=smem, size = 0x4, offset = 0x4, fixed_abs, tag = 'smem constant byte address 0x4 - core index']
  #allocation1 [shape = 'u32[144,128]{1,0:T(1,128)}', space=vmem, size = 0x12000, scoped, tag = 'internal scratch']
  %s0 = inlined_call_operand.vmem [shape: bf16[2,256,128], index: 0, kind: input, shape index: {}]
  %s1 = inlined_call_operand.vmem [shape: bf16[576,256], index: 1, kind: input, shape index: {}]
  %s2 = inlined_call_operand.vmem [shape: bf16[144,64], index: 2, kind: input, shape index: {}]
  %s3 = inlined_call_operand.vmem [shape: bf16[36,16], index: 3, kind: input, shape index: {}]
  %s4 = inlined_call_operand.vmem [shape: f32[3,9,128], index: 4, kind: input, shape index: {}]
  %s5 = inlined_call_operand.vmem [shape: f32[3,128], index: 5, kind: input, shape index: {}]
  %s6 = inlined_call_operand.vmem [shape: f32[256,4], index: 6, kind: input, shape index: {}]
  %s7 = inlined_call_operand.vmem [shape: bf16[128,384], index: 7, kind: input, shape index: {}]
  %s8 = inlined_call_operand.vmem [shape: f32[1,384], index: 8, kind: input, shape index: {}]
  %s9 = inlined_call_operand.vmem [shape: bf16[128,128], index: 9, kind: input, shape index: {}]
  %s10 = inlined_call_operand.vmem [shape: f32[1,128], index: 10, kind: input, shape index: {}]
  %s11 = inlined_call_operand.vmem [shape: bf16[128,128], index: 11, kind: input, shape index: {}]
  %s12 = inlined_call_operand.vmem [shape: f32[1,128], index: 12, kind: input, shape index: {}]
  %s13 = inlined_call_operand.vmem [shape: f32[1,128], index: 13, kind: input, shape index: {}]
  %s14 = inlined_call_operand.vmem [shape: bf16[128,128], index: 14, kind: input, shape index: {}]
  %s15 = inlined_call_operand.vmem [shape: f32[1,128], index: 15, kind: input, shape index: {}]
  %s16 = inlined_call_operand.vmem [shape: bf16[128,128], index: 16, kind: input, shape index: {}]
  %s17 = inlined_call_operand.vmem [shape: f32[1,128], index: 17, kind: input, shape index: {}]
  %s18 = inlined_call_operand.vmem [shape: bf16[128,128], index: 18, kind: input, shape index: {}]
  %s19 = inlined_call_operand.vmem [shape: f32[1,128], index: 19, kind: input, shape index: {}]
  %s20 = inlined_call_operand.vmem [shape: bf16[128,128], index: 20, kind: input, shape index: {}]
  %s21 = inlined_call_operand.vmem [shape: f32[128,1], index: 21, kind: input, shape index: {}]
  %s22 = inlined_call_operand.vmem [shape: bf16[128,128], index: 22, kind: input, shape index: {}]
  %s23 = inlined_call_operand.vmem [shape: f32[1,128], index: 23, kind: input, shape index: {}]
  %s24 = inlined_call_operand.vmem [shape: bf16[128,128], index: 24, kind: input, shape index: {}]
  %s25 = inlined_call_operand.vmem [shape: bf16[128,128], index: 25, kind: input, shape index: {}]
  %s26 = inlined_call_operand.vmem [shape: f32[1,128], index: 26, kind: input, shape index: {}]
  %s27 = inlined_call_operand.vmem [shape: f32[2,256,128], index: 27, kind: output, shape index: {}]
  %s28 = sld [smem:[#allocation0]]
  $region141: #{dual_gcn_forward.1} parent=0
    _
  %s30 = ssub.s32 1, %s28
  %s31 = scalar_select 0, %s30, %s28
  loop: start=0, step=1, limit=4
  $region2: #{dual_gcn_forward.1} parent=0 // loop_pre_header
    _
  $region3: #{dual_gcn_forward.1} parent=0 // loop_header
    %s33 = sphi 0, %s37
    %p34 = scmp.ge.s32.totalorder %s33, 4
    %s43 = sphi 0, %s45
    %s46 = sphi 0, %s43
    %s47 = sphi 0, %s46
    %s63 = sphi 0, %s47
    %s67 = sphi 0, %s67
    %s69 = sphi 0, %s67
    %s70 = sphi 0, %s69
    %s84 = sphi 0, %s70
    %s88 = sphi 0, %s88
    %s90 = sphi 0, %s88
    %s91 = sphi 0, %s90
    %s105 = sphi 0, %s91
    %s109 = sphi 0, %s109
    %s111 = sphi 0, %s109
    %s112 = sphi 0, %s111
    %s126 = sphi 0, %s112
    %s130 = sphi 0, %s130
    %s132 = sphi 0, %s130
    %s133 = sphi 0, %s132
    %s147 = sphi 0, %s133
    %s151 = sphi 0, %s151
    %s153 = sphi 0, %s151
    %s154 = sphi 0, %s153
    %s168 = sphi 0, %s154
    %s172 = sphi 0, %s172
    %s174 = sphi 0, %s172
    %s175 = sphi 0, %s174
    %s189 = sphi 0, %s175
    %s193 = sphi 0, %s193
    %s195 = sphi 0, %s193
    %s196 = sphi 0, %s195
    %s210 = sphi 0, %s196
    %s214 = sphi 0, %s214
    %s216 = sphi 0, %s214
    %s217 = sphi 0, %s216
    %s231 = sphi 0, %s217
    %s235 = sphi 0, %s235
    %s237 = sphi 0, %s235
    %s238 = sphi 0, %s237
    %s252 = sphi 0, %s238
    %s256 = sphi 0, %s256
    %s258 = sphi 0, %s256
    %s259 = sphi 0, %s258
    %s273 = sphi 0, %s259
    %s277 = sphi 0, %s277
    %s279 = sphi 0, %s277
    %s280 = sphi 0, %s279
    %s294 = sphi 0, %s280
    %s298 = sphi 0, %s298
    %s300 = sphi 0, %s298
    %s301 = sphi 0, %s300
    %s315 = sphi 0, %s301
    %s319 = sphi 0, %s319
    %s321 = sphi 0, %s319
    %s322 = sphi 0, %s321
    %s336 = sphi 0, %s322
    %s340 = sphi 0, %s340
    %s342 = sphi 0, %s340
    %s343 = sphi 0, %s342
    %s357 = sphi 0, %s343
    %s361 = sphi 0, %s361
    %s363 = sphi 0, %s361
    %s364 = sphi 0, %s363
    %s378 = sphi 0, %s364
    %s382 = sphi 0, %s382
    %s384 = sphi 0, %s382
    %s385 = sphi 0, %s384
    %s399 = sphi 0, %s385
    %s403 = sphi 0, %s403
    %s405 = sphi 0, %s403
    %s406 = sphi 0, %s405
    %s420 = sphi 0, %s406
    %s424 = sphi 0, %s424
    %s426 = sphi 0, %s424
    %s427 = sphi 0, %s426
    %s441 = sphi 0, %s427
    %s445 = sphi 0, %s445
    %s447 = sphi 0, %s445
    %s448 = sphi 0, %s447
    %s462 = sphi 0, %s448
    %s466 = sphi 0, %s466
    %s468 = sphi 0, %s466
    %s469 = sphi 0, %s468
    %s483 = sphi 0, %s469
    %s487 = sphi 0, %s487
    %s489 = sphi 0, %s487
    %s490 = sphi 0, %s489
    %s504 = sphi 0, %s490
    %s508 = sphi 0, %s508
    %s510 = sphi 0, %s508
    %s511 = sphi 0, %s510
    %s525 = sphi 0, %s511
    %s529 = sphi 0, %s529
    %s531 = sphi 0, %s529
    %s532 = sphi 0, %s531
    %s546 = sphi 0, %s532
    %s550 = sphi 0, %s550
    %s552 = sphi 0, %s550
    %s553 = sphi 0, %s552
    %s567 = sphi 0, %s553
    %s571 = sphi 0, %s571
    %s573 = sphi 0, %s571
    %s574 = sphi 0, %s573
    %s588 = sphi 0, %s574
    %s592 = sphi 0, %s592
    %s594 = sphi 0, %s592
    %s595 = sphi 0, %s594
    %s609 = sphi 0, %s595
    %s615 = sphi 0, %s617
    %s618 = sphi 0, %s615
    %s619 = sphi 0, %s618
    %s635 = sphi 0, %s619
  $region4: #{dual_gcn_forward.1} parent=0 // loop_header_branch
    %36 = sbr.rel (%p34) target = $region8
  $region5: #{dual_gcn_forward.1} parent=0 // loop_body
    %s38 = ssub.s32 %s33, 1
    %s39 = ssub.s32 %s33, 2
    %s40 = sadd.s32 %s33, 1
    %s41 = ssub.s32 %s33, %s40
    %p42 = scmp.eq.s32.totalorder %s41, 0
    %s44 = sadd.s32 %s43, 1
    %s45 = scalar_select %p42, %s43, %s44
    %p48 = pneg %p42
    %p49 = scmp.eq.s32.totalorder %s33, 1
    %p50 = por %p48, %p49
    %p51 = scmp.ne.s32.totalorder %s43, %s46
    %p52 = scmp.eq.s32.totalorder %s33, 0
    %p53 = por %p51, %p52
    %p54 = scmp.ne.s32.totalorder %s43, %s46
    %p55 = scmp.eq.s32.totalorder %s38, 1
    %p56 = por %p54, %p55
    %p57 = scmp.ne.s32.totalorder %s46, %s47
    %p58 = scmp.eq.s32.totalorder %s38, 0
    %p59 = por %p57, %p58
    %p60 = scmp.ne.s32.totalorder %s46, %s47
    %p61 = scmp.eq.s32.totalorder %s39, 1
    %p62 = por %p60, %p61
    %p64 = scmp.ne.s32.totalorder %s47, %s63
    %p65 = scmp.eq.s32.totalorder %s39, 0
    %p66 = por %p64, %p65
    %s68 = sadd.s32 %s67, 1
    %p71 = scmp.eq.s32.totalorder %s33, 1
    %p72 = scmp.ne.s32.totalorder %s67, %s69
    %p73 = scmp.eq.s32.totalorder %s33, 0
    %p74 = por %p72, %p73
    %p75 = scmp.ne.s32.totalorder %s67, %s69
    %p76 = scmp.eq.s32.totalorder %s38, 1
    %p77 = por %p75, %p76
    %p78 = scmp.ne.s32.totalorder %s69, %s70
    %p79 = scmp.eq.s32.totalorder %s38, 0
    %p80 = por %p78, %p79
    %p81 = scmp.ne.s32.totalorder %s69, %s70
    %p82 = scmp.eq.s32.totalorder %s39, 1
    %p83 = por %p81, %p82
    %p85 = scmp.ne.s32.totalorder %s70, %s84
    %p86 = scmp.eq.s32.totalorder %s39, 0
    %p87 = por %p85, %p86
    %s89 = sadd.s32 %s88, 1
    %p92 = scmp.eq.s32.totalorder %s33, 1
    %p93 = scmp.ne.s32.totalorder %s88, %s90
    %p94 = scmp.eq.s32.totalorder %s33, 0
    %p95 = por %p93, %p94
    %p96 = scmp.ne.s32.totalorder %s88, %s90
    %p97 = scmp.eq.s32.totalorder %s38, 1
    %p98 = por %p96, %p97
    %p99 = scmp.ne.s32.totalorder %s90, %s91
    %p100 = scmp.eq.s32.totalorder %s38, 0
    %p101 = por %p99, %p100
    %p102 = scmp.ne.s32.totalorder %s90, %s91
    %p103 = scmp.eq.s32.totalorder %s39, 1
    %p104 = por %p102, %p103
    %p106 = scmp.ne.s32.totalorder %s91, %s105
    %p107 = scmp.eq.s32.totalorder %s39, 0
    %p108 = por %p106, %p107
    %s110 = sadd.s32 %s109, 1
    %p113 = scmp.eq.s32.totalorder %s33, 1
    %p114 = scmp.ne.s32.totalorder %s109, %s111
    %p115 = scmp.eq.s32.totalorder %s33, 0
    %p116 = por %p114, %p115
    %p117 = scmp.ne.s32.totalorder %s109, %s111
    %p118 = scmp.eq.s32.totalorder %s38, 1
    %p119 = por %p117, %p118
    %p120 = scmp.ne.s32.totalorder %s111, %s112
    %p121 = scmp.eq.s32.totalorder %s38, 0
    %p122 = por %p120, %p121
    %p123 = scmp.ne.s32.totalorder %s111, %s112
    %p124 = scmp.eq.s32.totalorder %s39, 1
    %p125 = por %p123, %p124
    %p127 = scmp.ne.s32.totalorder %s112, %s126
    %p128 = scmp.eq.s32.totalorder %s39, 0
    %p129 = por %p127, %p128
    %s131 = sadd.s32 %s130, 1
    %p134 = scmp.eq.s32.totalorder %s33, 1
    %p135 = scmp.ne.s32.totalorder %s130, %s132
    %p136 = scmp.eq.s32.totalorder %s33, 0
    %p137 = por %p135, %p136
    %p138 = scmp.ne.s32.totalorder %s130, %s132
    %p139 = scmp.eq.s32.totalorder %s38, 1
    %p140 = por %p138, %p139
    %p141 = scmp.ne.s32.totalorder %s132, %s133
    %p142 = scmp.eq.s32.totalorder %s38, 0
    %p143 = por %p141, %p142
    %p144 = scmp.ne.s32.totalorder %s132, %s133
    %p145 = scmp.eq.s32.totalorder %s39, 1
    %p146 = por %p144, %p145
    %p148 = scmp.ne.s32.totalorder %s133, %s147
    %p149 = scmp.eq.s32.totalorder %s39, 0
    %p150 = por %p148, %p149
    %s152 = sadd.s32 %s151, 1
    %p155 = scmp.eq.s32.totalorder %s33, 1
    %p156 = scmp.ne.s32.totalorder %s151, %s153
    %p157 = scmp.eq.s32.totalorder %s33, 0
    %p158 = por %p156, %p157
    %p159 = scmp.ne.s32.totalorder %s151, %s153
    %p160 = scmp.eq.s32.totalorder %s38, 1
    %p161 = por %p159, %p160
    %p162 = scmp.ne.s32.totalorder %s153, %s154
    %p163 = scmp.eq.s32.totalorder %s38, 0
    %p164 = por %p162, %p163
    %p165 = scmp.ne.s32.totalorder %s153, %s154
    %p166 = scmp.eq.s32.totalorder %s39, 1
    %p167 = por %p165, %p166
    %p169 = scmp.ne.s32.totalorder %s154, %s168
    %p170 = scmp.eq.s32.totalorder %s39, 0
    %p171 = por %p169, %p170
    %s173 = sadd.s32 %s172, 1
    %p176 = scmp.eq.s32.totalorder %s33, 1
    %p177 = scmp.ne.s32.totalorder %s172, %s174
    %p178 = scmp.eq.s32.totalorder %s33, 0
    %p179 = por %p177, %p178
    %p180 = scmp.ne.s32.totalorder %s172, %s174
    %p181 = scmp.eq.s32.totalorder %s38, 1
    %p182 = por %p180, %p181
    %p183 = scmp.ne.s32.totalorder %s174, %s175
    %p184 = scmp.eq.s32.totalorder %s38, 0
    %p185 = por %p183, %p184
    %p186 = scmp.ne.s32.totalorder %s174, %s175
    %p187 = scmp.eq.s32.totalorder %s39, 1
    %p188 = por %p186, %p187
    %p190 = scmp.ne.s32.totalorder %s175, %s189
    %p191 = scmp.eq.s32.totalorder %s39, 0
    %p192 = por %p190, %p191
    %s194 = sadd.s32 %s193, 1
    %p197 = scmp.eq.s32.totalorder %s33, 1
    %p198 = scmp.ne.s32.totalorder %s193, %s195
    %p199 = scmp.eq.s32.totalorder %s33, 0
    %p200 = por %p198, %p199
    %p201 = scmp.ne.s32.totalorder %s193, %s195
    %p202 = scmp.eq.s32.totalorder %s38, 1
    %p203 = por %p201, %p202
    %p204 = scmp.ne.s32.totalorder %s195, %s196
    %p205 = scmp.eq.s32.totalorder %s38, 0
    %p206 = por %p204, %p205
    %p207 = scmp.ne.s32.totalorder %s195, %s196
    %p208 = scmp.eq.s32.totalorder %s39, 1
    %p209 = por %p207, %p208
    %p211 = scmp.ne.s32.totalorder %s196, %s210
    %p212 = scmp.eq.s32.totalorder %s39, 0
    %p213 = por %p211, %p212
    %s215 = sadd.s32 %s214, 1
    %p218 = scmp.eq.s32.totalorder %s33, 1
    %p219 = scmp.ne.s32.totalorder %s214, %s216
    %p220 = scmp.eq.s32.totalorder %s33, 0
    %p221 = por %p219, %p220
    %p222 = scmp.ne.s32.totalorder %s214, %s216
    %p223 = scmp.eq.s32.totalorder %s38, 1
    %p224 = por %p222, %p223
    %p225 = scmp.ne.s32.totalorder %s216, %s217
    %p226 = scmp.eq.s32.totalorder %s38, 0
    %p227 = por %p225, %p226
    %p228 = scmp.ne.s32.totalorder %s216, %s217
    %p229 = scmp.eq.s32.totalorder %s39, 1
    %p230 = por %p228, %p229
    %p232 = scmp.ne.s32.totalorder %s217, %s231
    %p233 = scmp.eq.s32.totalorder %s39, 0
    %p234 = por %p232, %p233
    %s236 = sadd.s32 %s235, 1
    %p239 = scmp.eq.s32.totalorder %s33, 1
    %p240 = scmp.ne.s32.totalorder %s235, %s237
    %p241 = scmp.eq.s32.totalorder %s33, 0
    %p242 = por %p240, %p241
    %p243 = scmp.ne.s32.totalorder %s235, %s237
    %p244 = scmp.eq.s32.totalorder %s38, 1
    %p245 = por %p243, %p244
    %p246 = scmp.ne.s32.totalorder %s237, %s238
    %p247 = scmp.eq.s32.totalorder %s38, 0
    %p248 = por %p246, %p247
    %p249 = scmp.ne.s32.totalorder %s237, %s238
    %p250 = scmp.eq.s32.totalorder %s39, 1
    %p251 = por %p249, %p250
    %p253 = scmp.ne.s32.totalorder %s238, %s252
    %p254 = scmp.eq.s32.totalorder %s39, 0
    %p255 = por %p253, %p254
    %s257 = sadd.s32 %s256, 1
    %p260 = scmp.eq.s32.totalorder %s33, 1
    %p261 = scmp.ne.s32.totalorder %s256, %s258
    %p262 = scmp.eq.s32.totalorder %s33, 0
    %p263 = por %p261, %p262
    %p264 = scmp.ne.s32.totalorder %s256, %s258
    %p265 = scmp.eq.s32.totalorder %s38, 1
    %p266 = por %p264, %p265
    %p267 = scmp.ne.s32.totalorder %s258, %s259
    %p268 = scmp.eq.s32.totalorder %s38, 0
    %p269 = por %p267, %p268
    %p270 = scmp.ne.s32.totalorder %s258, %s259
    %p271 = scmp.eq.s32.totalorder %s39, 1
    %p272 = por %p270, %p271
    %p274 = scmp.ne.s32.totalorder %s259, %s273
    %p275 = scmp.eq.s32.totalorder %s39, 0
    %p276 = por %p274, %p275
    %s278 = sadd.s32 %s277, 1
    %p281 = scmp.eq.s32.totalorder %s33, 1
    %p282 = scmp.ne.s32.totalorder %s277, %s279
    %p283 = scmp.eq.s32.totalorder %s33, 0
    %p284 = por %p282, %p283
    %p285 = scmp.ne.s32.totalorder %s277, %s279
    %p286 = scmp.eq.s32.totalorder %s38, 1
    %p287 = por %p285, %p286
    %p288 = scmp.ne.s32.totalorder %s279, %s280
    %p289 = scmp.eq.s32.totalorder %s38, 0
    %p290 = por %p288, %p289
    %p291 = scmp.ne.s32.totalorder %s279, %s280
    %p292 = scmp.eq.s32.totalorder %s39, 1
    %p293 = por %p291, %p292
    %p295 = scmp.ne.s32.totalorder %s280, %s294
    %p296 = scmp.eq.s32.totalorder %s39, 0
    %p297 = por %p295, %p296
    %s299 = sadd.s32 %s298, 1
    %p302 = scmp.eq.s32.totalorder %s33, 1
    %p303 = scmp.ne.s32.totalorder %s298, %s300
    %p304 = scmp.eq.s32.totalorder %s33, 0
    %p305 = por %p303, %p304
    %p306 = scmp.ne.s32.totalorder %s298, %s300
    %p307 = scmp.eq.s32.totalorder %s38, 1
    %p308 = por %p306, %p307
    %p309 = scmp.ne.s32.totalorder %s300, %s301
    %p310 = scmp.eq.s32.totalorder %s38, 0
    %p311 = por %p309, %p310
    %p312 = scmp.ne.s32.totalorder %s300, %s301
    %p313 = scmp.eq.s32.totalorder %s39, 1
    %p314 = por %p312, %p313
    %p316 = scmp.ne.s32.totalorder %s301, %s315
    %p317 = scmp.eq.s32.totalorder %s39, 0
    %p318 = por %p316, %p317
    %s320 = sadd.s32 %s319, 1
    %p323 = scmp.eq.s32.totalorder %s33, 1
    %p324 = scmp.ne.s32.totalorder %s319, %s321
    %p325 = scmp.eq.s32.totalorder %s33, 0
    %p326 = por %p324, %p325
    %p327 = scmp.ne.s32.totalorder %s319, %s321
    %p328 = scmp.eq.s32.totalorder %s38, 1
    %p329 = por %p327, %p328
    %p330 = scmp.ne.s32.totalorder %s321, %s322
    %p331 = scmp.eq.s32.totalorder %s38, 0
    %p332 = por %p330, %p331
    %p333 = scmp.ne.s32.totalorder %s321, %s322
    %p334 = scmp.eq.s32.totalorder %s39, 1
    %p335 = por %p333, %p334
    %p337 = scmp.ne.s32.totalorder %s322, %s336
    %p338 = scmp.eq.s32.totalorder %s39, 0
    %p339 = por %p337, %p338
    %s341 = sadd.s32 %s340, 1
    %p344 = scmp.eq.s32.totalorder %s33, 1
    %p345 = scmp.ne.s32.totalorder %s340, %s342
    %p346 = scmp.eq.s32.totalorder %s33, 0
    %p347 = por %p345, %p346
    %p348 = scmp.ne.s32.totalorder %s340, %s342
    %p349 = scmp.eq.s32.totalorder %s38, 1
    %p350 = por %p348, %p349
    %p351 = scmp.ne.s32.totalorder %s342, %s343
    %p352 = scmp.eq.s32.totalorder %s38, 0
    %p353 = por %p351, %p352
    %p354 = scmp.ne.s32.totalorder %s342, %s343
    %p355 = scmp.eq.s32.totalorder %s39, 1
    %p356 = por %p354, %p355
    %p358 = scmp.ne.s32.totalorder %s343, %s357
    %p359 = scmp.eq.s32.totalorder %s39, 0
    %p360 = por %p358, %p359
    %s362 = sadd.s32 %s361, 1
    %p365 = scmp.eq.s32.totalorder %s33, 1
    %p366 = scmp.ne.s32.totalorder %s361, %s363
    %p367 = scmp.eq.s32.totalorder %s33, 0
    %p368 = por %p366, %p367
    %p369 = scmp.ne.s32.totalorder %s361, %s363
    %p370 = scmp.eq.s32.totalorder %s38, 1
    %p371 = por %p369, %p370
    %p372 = scmp.ne.s32.totalorder %s363, %s364
    %p373 = scmp.eq.s32.totalorder %s38, 0
    %p374 = por %p372, %p373
    %p375 = scmp.ne.s32.totalorder %s363, %s364
    %p376 = scmp.eq.s32.totalorder %s39, 1
    %p377 = por %p375, %p376
    %p379 = scmp.ne.s32.totalorder %s364, %s378
    %p380 = scmp.eq.s32.totalorder %s39, 0
    %p381 = por %p379, %p380
    %s383 = sadd.s32 %s382, 1
    %p386 = scmp.eq.s32.totalorder %s33, 1
    %p387 = scmp.ne.s32.totalorder %s382, %s384
    %p388 = scmp.eq.s32.totalorder %s33, 0
    %p389 = por %p387, %p388
    %p390 = scmp.ne.s32.totalorder %s382, %s384
    %p391 = scmp.eq.s32.totalorder %s38, 1
    %p392 = por %p390, %p391
    %p393 = scmp.ne.s32.totalorder %s384, %s385
    %p394 = scmp.eq.s32.totalorder %s38, 0
    %p395 = por %p393, %p394
    %p396 = scmp.ne.s32.totalorder %s384, %s385
    %p397 = scmp.eq.s32.totalorder %s39, 1
    %p398 = por %p396, %p397
    %p400 = scmp.ne.s32.totalorder %s385, %s399
    %p401 = scmp.eq.s32.totalorder %s39, 0
    %p402 = por %p400, %p401
    %s404 = sadd.s32 %s403, 1
    %p407 = scmp.eq.s32.totalorder %s33, 1
    %p408 = scmp.ne.s32.totalorder %s403, %s405
    %p409 = scmp.eq.s32.totalorder %s33, 0
    %p410 = por %p408, %p409
    %p411 = scmp.ne.s32.totalorder %s403, %s405
    %p412 = scmp.eq.s32.totalorder %s38, 1
    %p413 = por %p411, %p412
    %p414 = scmp.ne.s32.totalorder %s405, %s406
    %p415 = scmp.eq.s32.totalorder %s38, 0
    %p416 = por %p414, %p415
    %p417 = scmp.ne.s32.totalorder %s405, %s406
    %p418 = scmp.eq.s32.totalorder %s39, 1
    %p419 = por %p417, %p418
    %p421 = scmp.ne.s32.totalorder %s406, %s420
    %p422 = scmp.eq.s32.totalorder %s39, 0
    %p423 = por %p421, %p422
    %s425 = sadd.s32 %s424, 1
    %p428 = scmp.eq.s32.totalorder %s33, 1
    %p429 = scmp.ne.s32.totalorder %s424, %s426
    %p430 = scmp.eq.s32.totalorder %s33, 0
    %p431 = por %p429, %p430
    %p432 = scmp.ne.s32.totalorder %s424, %s426
    %p433 = scmp.eq.s32.totalorder %s38, 1
    %p434 = por %p432, %p433
    %p435 = scmp.ne.s32.totalorder %s426, %s427
    %p436 = scmp.eq.s32.totalorder %s38, 0
    %p437 = por %p435, %p436
    %p438 = scmp.ne.s32.totalorder %s426, %s427
    %p439 = scmp.eq.s32.totalorder %s39, 1
    %p440 = por %p438, %p439
    %p442 = scmp.ne.s32.totalorder %s427, %s441
    %p443 = scmp.eq.s32.totalorder %s39, 0
    %p444 = por %p442, %p443
    %s446 = sadd.s32 %s445, 1
    %p449 = scmp.eq.s32.totalorder %s33, 1
    %p450 = scmp.ne.s32.totalorder %s445, %s447
    %p451 = scmp.eq.s32.totalorder %s33, 0
    %p452 = por %p450, %p451
    %p453 = scmp.ne.s32.totalorder %s445, %s447
    %p454 = scmp.eq.s32.totalorder %s38, 1
    %p455 = por %p453, %p454
    %p456 = scmp.ne.s32.totalorder %s447, %s448
    %p457 = scmp.eq.s32.totalorder %s38, 0
    %p458 = por %p456, %p457
    %p459 = scmp.ne.s32.totalorder %s447, %s448
    %p460 = scmp.eq.s32.totalorder %s39, 1
    %p461 = por %p459, %p460
    %p463 = scmp.ne.s32.totalorder %s448, %s462
    %p464 = scmp.eq.s32.totalorder %s39, 0
    %p465 = por %p463, %p464
    %s467 = sadd.s32 %s466, 1
    %p470 = scmp.eq.s32.totalorder %s33, 1
    %p471 = scmp.ne.s32.totalorder %s466, %s468
    %p472 = scmp.eq.s32.totalorder %s33, 0
    %p473 = por %p471, %p472
    %p474 = scmp.ne.s32.totalorder %s466, %s468
    %p475 = scmp.eq.s32.totalorder %s38, 1
    %p476 = por %p474, %p475
    %p477 = scmp.ne.s32.totalorder %s468, %s469
    %p478 = scmp.eq.s32.totalorder %s38, 0
    %p479 = por %p477, %p478
    %p480 = scmp.ne.s32.totalorder %s468, %s469
    %p481 = scmp.eq.s32.totalorder %s39, 1
    %p482 = por %p480, %p481
    %p484 = scmp.ne.s32.totalorder %s469, %s483
    %p485 = scmp.eq.s32.totalorder %s39, 0
    %p486 = por %p484, %p485
    %s488 = sadd.s32 %s487, 1
    %p491 = scmp.eq.s32.totalorder %s33, 1
    %p492 = scmp.ne.s32.totalorder %s487, %s489
    %p493 = scmp.eq.s32.totalorder %s33, 0
    %p494 = por %p492, %p493
    %p495 = scmp.ne.s32.totalorder %s487, %s489
    %p496 = scmp.eq.s32.totalorder %s38, 1
    %p497 = por %p495, %p496
    %p498 = scmp.ne.s32.totalorder %s489, %s490
    %p499 = scmp.eq.s32.totalorder %s38, 0
    %p500 = por %p498, %p499
    %p501 = scmp.ne.s32.totalorder %s489, %s490
    %p502 = scmp.eq.s32.totalorder %s39, 1
    %p503 = por %p501, %p502
    %p505 = scmp.ne.s32.totalorder %s490, %s504
    %p506 = scmp.eq.s32.totalorder %s39, 0
    %p507 = por %p505, %p506
    %s509 = sadd.s32 %s508, 1
    %p512 = scmp.eq.s32.totalorder %s33, 1
    %p513 = scmp.ne.s32.totalorder %s508, %s510
    %p514 = scmp.eq.s32.totalorder %s33, 0
    %p515 = por %p513, %p514
    %p516 = scmp.ne.s32.totalorder %s508, %s510
    %p517 = scmp.eq.s32.totalorder %s38, 1
    %p518 = por %p516, %p517
    %p519 = scmp.ne.s32.totalorder %s510, %s511
    %p520 = scmp.eq.s32.totalorder %s38, 0
    %p521 = por %p519, %p520
    %p522 = scmp.ne.s32.totalorder %s510, %s511
    %p523 = scmp.eq.s32.totalorder %s39, 1
    %p524 = por %p522, %p523
    %p526 = scmp.ne.s32.totalorder %s511, %s525
    %p527 = scmp.eq.s32.totalorder %s39, 0
    %p528 = por %p526, %p527
    %s530 = sadd.s32 %s529, 1
    %p533 = scmp.eq.s32.totalorder %s33, 1
    %p534 = scmp.ne.s32.totalorder %s529, %s531
    %p535 = scmp.eq.s32.totalorder %s33, 0
    %p536 = por %p534, %p535
    %p537 = scmp.ne.s32.totalorder %s529, %s531
    %p538 = scmp.eq.s32.totalorder %s38, 1
    %p539 = por %p537, %p538
    %p540 = scmp.ne.s32.totalorder %s531, %s532
    %p541 = scmp.eq.s32.totalorder %s38, 0
    %p542 = por %p540, %p541
    %p543 = scmp.ne.s32.totalorder %s531, %s532
    %p544 = scmp.eq.s32.totalorder %s39, 1
    %p545 = por %p543, %p544
    %p547 = scmp.ne.s32.totalorder %s532, %s546
    %p548 = scmp.eq.s32.totalorder %s39, 0
    %p549 = por %p547, %p548
    %s551 = sadd.s32 %s550, 1
    %p554 = scmp.eq.s32.totalorder %s33, 1
    %p555 = scmp.ne.s32.totalorder %s550, %s552
    %p556 = scmp.eq.s32.totalorder %s33, 0
    %p557 = por %p555, %p556
    %p558 = scmp.ne.s32.totalorder %s550, %s552
    %p559 = scmp.eq.s32.totalorder %s38, 1
    %p560 = por %p558, %p559
    %p561 = scmp.ne.s32.totalorder %s552, %s553
    %p562 = scmp.eq.s32.totalorder %s38, 0
    %p563 = por %p561, %p562
    %p564 = scmp.ne.s32.totalorder %s552, %s553
    %p565 = scmp.eq.s32.totalorder %s39, 1
    %p566 = por %p564, %p565
    %p568 = scmp.ne.s32.totalorder %s553, %s567
    %p569 = scmp.eq.s32.totalorder %s39, 0
    %p570 = por %p568, %p569
    %s572 = sadd.s32 %s571, 1
    %p575 = scmp.eq.s32.totalorder %s33, 1
    %p576 = scmp.ne.s32.totalorder %s571, %s573
    %p577 = scmp.eq.s32.totalorder %s33, 0
    %p578 = por %p576, %p577
    %p579 = scmp.ne.s32.totalorder %s571, %s573
    %p580 = scmp.eq.s32.totalorder %s38, 1
    %p581 = por %p579, %p580
    %p582 = scmp.ne.s32.totalorder %s573, %s574
    %p583 = scmp.eq.s32.totalorder %s38, 0
    %p584 = por %p582, %p583
    %p585 = scmp.ne.s32.totalorder %s573, %s574
    %p586 = scmp.eq.s32.totalorder %s39, 1
    %p587 = por %p585, %p586
    %p589 = scmp.ne.s32.totalorder %s574, %s588
    %p590 = scmp.eq.s32.totalorder %s39, 0
    %p591 = por %p589, %p590
    %s593 = sadd.s32 %s592, 1
    %p596 = scmp.eq.s32.totalorder %s33, 1
    %p597 = scmp.ne.s32.totalorder %s592, %s594
    %p598 = scmp.eq.s32.totalorder %s33, 0
    %p599 = por %p597, %p598
    %p600 = scmp.ne.s32.totalorder %s592, %s594
    %p601 = scmp.eq.s32.totalorder %s38, 1
    %p602 = por %p600, %p601
    %p603 = scmp.ne.s32.totalorder %s594, %s595
    %p604 = scmp.eq.s32.totalorder %s38, 0
    %p605 = por %p603, %p604
    %p606 = scmp.ne.s32.totalorder %s594, %s595
    %p607 = scmp.eq.s32.totalorder %s39, 1
    %p608 = por %p606, %p607
    %p610 = scmp.ne.s32.totalorder %s595, %s609
    %p611 = scmp.eq.s32.totalorder %s39, 0
    %p612 = por %p610, %p611
    %s613 = ssub.s32 %s33, %s40
    %p614 = scmp.eq.s32.totalorder %s613, 0
    %s616 = sadd.s32 %s615, 1
    %s617 = scalar_select %p614, %s615, %s616
    %p620 = pneg %p614
    %p621 = scmp.eq.s32.totalorder %s33, 1
    %p622 = por %p620, %p621
    %p623 = scmp.ne.s32.totalorder %s615, %s618
    %p624 = scmp.eq.s32.totalorder %s33, 0
    %p625 = por %p623, %p624
    %p626 = scmp.ne.s32.totalorder %s615, %s618
    %p627 = scmp.eq.s32.totalorder %s38, 1
    %p628 = por %p626, %p627
    %p629 = scmp.ne.s32.totalorder %s618, %s619
    %p630 = scmp.eq.s32.totalorder %s38, 0
    %p631 = por %p629, %p630
    %p632 = scmp.ne.s32.totalorder %s618, %s619
    %p633 = scmp.eq.s32.totalorder %s39, 1
    %p634 = por %p632, %p633
    %p636 = scmp.ne.s32.totalorder %s619, %s635
    %p637 = scmp.eq.s32.totalorder %s39, 0
    %p638 = por %p636, %p637
    %p639 = scmp.le.s32.totalorder 1, %s33
    %p640 = scmp.lt.s32.totalorder %s33, 3
    %p641 = pnand %p639, %p640
    %p642 = pneg %p641
    // Predicated region
    $region9: #{dual_gcn_forward.1} parent=5 // pred_check
      _
    $region10: #{dual_gcn_forward.1} parent=5 // pred_check_branch
      %644 = sbr.rel (%p641) target = $region12
    $region11: #{dual_gcn_forward.1} parent=5 // pred_region
      %s645 = ssub.s32 %s33, 1
      // Predicated region
      $region13: #{dual_gcn_forward.1} parent=11 // pred_check
        %p646 = pneg %p80
      $region14: #{dual_gcn_forward.1} parent=11 // pred_check_branch
        %648 = sbr.rel (%p646) target = $region16
      $region15: #{dual_gcn_forward.1} parent=11 // pred_region
        _
      $region16: #{dual_gcn_forward.1} parent=11 // pred_fallthru
        _
      // Predicated region
      $region17: #{dual_gcn_forward.1} parent=11 // pred_check
        %p649 = pneg %p101
      $region18: #{dual_gcn_forward.1} parent=11 // pred_check_branch
        %651 = sbr.rel (%p649) target = $region20
      $region19: #{dual_gcn_forward.1} parent=11 // pred_region
        _
      $region20: #{dual_gcn_forward.1} parent=11 // pred_fallthru
        _
      // Predicated region
      $region21: #{dual_gcn_forward.1} parent=11 // pred_check
        %p652 = pneg %p122
      $region22: #{dual_gcn_forward.1} parent=11 // pred_check_branch
        %654 = sbr.rel (%p652) target = $region24
      $region23: #{dual_gcn_forward.1} parent=11 // pred_region
        _
      $region24: #{dual_gcn_forward.1} parent=11 // pred_fallthru
        _
      // Predicated region
      $region25: #{dual_gcn_forward.1} parent=11 // pred_check
        %p655 = pneg %p143
      $region26: #{dual_gcn_forward.1} parent=11 // pred_check_branch
        %657 = sbr.rel (%p655) target = $region28
      $region27: #{dual_gcn_forward.1} parent=11 // pred_region
        _
      $region28: #{dual_gcn_forward.1} parent=11 // pred_fallthru
        _
      // Predicated region
      $region29: #{dual_gcn_forward.1} parent=11 // pred_check
        %p658 = pneg %p164
      $region30: #{dual_gcn_forward.1} parent=11 // pred_check_branch
        %660 = sbr.rel (%p658) target = $region32
      $region31: #{dual_gcn_forward.1} parent=11 // pred_region
        _
      $region32: #{dual_gcn_forward.1} parent=11 // pred_fallthru
        _
      // Predicated region
      $region33: #{dual_gcn_forward.1} parent=11 // pred_check
        %p661 = pneg %p185
      $region34: #{dual_gcn_forward.1} parent=11 // pred_check_branch
        %663 = sbr.rel (%p661) target = $region36
      $region35: #{dual_gcn_forward.1} parent=11 // pred_region
        _
      $region36: #{dual_gcn_forward.1} parent=11 // pred_fallthru
        _
      // Predicated region
      $region37: #{dual_gcn_forward.1} parent=11 // pred_check
        %p664 = pneg %p206
      $region38: #{dual_gcn_forward.1} parent=11 // pred_check_branch
        %666 = sbr.rel (%p664) target = $region40
      $region39: #{dual_gcn_forward.1} parent=11 // pred_region
        _
      $region40: #{dual_gcn_forward.1} parent=11 // pred_fallthru
        _
      // Predicated region
      $region41: #{dual_gcn_forward.1} parent=11 // pred_check
        %p667 = pneg %p227
      $region42: #{dual_gcn_forward.1} parent=11 // pred_check_branch
        %669 = sbr.rel (%p667) target = $region44
      $region43: #{dual_gcn_forward.1} parent=11 // pred_region
        _
      $region44: #{dual_gcn_forward.1} parent=11 // pred_fallthru
        _
      // Predicated region
      $region45: #{dual_gcn_forward.1} parent=11 // pred_check
        %p670 = pneg %p248
      $region46: #{dual_gcn_forward.1} parent=11 // pred_check_branch
        %672 = sbr.rel (%p670) target = $region48
      $region47: #{dual_gcn_forward.1} parent=11 // pred_region
        _
      $region48: #{dual_gcn_forward.1} parent=11 // pred_fallthru
        _
      // Predicated region
      $region49: #{dual_gcn_forward.1} parent=11 // pred_check
        %p673 = pneg %p269
      $region50: #{dual_gcn_forward.1} parent=11 // pred_check_branch
        %675 = sbr.rel (%p673) target = $region52
      $region51: #{dual_gcn_forward.1} parent=11 // pred_region
        _
      $region52: #{dual_gcn_forward.1} parent=11 // pred_fallthru
        _
      // Predicated region
      $region53: #{dual_gcn_forward.1} parent=11 // pred_check
        %p676 = pneg %p290
      $region54: #{dual_gcn_forward.1} parent=11 // pred_check_branch
        %678 = sbr.rel (%p676) target = $region56
      $region55: #{dual_gcn_forward.1} parent=11 // pred_region
        _
      $region56: #{dual_gcn_forward.1} parent=11 // pred_fallthru
        _
      // Predicated region
      $region57: #{dual_gcn_forward.1} parent=11 // pred_check
        %p679 = pneg %p311
      $region58: #{dual_gcn_forward.1} parent=11 // pred_check_branch
        %681 = sbr.rel (%p679) target = $region60
      $region59: #{dual_gcn_forward.1} parent=11 // pred_region
        _
      $region60: #{dual_gcn_forward.1} parent=11 // pred_fallthru
        _
      // Predicated region
      $region61: #{dual_gcn_forward.1} parent=11 // pred_check
        %p682 = pneg %p332
      $region62: #{dual_gcn_forward.1} parent=11 // pred_check_branch
        %684 = sbr.rel (%p682) target = $region64
      $region63: #{dual_gcn_forward.1} parent=11 // pred_region
        _
      $region64: #{dual_gcn_forward.1} parent=11 // pred_fallthru
        _
      // Predicated region
      $region65: #{dual_gcn_forward.1} parent=11 // pred_check
        %p685 = pneg %p353
      $region66: #{dual_gcn_forward.1} parent=11 // pred_check_branch
        %687 = sbr.rel (%p685) target = $region68
      $region67: #{dual_gcn_forward.1} parent=11 // pred_region
        _
      $region68: #{dual_gcn_forward.1} parent=11 // pred_fallthru
        _
      // Predicated region
      $region69: #{dual_gcn_forward.1} parent=11 // pred_check
        %p688 = pneg %p374
      $region70: #{dual_gcn_forward.1} parent=11 // pred_check_branch
        %690 = sbr.rel (%p688) target = $region72
      $region71: #{dual_gcn_forward.1} parent=11 // pred_region
        _
      $region72: #{dual_gcn_forward.1} parent=11 // pred_fallthru
        _
      // Predicated region
      $region73: #{dual_gcn_forward.1} parent=11 // pred_check
        %p691 = pneg %p395
      $region74: #{dual_gcn_forward.1} parent=11 // pred_check_branch
        %693 = sbr.rel (%p691) target = $region76
      $region75: #{dual_gcn_forward.1} parent=11 // pred_region
        _
      $region76: #{dual_gcn_forward.1} parent=11 // pred_fallthru
        _
      // Predicated region
      $region77: #{dual_gcn_forward.1} parent=11 // pred_check
        %p694 = pneg %p416
      $region78: #{dual_gcn_forward.1} parent=11 // pred_check_branch
        %696 = sbr.rel (%p694) target = $region80
      $region79: #{dual_gcn_forward.1} parent=11 // pred_region
        _
      $region80: #{dual_gcn_forward.1} parent=11 // pred_fallthru
        _
      // Predicated region
      $region81: #{dual_gcn_forward.1} parent=11 // pred_check
        %p697 = pneg %p437
      $region82: #{dual_gcn_forward.1} parent=11 // pred_check_branch
        %699 = sbr.rel (%p697) target = $region84
      $region83: #{dual_gcn_forward.1} parent=11 // pred_region
        _
      $region84: #{dual_gcn_forward.1} parent=11 // pred_fallthru
        _
      // Predicated region
      $region85: #{dual_gcn_forward.1} parent=11 // pred_check
        %p700 = pneg %p458
      $region86: #{dual_gcn_forward.1} parent=11 // pred_check_branch
        %702 = sbr.rel (%p700) target = $region88
      $region87: #{dual_gcn_forward.1} parent=11 // pred_region
        _
      $region88: #{dual_gcn_forward.1} parent=11 // pred_fallthru
        _
      // Predicated region
      $region89: #{dual_gcn_forward.1} parent=11 // pred_check
        %p703 = pneg %p479
      $region90: #{dual_gcn_forward.1} parent=11 // pred_check_branch
        %705 = sbr.rel (%p703) target = $region92
      $region91: #{dual_gcn_forward.1} parent=11 // pred_region
        _
      $region92: #{dual_gcn_forward.1} parent=11 // pred_fallthru
        _
      // Predicated region
      $region93: #{dual_gcn_forward.1} parent=11 // pred_check
        %p706 = pneg %p500
      $region94: #{dual_gcn_forward.1} parent=11 // pred_check_branch
        %708 = sbr.rel (%p706) target = $region96
      $region95: #{dual_gcn_forward.1} parent=11 // pred_region
        _
      $region96: #{dual_gcn_forward.1} parent=11 // pred_fallthru
        _
      // Predicated region
      $region97: #{dual_gcn_forward.1} parent=11 // pred_check
        %p709 = pneg %p521
      $region98: #{dual_gcn_forward.1} parent=11 // pred_check_branch
        %711 = sbr.rel (%p709) target = $region100
      $region99: #{dual_gcn_forward.1} parent=11 // pred_region
        _
      $region100: #{dual_gcn_forward.1} parent=11 // pred_fallthru
        _
      // Predicated region
      $region101: #{dual_gcn_forward.1} parent=11 // pred_check
        %p712 = pneg %p542
      $region102: #{dual_gcn_forward.1} parent=11 // pred_check_branch
        %714 = sbr.rel (%p712) target = $region104
      $region103: #{dual_gcn_forward.1} parent=11 // pred_region
        _
      $region104: #{dual_gcn_forward.1} parent=11 // pred_fallthru
        _
      // Predicated region
      $region105: #{dual_gcn_forward.1} parent=11 // pred_check
        %p715 = pneg %p563
      $region106: #{dual_gcn_forward.1} parent=11 // pred_check_branch
        %717 = sbr.rel (%p715) target = $region108
      $region107: #{dual_gcn_forward.1} parent=11 // pred_region
        _
      $region108: #{dual_gcn_forward.1} parent=11 // pred_fallthru
        _
      // Predicated region
      $region109: #{dual_gcn_forward.1} parent=11 // pred_check
        %p718 = pneg %p584
      $region110: #{dual_gcn_forward.1} parent=11 // pred_check_branch
        %720 = sbr.rel (%p718) target = $region112
      $region111: #{dual_gcn_forward.1} parent=11 // pred_region
        _
      $region112: #{dual_gcn_forward.1} parent=11 // pred_fallthru
        _
      // Predicated region
      $region113: #{dual_gcn_forward.1} parent=11 // pred_check
        %p721 = pneg %p605
      $region114: #{dual_gcn_forward.1} parent=11 // pred_check_branch
        %723 = sbr.rel (%p721) target = $region116
      $region115: #{dual_gcn_forward.1} parent=11 // pred_region
        _
      $region116: #{dual_gcn_forward.1} parent=11 // pred_fallthru
        _
    $region12: #{dual_gcn_forward.1} parent=5 // pred_fallthru
      _
    %p724 = scmp.lt.s32.totalorder %s33, 2
    // Predicated region
    $region117: #{dual_gcn_forward.1} parent=5 // pred_check
      %p725 = pneg %p724
    $region118: #{dual_gcn_forward.1} parent=5 // pred_check_branch
      %727 = sbr.rel (%p725) target = $region120
    $region119: #{dual_gcn_forward.1} parent=5 // pred_region
      // Predicated region
      $region121: #{dual_gcn_forward.1} parent=119 // pred_check
        %p728 = pneg %p53
      $region122: #{dual_gcn_forward.1} parent=119 // pred_check_branch
        %730 = sbr.rel (%p728) target = $region124
      $region123: #{dual_gcn_forward.1} parent=119 // pred_region
        %p731 = scmp.lt.s32.totalorder %s33, 1
        %s732 = scalar_select %p731, %s33, 1
        %s733 = smul.addr %s732, 32
        %s734 = smul.addr %s733, 4
        %s735 = scalar_lea.vmem %s0, %s734
      $region124: #{dual_gcn_forward.1} parent=119 // pred_fallthru
        _
    $region120: #{dual_gcn_forward.1} parent=5 // pred_fallthru
      _
    %p736 = scmp.le.s32.totalorder 1, %s33
    %p737 = scmp.lt.s32.totalorder %s33, 3
    %p738 = pnand %p736, %p737
    %p739 = pneg %p738
    // Predicated region
    $region125: #{dual_gcn_forward.1} parent=5 // pred_check
      _
    $region126: #{dual_gcn_forward.1} parent=5 // pred_check_branch
      %741 = sbr.rel (%p738) target = $region128
    $region127: #{dual_gcn_forward.1} parent=5 // pred_region
      %s742 = ssub.s32 %s33, 1
      %p743 = scmp.lt.s32.totalorder %s38, 1
      %s744 = scalar_select %p743, %s38, 1
      %s745 = smul.addr %s744, 32
      %s746 = smul.addr %s745, 4
      %s747 = scalar_lea.vmem %s0, %s746
      %p748 = pneg %p59
      %p749 = pneg %p56
      %p750 = pneg %p80
      %p751 = pneg %p77
      %p752 = pneg %p101
      %p753 = pneg %p98
      %p754 = pneg %p122
      %p755 = pneg %p119
      %p756 = pneg %p143
      %p757 = pneg %p140
      %p758 = pneg %p164
      %p759 = pneg %p161
      %p760 = pneg %p185
      %p761 = pneg %p182
      %p762 = pneg %p206
      %p763 = pneg %p203
      %p764 = pneg %p227
      %p765 = pneg %p224
      %p766 = pneg %p248
      %p767 = pneg %p245
      %p768 = pneg %p269
      %p769 = pneg %p266
      %p770 = pneg %p290
      %p771 = pneg %p287
      %p772 = pneg %p311
      %p773 = pneg %p308
      %p774 = pneg %p332
      %p775 = pneg %p329
      %p776 = pneg %p353
      %p777 = pneg %p350
      %p778 = pneg %p374
      %p779 = pneg %p371
      %p780 = pneg %p395
      %p781 = pneg %p392
      %p782 = pneg %p416
      %p783 = pneg %p413
      %p784 = pneg %p437
      %p785 = pneg %p434
      %p786 = pneg %p458
      %p787 = pneg %p455
      %p788 = pneg %p479
      %p789 = pneg %p476
      %p790 = pneg %p500
      %p791 = pneg %p497
      %p792 = pneg %p521
      %p793 = pneg %p518
      %p794 = pneg %p542
      %p795 = pneg %p539
      %p796 = pneg %p563
      %p797 = pneg %p560
      %p798 = pneg %p584
      %p799 = pneg %p581
      %p800 = pneg %p605
      %p801 = pneg %p602
      %p802 = pneg %p631
      %p803 = pneg %p628
      %p804 = scmp.lt.s32.totalorder %s38, 1
      %s805 = scalar_select %p804, %s38, 1
      %s806 = smul.addr %s805, 32
      %s807 = smul.addr %s806, 8
      %s808 = scalar_lea.vmem %s27, %s807
      %p809 = scmp.lt.s32.totalorder %s38, 1
      %s810 = scalar_select %p809, %s38, 1
      %s811 = smul.addr %s810, 32
      %s812 = smul.addr %s811, 4
      %s813 = scalar_lea.vmem %s0, %s812
      %p814 = scmp.lt.s32.totalorder %s38, 1
      %s815 = scalar_select %p814, %s38, 1
      %s816 = smul.addr %s815, 32
      %s817 = smul.addr %s816, 8
      %s818 = scalar_lea.vmem %s27, %s817
      %v820 = vld [vmem:[%s813] sm:$0xf]
      %v821 = vld [vmem:[%s813 + $0x4] sm:$0xf]
      %v822 = vld [vmem:[%s813 + $0x8] sm:$0xf]
      %v823 = vld [vmem:[%s813 + $0xc] sm:$0xf]
      %v824 = vld [vmem:[%s813 + $0x10] sm:$0xf]
      %v825 = vld [vmem:[%s813 + $0x14] sm:$0xf]
      %v826 = vld [vmem:[%s813 + $0x18] sm:$0xf]
      %v827 = vld [vmem:[%s813 + $0x1c] sm:$0xf]
      %v828 = vld [vmem:[%s813 + $0x20] sm:$0xf]
      %v829 = vld [vmem:[%s813 + $0x24] sm:$0xf]
      %v830 = vld [vmem:[%s813 + $0x28] sm:$0xf]
      %v831 = vld [vmem:[%s813 + $0x2c] sm:$0xf]
      %v832 = vld [vmem:[%s813 + $0x30] sm:$0xf]
      %v833 = vld [vmem:[%s813 + $0x34] sm:$0xf]
      %v834 = vld [vmem:[%s813 + $0x38] sm:$0xf]
      %v835 = vld [vmem:[%s813 + $0x3c] sm:$0xf]
      %v836 = vld [vmem:[%s813 + $0x40] sm:$0xf]
      %v837 = vld [vmem:[%s813 + $0x44] sm:$0xf]
      %v838 = vld [vmem:[%s813 + $0x48] sm:$0xf]
      %v839 = vld [vmem:[%s813 + $0x4c] sm:$0xf]
      %v840 = vld [vmem:[%s813 + $0x50] sm:$0xf]
      %v841 = vld [vmem:[%s813 + $0x54] sm:$0xf]
      %v842 = vld [vmem:[%s813 + $0x58] sm:$0xf]
      %v843 = vld [vmem:[%s813 + $0x5c] sm:$0xf]
      %v844 = vld [vmem:[%s813 + $0x60] sm:$0xf]
      %v845 = vld [vmem:[%s813 + $0x64] sm:$0xf]
      %v846 = vld [vmem:[%s813 + $0x68] sm:$0xf]
      %v847 = vld [vmem:[%s813 + $0x6c] sm:$0xf]
      %v848 = vld [vmem:[%s813 + $0x70] sm:$0xf]
      %v849 = vld [vmem:[%s813 + $0x74] sm:$0xf]
      %v850 = vld [vmem:[%s813 + $0x78] sm:$0xf]
      %v851 = vld [vmem:[%s813 + $0x7c] sm:$0xf]
      %v852 = vunpack.c.l.bf16 %v820
      %v853 = vunpack.c.l.bf16 %v821
      %v854 = vunpack.c.l.bf16 %v822
      %v855 = vunpack.c.l.bf16 %v823
      %v856 = vunpack.c.l.bf16 %v824
      %v857 = vunpack.c.l.bf16 %v825
      %v858 = vunpack.c.l.bf16 %v826
      %v859 = vunpack.c.l.bf16 %v827
      %v860 = vunpack.c.l.bf16 %v828
      %v861 = vunpack.c.l.bf16 %v829
      %v862 = vunpack.c.l.bf16 %v830
      %v863 = vunpack.c.l.bf16 %v831
      %v864 = vunpack.c.l.bf16 %v832
      %v865 = vunpack.c.l.bf16 %v833
      %v866 = vunpack.c.l.bf16 %v834
      %v867 = vunpack.c.l.bf16 %v835
      %v868 = vunpack.c.l.bf16 %v836
      %v869 = vunpack.c.l.bf16 %v837
      %v870 = vunpack.c.l.bf16 %v838
      %v871 = vunpack.c.l.bf16 %v839
      %v872 = vunpack.c.l.bf16 %v840
      %v873 = vunpack.c.l.bf16 %v841
      %v874 = vunpack.c.l.bf16 %v842
      %v875 = vunpack.c.l.bf16 %v843
      %v876 = vunpack.c.l.bf16 %v844
      %v877 = vunpack.c.l.bf16 %v845
      %v878 = vunpack.c.l.bf16 %v846
      %v879 = vunpack.c.l.bf16 %v847
      %v880 = vunpack.c.l.bf16 %v848
      %v881 = vunpack.c.l.bf16 %v849
      %v882 = vunpack.c.l.bf16 %v850
      %v883 = vunpack.c.l.bf16 %v851
      %v884 = vld [vmem:[%s4] sm:$0xff]
      %v885 = vld [vmem:[%s4 + $0x8] sm:$0x1]
      %v886 = vld [vmem:[%s4 + $0x10] sm:$0xff]
      %v887 = vld [vmem:[%s4 + $0x18] sm:$0x1]
      %v888 = vld [vmem:[%s4 + $0x20] sm:$0xff]
      %v889 = vld [vmem:[%s4 + $0x28] sm:$0x1]
      %v890 = vld [vmem:[%s5] sm:$0x7]
      %v891 = vld [vmem:[%s1] sm:$0xff]
      %v892 = vld [vmem:[%s1 + $0x8] sm:$0xff]
      %v893 = vld [vmem:[%s1 + $0x10] sm:$0xff]
      %v894 = vld [vmem:[%s1 + $0x18] sm:$0xff]
      %v895 = vld [vmem:[%s1 + $0x20] sm:$0xff]
      %v896 = vld [vmem:[%s1 + $0x28] sm:$0xff]
      %v897 = vld [vmem:[%s1 + $0x30] sm:$0xff]
      %v898 = vld [vmem:[%s1 + $0x38] sm:$0xff]
      %v899 = vld [vmem:[%s1 + $0x40] sm:$0xff]
      %v900 = vld [vmem:[%s1 + $0x48] sm:$0xff]
      %v901 = vld [vmem:[%s1 + $0x50] sm:$0xff]
      %v902 = vld [vmem:[%s1 + $0x58] sm:$0xff]
      %v903 = vld [vmem:[%s1 + $0x60] sm:$0xff]
      %v904 = vld [vmem:[%s1 + $0x68] sm:$0xff]
      %v905 = vld [vmem:[%s1 + $0x70] sm:$0xff]
      %v906 = vld [vmem:[%s1 + $0x78] sm:$0xff]
      %v907 = vld [vmem:[%s1 + $0x80] sm:$0xff]
      %v908 = vld [vmem:[%s1 + $0x88] sm:$0xff]
      %v909 = vld [vmem:[%s1 + $0x90] sm:$0xff]
      %v910 = vld [vmem:[%s1 + $0x98] sm:$0xff]
      %v911 = vld [vmem:[%s1 + $0xa0] sm:$0xff]
      %v912 = vld [vmem:[%s1 + $0xa8] sm:$0xff]
      %v913 = vld [vmem:[%s1 + $0xb0] sm:$0xff]
      %v914 = vld [vmem:[%s1 + $0xb8] sm:$0xff]
      %v915 = vld [vmem:[%s1 + $0xc0] sm:$0xff]
      %v916 = vld [vmem:[%s1 + $0xc8] sm:$0xff]
      %v917 = vld [vmem:[%s1 + $0xd0] sm:$0xff]
      %v918 = vld [vmem:[%s1 + $0xd8] sm:$0xff]
      %v919 = vld [vmem:[%s1 + $0xe0] sm:$0xff]
      %v920 = vld [vmem:[%s1 + $0xe8] sm:$0xff]
      %v921 = vld [vmem:[%s1 + $0xf0] sm:$0xff]
      %v922 = vld [vmem:[%s1 + $0xf8] sm:$0xff]
      %v923 = vld [vmem:[%s1 + $0x100] sm:$0xff]
      %v924 = vld [vmem:[%s1 + $0x108] sm:$0xff]
      %v925 = vld [vmem:[%s1 + $0x110] sm:$0xff]
      %v926 = vld [vmem:[%s1 + $0x118] sm:$0xff]
      %v927 = vld [vmem:[%s1 + $0x120] sm:$0xff]
      %v928 = vld [vmem:[%s1 + $0x128] sm:$0xff]
      %v929 = vld [vmem:[%s1 + $0x130] sm:$0xff]
      %v930 = vld [vmem:[%s1 + $0x138] sm:$0xff]
      %v931 = vld [vmem:[%s1 + $0x140] sm:$0xff]
      %v932 = vld [vmem:[%s1 + $0x148] sm:$0xff]
      %v933 = vld [vmem:[%s1 + $0x150] sm:$0xff]
      %v934 = vld [vmem:[%s1 + $0x158] sm:$0xff]
      %v935 = vld [vmem:[%s1 + $0x160] sm:$0xff]
      %v936 = vld [vmem:[%s1 + $0x168] sm:$0xff]
      %v937 = vld [vmem:[%s1 + $0x170] sm:$0xff]
      %v938 = vld [vmem:[%s1 + $0x178] sm:$0xff]
      %v939 = vld [vmem:[%s1 + $0x180] sm:$0xff]
      %v940 = vld [vmem:[%s1 + $0x188] sm:$0xff]
      %v941 = vld [vmem:[%s1 + $0x190] sm:$0xff]
      %v942 = vld [vmem:[%s1 + $0x198] sm:$0xff]
      %v943 = vld [vmem:[%s1 + $0x1a0] sm:$0xff]
      %v944 = vld [vmem:[%s1 + $0x1a8] sm:$0xff]
      %v945 = vld [vmem:[%s1 + $0x1b0] sm:$0xff]
      %v946 = vld [vmem:[%s1 + $0x1b8] sm:$0xff]
      %v947 = vld [vmem:[%s1 + $0x1c0] sm:$0xff]
      %v948 = vld [vmem:[%s1 + $0x1c8] sm:$0xff]
      %v949 = vld [vmem:[%s1 + $0x1d0] sm:$0xff]
      %v950 = vld [vmem:[%s1 + $0x1d8] sm:$0xff]
      %v951 = vld [vmem:[%s1 + $0x1e0] sm:$0xff]
      %v952 = vld [vmem:[%s1 + $0x1e8] sm:$0xff]
      %v953 = vld [vmem:[%s1 + $0x1f0] sm:$0xff]
      %v954 = vld [vmem:[%s1 + $0x1f8] sm:$0xff]
      %v955 = vld [vmem:[%s1 + $0x200] sm:$0xff]
      %v956 = vld [vmem:[%s1 + $0x208] sm:$0xff]
      %v957 = vld [vmem:[%s1 + $0x210] sm:$0xff]
      %v958 = vld [vmem:[%s1 + $0x218] sm:$0xff]
      %v959 = vld [vmem:[%s1 + $0x220] sm:$0xff]
      %v960 = vld [vmem:[%s1 + $0x228] sm:$0xff]
      %v961 = vld [vmem:[%s1 + $0x230] sm:$0xff]
      %v962 = vld [vmem:[%s1 + $0x238] sm:$0xff]
      %v1035 = vunpack.c.l.b16 %v891
      %v1036 = vunpack.c.h.b16 %v891
      %v1037 = vunpack.c.l.b16 %v892
      %v1038 = vunpack.c.h.b16 %v892
      %v1039 = vunpack.c.l.b16 %v893
      %v1040 = vunpack.c.h.b16 %v893
      %v1041 = vunpack.c.l.b16 %v894
      %v1042 = vunpack.c.h.b16 %v894
      %v1043 = vunpack.c.l.b16 %v895
      %v1044 = vunpack.c.h.b16 %v895
      %v1045 = vunpack.c.l.b16 %v896
      %v1046 = vunpack.c.h.b16 %v896
      %v1047 = vunpack.c.l.b16 %v897
      %v1048 = vunpack.c.h.b16 %v897
      %v1049 = vunpack.c.l.b16 %v898
      %v1050 = vunpack.c.h.b16 %v898
      %v1051 = vunpack.c.l.b16 %v899
      %v1052 = vunpack.c.h.b16 %v899
      %v1053 = vunpack.c.l.b16 %v900
      %v1054 = vunpack.c.h.b16 %v900
      %v1055 = vunpack.c.l.b16 %v901
      %v1056 = vunpack.c.h.b16 %v901
      %v1057 = vunpack.c.l.b16 %v902
      %v1058 = vunpack.c.h.b16 %v902
      %v1059 = vunpack.c.l.b16 %v903
      %v1060 = vunpack.c.h.b16 %v903
      %v1061 = vunpack.c.l.b16 %v904
      %v1062 = vunpack.c.h.b16 %v904
      %v1063 = vunpack.c.l.b16 %v905
      %v1064 = vunpack.c.h.b16 %v905
      %v1065 = vunpack.c.l.b16 %v906
      %v1066 = vunpack.c.h.b16 %v906
      %v1067 = vunpack.c.l.b16 %v907
      %v1068 = vunpack.c.h.b16 %v907
      %v1069 = vunpack.c.l.b16 %v908
      %v1070 = vunpack.c.h.b16 %v908
      %v1071 = vunpack.c.l.b16 %v909
      %v1072 = vunpack.c.h.b16 %v909
      %v1073 = vunpack.c.l.b16 %v910
      %v1074 = vunpack.c.h.b16 %v910
      %v1075 = vunpack.c.l.b16 %v911
      %v1076 = vunpack.c.h.b16 %v911
      %v1077 = vunpack.c.l.b16 %v912
      %v1078 = vunpack.c.h.b16 %v912
      %v1079 = vunpack.c.l.b16 %v913
      %v1080 = vunpack.c.h.b16 %v913
      %v1081 = vunpack.c.l.b16 %v914
      %v1082 = vunpack.c.h.b16 %v914
      %v1083 = vunpack.c.l.b16 %v915
      %v1084 = vunpack.c.h.b16 %v915
      %v1085 = vunpack.c.l.b16 %v916
      %v1086 = vunpack.c.h.b16 %v916
      %v1087 = vunpack.c.l.b16 %v917
      %v1088 = vunpack.c.h.b16 %v917
      %v1089 = vunpack.c.l.b16 %v918
      %v1090 = vunpack.c.h.b16 %v918
      %v1091 = vunpack.c.l.b16 %v919
      %v1092 = vunpack.c.h.b16 %v919
      %v1093 = vunpack.c.l.b16 %v920
      %v1094 = vunpack.c.h.b16 %v920
      %v1095 = vunpack.c.l.b16 %v921
      %v1096 = vunpack.c.h.b16 %v921
      %v1097 = vunpack.c.l.b16 %v922
      %v1098 = vunpack.c.h.b16 %v922
      %v1099 = vunpack.c.l.b16 %v923
      %v1100 = vunpack.c.h.b16 %v923
      %v1101 = vunpack.c.l.b16 %v924
      %v1102 = vunpack.c.h.b16 %v924
      %v1103 = vunpack.c.l.b16 %v925
      %v1104 = vunpack.c.h.b16 %v925
      %v1105 = vunpack.c.l.b16 %v926
      %v1106 = vunpack.c.h.b16 %v926
      %v1107 = vunpack.c.l.b16 %v927
      %v1108 = vunpack.c.h.b16 %v927
      %v1109 = vunpack.c.l.b16 %v928
      %v1110 = vunpack.c.h.b16 %v928
      %v1111 = vunpack.c.l.b16 %v929
      %v1112 = vunpack.c.h.b16 %v929
      %v1113 = vunpack.c.l.b16 %v930
      %v1114 = vunpack.c.h.b16 %v930
      %v1115 = vunpack.c.l.b16 %v931
      %v1116 = vunpack.c.h.b16 %v931
      %v1117 = vunpack.c.l.b16 %v932
      %v1118 = vunpack.c.h.b16 %v932
      %v1119 = vunpack.c.l.b16 %v933
      %v1120 = vunpack.c.h.b16 %v933
      %v1121 = vunpack.c.l.b16 %v934
      %v1122 = vunpack.c.h.b16 %v934
      %v1123 = vunpack.c.l.b16 %v935
      %v1124 = vunpack.c.h.b16 %v935
      %v1125 = vunpack.c.l.b16 %v936
      %v1126 = vunpack.c.h.b16 %v936
      %v1127 = vunpack.c.l.b16 %v937
      %v1128 = vunpack.c.h.b16 %v937
      %v1129 = vunpack.c.l.b16 %v938
      %v1130 = vunpack.c.h.b16 %v938
      %v1131 = vunpack.c.l.b16 %v939
      %v1132 = vunpack.c.h.b16 %v939
      %v1133 = vunpack.c.l.b16 %v940
      %v1134 = vunpack.c.h.b16 %v940
      %v1135 = vunpack.c.l.b16 %v941
      %v1136 = vunpack.c.h.b16 %v941
      %v1137 = vunpack.c.l.b16 %v942
      %v1138 = vunpack.c.h.b16 %v942
      %v1139 = vunpack.c.l.b16 %v943
      %v1140 = vunpack.c.h.b16 %v943
      %v1141 = vunpack.c.l.b16 %v944
      %v1142 = vunpack.c.h.b16 %v944
      %v1143 = vunpack.c.l.b16 %v945
      %v1144 = vunpack.c.h.b16 %v945
      %v1145 = vunpack.c.l.b16 %v946
      %v1146 = vunpack.c.h.b16 %v946
      %v1147 = vunpack.c.l.b16 %v947
      %v1148 = vunpack.c.h.b16 %v947
      %v1149 = vunpack.c.l.b16 %v948
      %v1150 = vunpack.c.h.b16 %v948
      %v1151 = vunpack.c.l.b16 %v949
      %v1152 = vunpack.c.h.b16 %v949
      %v1153 = vunpack.c.l.b16 %v950
      %v1154 = vunpack.c.h.b16 %v950
      %v1155 = vunpack.c.l.b16 %v951
      %v1156 = vunpack.c.h.b16 %v951
      %v1157 = vunpack.c.l.b16 %v952
      %v1158 = vunpack.c.h.b16 %v952
      %v1159 = vunpack.c.l.b16 %v953
      %v1160 = vunpack.c.h.b16 %v953
      %v1161 = vunpack.c.l.b16 %v954
      %v1162 = vunpack.c.h.b16 %v954
      %v1163 = vunpack.c.l.b16 %v955
      %v1164 = vunpack.c.h.b16 %v955
      %v1165 = vunpack.c.l.b16 %v956
      %v1166 = vunpack.c.h.b16 %v956
      %v1167 = vunpack.c.l.b16 %v957
      %v1168 = vunpack.c.h.b16 %v957
      %v1169 = vunpack.c.l.b16 %v958
      %v1170 = vunpack.c.h.b16 %v958
      %v1171 = vunpack.c.l.b16 %v959
      %v1172 = vunpack.c.h.b16 %v959
      %v1173 = vunpack.c.l.b16 %v960
      %v1174 = vunpack.c.h.b16 %v960
      %v1175 = vunpack.c.l.b16 %v961
      %v1176 = vunpack.c.h.b16 %v961
      %v1177 = vunpack.c.l.b16 %v962
      %v1178 = vunpack.c.h.b16 %v962
      %v1179 = vpack.c.b16 %v1037, %v1035
      %v1180 = vpack.c.b16 %v1038, %v1036
      %v1181 = vpack.c.b16 %v1041, %v1039
      %v1182 = vpack.c.b16 %v1042, %v1040
      %v1183 = vpack.c.b16 %v1045, %v1043
      %v1184 = vpack.c.b16 %v1046, %v1044
      %v1185 = vpack.c.b16 %v1049, %v1047
      %v1186 = vpack.c.b16 %v1050, %v1048
      %v1187 = vpack.c.b16 %v1053, %v1051
      %v1188 = vpack.c.b16 %v1054, %v1052
      %v1189 = vpack.c.b16 %v1057, %v1055
      %v1190 = vpack.c.b16 %v1058, %v1056
      %v1191 = vpack.c.b16 %v1061, %v1059
      %v1192 = vpack.c.b16 %v1062, %v1060
      %v1193 = vpack.c.b16 %v1065, %v1063
      %v1194 = vpack.c.b16 %v1066, %v1064
      %v1195 = vpack.c.b16 %v1069, %v1067
      %v1196 = vpack.c.b16 %v1070, %v1068
      %v1197 = vpack.c.b16 %v1073, %v1071
      %v1198 = vpack.c.b16 %v1074, %v1072
      %v1199 = vpack.c.b16 %v1077, %v1075
      %v1200 = vpack.c.b16 %v1078, %v1076
      %v1201 = vpack.c.b16 %v1081, %v1079
      %v1202 = vpack.c.b16 %v1082, %v1080
      %v1203 = vpack.c.b16 %v1085, %v1083
      %v1204 = vpack.c.b16 %v1086, %v1084
      %v1205 = vpack.c.b16 %v1089, %v1087
      %v1206 = vpack.c.b16 %v1090, %v1088
      %v1207 = vpack.c.b16 %v1093, %v1091
      %v1208 = vpack.c.b16 %v1094, %v1092
      %v1209 = vpack.c.b16 %v1097, %v1095
      %v1210 = vpack.c.b16 %v1098, %v1096
      %v1211 = vpack.c.b16 %v1101, %v1099
      %v1212 = vpack.c.b16 %v1102, %v1100
      %v1213 = vpack.c.b16 %v1105, %v1103
      %v1214 = vpack.c.b16 %v1106, %v1104
      %v1215 = vpack.c.b16 %v1109, %v1107
      %v1216 = vpack.c.b16 %v1110, %v1108
      %v1217 = vpack.c.b16 %v1113, %v1111
      %v1218 = vpack.c.b16 %v1114, %v1112
      %v1219 = vpack.c.b16 %v1117, %v1115
      %v1220 = vpack.c.b16 %v1118, %v1116
      %v1221 = vpack.c.b16 %v1121, %v1119
      %v1222 = vpack.c.b16 %v1122, %v1120
      %v1223 = vpack.c.b16 %v1125, %v1123
      %v1224 = vpack.c.b16 %v1126, %v1124
      %v1225 = vpack.c.b16 %v1129, %v1127
      %v1226 = vpack.c.b16 %v1130, %v1128
      %v1227 = vpack.c.b16 %v1133, %v1131
      %v1228 = vpack.c.b16 %v1134, %v1132
      %v1229 = vpack.c.b16 %v1137, %v1135
      %v1230 = vpack.c.b16 %v1138, %v1136
      %v1231 = vpack.c.b16 %v1141, %v1139
      %v1232 = vpack.c.b16 %v1142, %v1140
      %v1233 = vpack.c.b16 %v1145, %v1143
      %v1234 = vpack.c.b16 %v1146, %v1144
      %v1235 = vpack.c.b16 %v1149, %v1147
      %v1236 = vpack.c.b16 %v1150, %v1148
      %v1237 = vpack.c.b16 %v1153, %v1151
      %v1238 = vpack.c.b16 %v1154, %v1152
      %v1239 = vpack.c.b16 %v1157, %v1155
      %v1240 = vpack.c.b16 %v1158, %v1156
      %v1241 = vpack.c.b16 %v1161, %v1159
      %v1242 = vpack.c.b16 %v1162, %v1160
      %v1243 = vpack.c.b16 %v1165, %v1163
      %v1244 = vpack.c.b16 %v1166, %v1164
      %v1245 = vpack.c.b16 %v1169, %v1167
      %v1246 = vpack.c.b16 %v1170, %v1168
      %v1247 = vpack.c.b16 %v1173, %v1171
      %v1248 = vpack.c.b16 %v1174, %v1172
      %v1249 = vpack.c.b16 %v1177, %v1175
      %v1250 = vpack.c.b16 %v1178, %v1176
      %v1355 = vunpack.c.l.b16 %v820
      %v1356 = vunpack.c.l.b16 %v821
      %v1357 = vunpack.c.l.b16 %v822
      %v1358 = vunpack.c.l.b16 %v823
      %v1359 = vunpack.c.l.b16 %v824
      %v1360 = vunpack.c.l.b16 %v825
      %v1361 = vunpack.c.l.b16 %v826
      %v1362 = vunpack.c.l.b16 %v827
      %v1363 = vunpack.c.l.b16 %v828
      %v1364 = vunpack.c.l.b16 %v829
      %v1365 = vunpack.c.l.b16 %v830
      %v1366 = vunpack.c.l.b16 %v831
      %v1367 = vunpack.c.l.b16 %v832
      %v1368 = vunpack.c.l.b16 %v833
      %v1369 = vunpack.c.l.b16 %v834
      %v1370 = vunpack.c.l.b16 %v835
      %v1371 = vunpack.c.l.b16 %v836
      %v1372 = vunpack.c.l.b16 %v837
      %v1373 = vunpack.c.l.b16 %v838
      %v1374 = vunpack.c.l.b16 %v839
      %v1375 = vunpack.c.l.b16 %v840
      %v1376 = vunpack.c.l.b16 %v841
      %v1377 = vunpack.c.l.b16 %v842
      %v1378 = vunpack.c.l.b16 %v843
      %v1379 = vunpack.c.l.b16 %v844
      %v1380 = vunpack.c.l.b16 %v845
      %v1381 = vunpack.c.l.b16 %v846
      %v1382 = vunpack.c.l.b16 %v847
      %v1383 = vunpack.c.l.b16 %v848
      %v1384 = vunpack.c.l.b16 %v849
      %v1385 = vunpack.c.l.b16 %v850
      %v1386 = vunpack.c.l.b16 %v851
      %v1387 = vpack.c.b16 %v1356, %v1355
      %v1388 = vpack.c.b16 %v1358, %v1357
      %v1389 = vpack.c.b16 %v1360, %v1359
      %v1390 = vpack.c.b16 %v1362, %v1361
      %v1391 = vpack.c.b16 %v1364, %v1363
      %v1392 = vpack.c.b16 %v1366, %v1365
      %v1393 = vpack.c.b16 %v1368, %v1367
      %v1394 = vpack.c.b16 %v1370, %v1369
      %v1395 = vpack.c.b16 %v1372, %v1371
      %v1396 = vpack.c.b16 %v1374, %v1373
      %v1397 = vpack.c.b16 %v1376, %v1375
      %v1398 = vpack.c.b16 %v1378, %v1377
      %v1399 = vpack.c.b16 %v1380, %v1379
      %v1400 = vpack.c.b16 %v1382, %v1381
      %v1401 = vpack.c.b16 %v1384, %v1383
      %v1402 = vpack.c.b16 %v1386, %v1385
      %1419 = vmatprep.subr.bf16.mxu0 0
      %1420 = vmatpush1.bf16.msra.mxu0 %v1387
      %1421 = vmatprep.subr.bf16.mxu0 0
      %1422 = vmatpush1.bf16.msra.mxu0 %v1388
      %1423 = vmatprep.subr.bf16.mxu0 0
      %1424 = vmatpush1.bf16.msra.mxu0 %v1389
      %1425 = vmatprep.subr.bf16.mxu0 0
      %1426 = vmatpush1.bf16.msra.mxu0 %v1390
      %1427 = vmatprep.subr.bf16.mxu0 0
      %1428 = vmatpush1.bf16.msra.mxu0 %v1391
      %1429 = vmatprep.subr.bf16.mxu0 0
      %1430 = vmatpush1.bf16.msra.mxu0 %v1392
      %1431 = vmatprep.subr.bf16.mxu0 0
      %1432 = vmatpush1.bf16.msra.mxu0 %v1393
      %1433 = vmatprep.subr.bf16.mxu0 0
      %1434 = vmatpush1.bf16.msra.mxu0 %v1394
      %1435 = vmatprep.subr.bf16.mxu0 0
      %1436 = vmatpush1.bf16.msra.mxu0 %v1395
      %1437 = vmatprep.subr.bf16.mxu0 0
      %1438 = vmatpush1.bf16.msra.mxu0 %v1396
      %1439 = vmatprep.subr.bf16.mxu0 0
      %1440 = vmatpush1.bf16.msra.mxu0 %v1397
      %1441 = vmatprep.subr.bf16.mxu0 0
      %1442 = vmatpush1.bf16.msra.mxu0 %v1398
      %1443 = vmatprep.subr.bf16.mxu0 0
      %1444 = vmatpush1.bf16.msra.mxu0 %v1399
      %1445 = vmatprep.subr.bf16.mxu0 0
      %1446 = vmatpush1.bf16.msra.mxu0 %v1400
      %1447 = vmatprep.subr.bf16.mxu0 0
      %1448 = vmatpush1.bf16.msra.mxu0 %v1401
      %1449 = vmatprep.subr.bf16.mxu0 0
      %1450 = vmatpush1.bf16.msra.mxu0 %v1402
      %1451 = vmatprep.mubr.bf16.mxu0 %v1180
      %1452 = vmatmul.mubr.bf16.gmra.mrb[0].mxu0 %v1179
      %v1453 = vpop.f32.mrb[0].mxu0
      %v1454 = vadd.f32 0.0, %v1453
      %v1455 = vpop.f32.mrb[0].mxu0
      %v1456 = vpop.f32.mrb[0].mxu0
      %v1457 = vadd.f32 0.0, %v1456
      %v1458 = vpop.f32.mrb[0].mxu0
      %1459 = vmatprep.mubr.bf16.mxu0 %v1182
      %1460 = vmatmul.mubr.bf16.gmra.mrb[0].mxu0 %v1181
      %v1461 = vpop.f32.mrb[0].mxu0
      %v1462 = vadd.f32 0.0, %v1461
      %v1463 = vpop.f32.mrb[0].mxu0
      %v1464 = vpop.f32.mrb[0].mxu0
      %v1465 = vadd.f32 0.0, %v1464
      %v1466 = vpop.f32.mrb[0].mxu0
      %1467 = vmatprep.mubr.bf16.mxu0 %v1184
      %1468 = vmatmul.mubr.bf16.gmra.mrb[0].mxu0 %v1183
      %v1469 = vpop.f32.mrb[0].mxu0
      %v1470 = vadd.f32 0.0, %v1469
      %v1471 = vpop.f32.mrb[0].mxu0
      %v1472 = vpop.f32.mrb[0].mxu0
      %v1473 = vadd.f32 0.0, %v1472
      %v1474 = vpop.f32.mrb[0].mxu0
      %1475 = vmatprep.mubr.bf16.mxu0 %v1186
      %1476 = vmatmul.mubr.bf16.gmra.mrb[0].mxu0 %v1185
      %v1477 = vpop.f32.mrb[0].mxu0
      %v1478 = vadd.f32 0.0, %v1477
      %v1479 = vpop.f32.mrb[0].mxu0
      %v1480 = vpop.f32.mrb[0].mxu0
      %v1481 = vadd.f32 0.0, %v1480
      %v1482 = vpop.f32.mrb[0].mxu0
      %1483 = vmatprep.mubr.bf16.mxu0 %v1188
      %1484 = vmatmul.mubr.bf16.gmra.mrb[0].mxu0 %v1187
      %v1485 = vpop.f32.mrb[0].mxu0
      %v1486 = vadd.f32 0.0, %v1485
      %v1487 = vpop.f32.mrb[0].mxu0
      %v1488 = vpop.f32.mrb[0].mxu0
      %v1489 = vadd.f32 0.0, %v1488
      %v1490 = vpop.f32.mrb[0].mxu0
      %1491 = vmatprep.mubr.bf16.mxu0 %v1190
      %1492 = vmatmul.mubr.bf16.gmra.mrb[0].mxu0 %v1189
      %v1493 = vpop.f32.mrb[0].mxu0
      %v1494 = vadd.f32 0.0, %v1493
      %v1495 = vpop.f32.mrb[0].mxu0
      %v1496 = vpop.f32.mrb[0].mxu0
      %v1497 = vadd.f32 0.0, %v1496
      %v1498 = vpop.f32.mrb[0].mxu0
      %1499 = vmatprep.mubr.bf16.mxu0 %v1192
      %1500 = vmatmul.mubr.bf16.gmra.mrb[0].mxu0 %v1191
      %v1501 = vpop.f32.mrb[0].mxu0
      %v1502 = vadd.f32 0.0, %v1501
      %v1503 = vpop.f32.mrb[0].mxu0
      %v1504 = vpop.f32.mrb[0].mxu0
      %v1505 = vadd.f32 0.0, %v1504
      %v1506 = vpop.f32.mrb[0].mxu0
      %1507 = vmatprep.mubr.bf16.mxu0 %v1194
      %1508 = vmatmul.mubr.bf16.gmra.mrb[0].mxu0 %v1193
      %v1509 = vpop.f32.mrb[0].mxu0
      %v1510 = vadd.f32 0.0, %v1509
      %v1511 = vpop.f32.mrb[0].mxu0
      %v1512 = vpop.f32.mrb[0].mxu0
      %v1513 = vadd.f32 0.0, %v1512
      %v1514 = vpop.f32.mrb[0].mxu0
      %1515 = vmatprep.mubr.bf16.mxu0 %v1196
      %1516 = vmatmul.mubr.bf16.gmra.mrb[0].mxu0 %v1195
      %v1517 = vpop.f32.mrb[0].mxu0
      %v1518 = vadd.f32 0.0, %v1517
      %v1519 = vpop.f32.mrb[0].mxu0
      %v1520 = vpop.f32.mrb[0].mxu0
      %v1521 = vadd.f32 0.0, %v1520
      %v1522 = vpop.f32.mrb[0].mxu0
      %1523 = vmatprep.mubr.bf16.mxu0 %v1198
      %1524 = vmatmul.mubr.bf16.gmra.mrb[0].mxu0 %v1197
      %v1525 = vpop.f32.mrb[0].mxu0
      %v1526 = vadd.f32 0.0, %v1525
      %v1527 = vpop.f32.mrb[0].mxu0
      %v1528 = vpop.f32.mrb[0].mxu0
      %v1529 = vadd.f32 0.0, %v1528
      %v1530 = vpop.f32.mrb[0].mxu0
      %1531 = vmatprep.mubr.bf16.mxu0 %v1200
      %1532 = vmatmul.mubr.bf16.gmra.mrb[0].mxu0 %v1199
      %v1533 = vpop.f32.mrb[0].mxu0
      %v1534 = vadd.f32 0.0, %v1533
      %v1535 = vpop.f32.mrb[0].mxu0
      %v1536 = vpop.f32.mrb[0].mxu0
      %v1537 = vadd.f32 0.0, %v1536
      %v1538 = vpop.f32.mrb[0].mxu0
      %1539 = vmatprep.mubr.bf16.mxu0 %v1202
      %1540 = vmatmul.mubr.bf16.gmra.mrb[0].mxu0 %v1201
      %v1541 = vpop.f32.mrb[0].mxu0
      %v1542 = vadd.f32 0.0, %v1541
      %v1543 = vpop.f32.mrb[0].mxu0
      %v1544 = vpop.f32.mrb[0].mxu0
      %v1545 = vadd.f32 0.0, %v1544
      %v1546 = vpop.f32.mrb[0].mxu0
      %1547 = vmatprep.mubr.bf16.mxu0 %v1204
      %1548 = vmatmul.mubr.bf16.gmra.mrb[0].mxu0 %v1203
      %v1549 = vpop.f32.mrb[0].mxu0
      %v1550 = vadd.f32 0.0, %v1549
      %v1551 = vpop.f32.mrb[0].mxu0
      %v1552 = vpop.f32.mrb[0].mxu0
      %v1553 = vadd.f32 0.0, %v1552
      %v1554 = vpop.f32.mrb[0].mxu0
      %1555 = vmatprep.mubr.bf16.mxu0 %v1206
      %1556 = vmatmul.mubr.bf16.gmra.mrb[0].mxu0 %v1205
      %v1557 = vpop.f32.mrb[0].mxu0
      %v1558 = vadd.f32 0.0, %v1557
      %v1559 = vpop.f32.mrb[0].mxu0
      %v1560 = vpop.f32.mrb[0].mxu0
      %v1561 = vadd.f32 0.0, %v1560
      %v1562 = vpop.f32.mrb[0].mxu0
      %1563 = vmatprep.mubr.bf16.mxu0 %v1208
      %1564 = vmatmul.mubr.bf16.gmra.mrb[0].mxu0 %v1207
      %v1565 = vpop.f32.mrb[0].mxu0
      %v1566 = vadd.f32 0.0, %v1565
      %v1567 = vpop.f32.mrb[0].mxu0
      %v1568 = vpop.f32.mrb[0].mxu0
      %v1569 = vadd.f32 0.0, %v1568
      %v1570 = vpop.f32.mrb[0].mxu0
      %1571 = vmatprep.mubr.bf16.mxu0 %v1210
      %1572 = vmatmul.mubr.bf16.gmra.mrb[0].mxu0 %v1209
      %v1573 = vpop.f32.mrb[0].mxu0
      %v1574 = vadd.f32 0.0, %v1573
      %v1575 = vpop.f32.mrb[0].mxu0
      %v1576 = vpop.f32.mrb[0].mxu0
      %v1577 = vadd.f32 0.0, %v1576
      %v1578 = vpop.f32.mrb[0].mxu0
      %1579 = vmatprep.mubr.bf16.mxu0 %v1212
      %1580 = vmatmul.mubr.bf16.gmra.mrb[0].mxu0 %v1211
      %v1581 = vpop.f32.mrb[0].mxu0
      %v1582 = vadd.f32 0.0, %v1581
      %v1583 = vpop.f32.mrb[0].mxu0
      %v1584 = vpop.f32.mrb[0].mxu0
      %v1585 = vadd.f32 0.0, %v1584
      %v1586 = vpop.f32.mrb[0].mxu0
      %1587 = vmatprep.mubr.bf16.mxu0 %v1214
      %1588 = vmatmul.mubr.bf16.gmra.mrb[0].mxu0 %v1213
      %v1589 = vpop.f32.mrb[0].mxu0
      %v1590 = vadd.f32 0.0, %v1589
      %v1591 = vpop.f32.mrb[0].mxu0
      %v1592 = vpop.f32.mrb[0].mxu0
      %v1593 = vadd.f32 0.0, %v1592
      %v1594 = vpop.f32.mrb[0].mxu0
      %1595 = vmatprep.mubr.bf16.mxu0 %v1216
      %1596 = vmatmul.mubr.bf16.gmra.mrb[0].mxu0 %v1215
      %v1597 = vpop.f32.mrb[0].mxu0
      %v1598 = vadd.f32 0.0, %v1597
      %v1599 = vpop.f32.mrb[0].mxu0
      %v1600 = vpop.f32.mrb[0].mxu0
      %v1601 = vadd.f32 0.0, %v1600
      %v1602 = vpop.f32.mrb[0].mxu0
      %1603 = vmatprep.mubr.bf16.mxu0 %v1218
      %1604 = vmatmul.mubr.bf16.gmra.mrb[0].mxu0 %v1217
      %v1605 = vpop.f32.mrb[0].mxu0
      %v1606 = vadd.f32 0.0, %v1605
      %v1607 = vpop.f32.mrb[0].mxu0
      %v1608 = vpop.f32.mrb[0].mxu0
      %v1609 = vadd.f32 0.0, %v1608
      %v1610 = vpop.f32.mrb[0].mxu0
      %1611 = vmatprep.mubr.bf16.mxu0 %v1220
      %1612 = vmatmul.mubr.bf16.gmra.mrb[0].mxu0 %v1219
      %v1613 = vpop.f32.mrb[0].mxu0
      %v1614 = vadd.f32 0.0, %v1613
      %v1615 = vpop.f32.mrb[0].mxu0
      %v1616 = vpop.f32.mrb[0].mxu0
      %v1617 = vadd.f32 0.0, %v1616
      %v1618 = vpop.f32.mrb[0].mxu0
      %1619 = vmatprep.mubr.bf16.mxu0 %v1222
      %1620 = vmatmul.mubr.bf16.gmra.mrb[0].mxu0 %v1221
      %v1621 = vpop.f32.mrb[0].mxu0
      %v1622 = vadd.f32 0.0, %v1621
      %v1623 = vpop.f32.mrb[0].mxu0
      %v1624 = vpop.f32.mrb[0].mxu0
      %v1625 = vadd.f32 0.0, %v1624
      %v1626 = vpop.f32.mrb[0].mxu0
      %1627 = vmatprep.mubr.bf16.mxu0 %v1224
      %1628 = vmatmul.mubr.bf16.gmra.mrb[0].mxu0 %v1223
      %v1629 = vpop.f32.mrb[0].mxu0
      %v1630 = vadd.f32 0.0, %v1629
      %v1631 = vpop.f32.mrb[0].mxu0
      %v1632 = vpop.f32.mrb[0].mxu0
      %v1633 = vadd.f32 0.0, %v1632
      %v1634 = vpop.f32.mrb[0].mxu0
      %1635 = vmatprep.mubr.bf16.mxu0 %v1226
      %1636 = vmatmul.mubr.bf16.gmra.mrb[0].mxu0 %v1225
      %v1637 = vpop.f32.mrb[0].mxu0
      %v1638 = vadd.f32 0.0, %v1637
      %v1639 = vpop.f32.mrb[0].mxu0
      %v1640 = vpop.f32.mrb[0].mxu0
      %v1641 = vadd.f32 0.0, %v1640
      %v1642 = vpop.f32.mrb[0].mxu0
      %1643 = vmatprep.mubr.bf16.mxu0 %v1228
      %1644 = vmatmul.mubr.bf16.gmra.mrb[0].mxu0 %v1227
      %v1645 = vpop.f32.mrb[0].mxu0
      %v1646 = vadd.f32 0.0, %v1645
      %v1647 = vpop.f32.mrb[0].mxu0
      %v1648 = vpop.f32.mrb[0].mxu0
      %v1649 = vadd.f32 0.0, %v1648
      %v1650 = vpop.f32.mrb[0].mxu0
      %1651 = vmatprep.mubr.bf16.mxu0 %v1230
      %1652 = vmatmul.mubr.bf16.gmra.mrb[0].mxu0 %v1229
      %v1653 = vpop.f32.mrb[0].mxu0
      %v1654 = vadd.f32 0.0, %v1653
      %v1655 = vpop.f32.mrb[0].mxu0
      %v1656 = vpop.f32.mrb[0].mxu0
      %v1657 = vadd.f32 0.0, %v1656
      %v1658 = vpop.f32.mrb[0].mxu0
      %1659 = vmatprep.mubr.bf16.mxu0 %v1232
      %1660 = vmatmul.mubr.bf16.gmra.mrb[0].mxu0 %v1231
      %v1661 = vpop.f32.mrb[0].mxu0
      %v1662 = vadd.f32 0.0, %v1661
      %v1663 = vpop.f32.mrb[0].mxu0
      %v1664 = vpop.f32.mrb[0].mxu0
      %v1665 = vadd.f32 0.0, %v1664
      %v1666 = vpop.f32.mrb[0].mxu0
      %1667 = vmatprep.mubr.bf16.mxu0 %v1234
      %1668 = vmatmul.mubr.bf16.gmra.mrb[0].mxu0 %v1233
      %v1669 = vpop.f32.mrb[0].mxu0
      %v1670 = vadd.f32 0.0, %v1669
      %v1671 = vpop.f32.mrb[0].mxu0
      %v1672 = vpop.f32.mrb[0].mxu0
      %v1673 = vadd.f32 0.0, %v1672
      %v1674 = vpop.f32.mrb[0].mxu0
      %1675 = vmatprep.mubr.bf16.mxu0 %v1236
      %1676 = vmatmul.mubr.bf16.gmra.mrb[0].mxu0 %v1235
      %v1677 = vpop.f32.mrb[0].mxu0
      %v1678 = vadd.f32 0.0, %v1677
      %v1679 = vpop.f32.mrb[0].mxu0
      %v1680 = vpop.f32.mrb[0].mxu0
      %v1681 = vadd.f32 0.0, %v1680
      %v1682 = vpop.f32.mrb[0].mxu0
      %1683 = vmatprep.mubr.bf16.mxu0 %v1238
      %1684 = vmatmul.mubr.bf16.gmra.mrb[0].mxu0 %v1237
      %v1685 = vpop.f32.mrb[0].mxu0
      %v1686 = vadd.f32 0.0, %v1685
      %v1687 = vpop.f32.mrb[0].mxu0
      %v1688 = vpop.f32.mrb[0].mxu0
      %v1689 = vadd.f32 0.0, %v1688
      %v1690 = vpop.f32.mrb[0].mxu0
      %1691 = vmatprep.mubr.bf16.mxu0 %v1240
      %1692 = vmatmul.mubr.bf16.gmra.mrb[0].mxu0 %v1239
      %v1693 = vpop.f32.mrb[0].mxu0
      %v1694 = vadd.f32 0.0, %v1693
      %v1695 = vpop.f32.mrb[0].mxu0
      %v1696 = vpop.f32.mrb[0].mxu0
      %v1697 = vadd.f32 0.0, %v1696
      %v1698 = vpop.f32.mrb[0].mxu0
      %1699 = vmatprep.mubr.bf16.mxu0 %v1242
      %1700 = vmatmul.mubr.bf16.gmra.mrb[0].mxu0 %v1241
      %v1701 = vpop.f32.mrb[0].mxu0
      %v1702 = vadd.f32 0.0, %v1701
      %v1703 = vpop.f32.mrb[0].mxu0
      %v1704 = vpop.f32.mrb[0].mxu0
      %v1705 = vadd.f32 0.0, %v1704
      %v1706 = vpop.f32.mrb[0].mxu0
      %1707 = vmatprep.mubr.bf16.mxu0 %v1244
      %1708 = vmatmul.mubr.bf16.gmra.mrb[0].mxu0 %v1243
      %v1709 = vpop.f32.mrb[0].mxu0
      %v1710 = vadd.f32 0.0, %v1709
      %v1711 = vpop.f32.mrb[0].mxu0
      %v1712 = vpop.f32.mrb[0].mxu0
      %v1713 = vadd.f32 0.0, %v1712
      %v1714 = vpop.f32.mrb[0].mxu0
      %1715 = vmatprep.mubr.bf16.mxu0 %v1246
      %1716 = vmatmul.mubr.bf16.gmra.mrb[0].mxu0 %v1245
      %v1717 = vpop.f32.mrb[0].mxu0
      %v1718 = vadd.f32 0.0, %v1717
      %v1719 = vpop.f32.mrb[0].mxu0
      %v1720 = vpop.f32.mrb[0].mxu0
      %v1721 = vadd.f32 0.0, %v1720
      %v1722 = vpop.f32.mrb[0].mxu0
      %1723 = vmatprep.mubr.bf16.mxu0 %v1248
      %1724 = vmatmul.mubr.bf16.gmra.mrb[0].mxu0 %v1247
      %v1725 = vpop.f32.mrb[0].mxu0
      %v1726 = vadd.f32 0.0, %v1725
      %v1727 = vpop.f32.mrb[0].mxu0
      %v1728 = vpop.f32.mrb[0].mxu0
      %v1729 = vadd.f32 0.0, %v1728
      %v1730 = vpop.f32.mrb[0].mxu0
      %1731 = vmatprep.mubr.bf16.mxu0 %v1250
      %1732 = vmatmul.mubr.bf16.gmra.mrb[0].mxu0 %v1249
      %v1733 = vpop.f32.mrb[0].mxu0
      %v1734 = vadd.f32 0.0, %v1733
      %v1735 = vpop.f32.mrb[0].mxu0
      %v1736 = vpop.f32.mrb[0].mxu0
      %v1737 = vadd.f32 0.0, %v1736
      %v1738 = vpop.f32.mrb[0].mxu0
      %1739 = vdwg.mxu0
      %v1740 = vlaneseq
      %v1741 = vshrl.u32 %v1740, 7
      %v1742 = vsub.s32 0, %v1741
      %v1743 = vrot.slane %v884, %v1742
      %v1744 = vmul.f32 %v1454, %v1743
      %v1745 = vmul.f32 %v1457, %v1743
      %v1746 = vmul.f32 %v1462, %v1743
      %v1747 = vmul.f32 %v1465, %v1743
      %v1748 = vmul.f32 %v1470, %v1743
      %v1749 = vmul.f32 %v1473, %v1743
      %v1750 = vmul.f32 %v1478, %v1743
      %v1751 = vmul.f32 %v1481, %v1743
      %v1752 = vlaneseq
      %v1753 = vshrl.u32 %v1752, 7
      %v1754 = vsub.s32 0, %v1753
      %v1755 = vrot.slane %v890, %v1754
      %v1756 = vadd.f32 %v1755, %v1744
      %v1757 = vadd.f32 %v1755, %v1745
      %v1758 = vadd.f32 %v1755, %v1746
      %v1759 = vadd.f32 %v1755, %v1747
      %v1760 = vadd.f32 %v1755, %v1748
      %v1761 = vadd.f32 %v1755, %v1749
      %v1762 = vadd.f32 %v1755, %v1750
      %v1763 = vadd.f32 %v1755, %v1751
      %v1764 = vlaneseq
      %v1765 = vshrl.u32 %v1764, 7
      %v1766 = vsub.s32 1, %v1765
      %v1767 = vrot.slane %v884, %v1766
      %v1768 = vmul.f32 %v1486, %v1767
      %v1769 = vmul.f32 %v1489, %v1767
      %v1770 = vmul.f32 %v1494, %v1767
      %v1771 = vmul.f32 %v1497, %v1767
      %v1772 = vmul.f32 %v1502, %v1767
      %v1773 = vmul.f32 %v1505, %v1767
      %v1774 = vmul.f32 %v1510, %v1767
      %v1775 = vmul.f32 %v1513, %v1767
      %v1776 = vadd.f32 %v1756, %v1768
      %v1777 = vadd.f32 %v1757, %v1769
      %v1778 = vadd.f32 %v1758, %v1770
      %v1779 = vadd.f32 %v1759, %v1771
      %v1780 = vadd.f32 %v1760, %v1772
      %v1781 = vadd.f32 %v1761, %v1773
      %v1782 = vadd.f32 %v1762, %v1774
      %v1783 = vadd.f32 %v1763, %v1775
      %v1784 = vlaneseq
      %v1785 = vshrl.u32 %v1784, 7
      %v1786 = vsub.s32 2, %v1785
      %v1787 = vrot.slane %v884, %v1786
      %v1788 = vmul.f32 %v1518, %v1787
      %v1789 = vmul.f32 %v1521, %v1787
      %v1790 = vmul.f32 %v1526, %v1787
      %v1791 = vmul.f32 %v1529, %v1787
      %v1792 = vmul.f32 %v1534, %v1787
      %v1793 = vmul.f32 %v1537, %v1787
      %v1794 = vmul.f32 %v1542, %v1787
      %v1795 = vmul.f32 %v1545, %v1787
      %v1796 = vadd.f32 %v1776, %v1788
      %v1797 = vadd.f32 %v1777, %v1789
      %v1798 = vadd.f32 %v1778, %v1790
      %v1799 = vadd.f32 %v1779, %v1791
      %v1800 = vadd.f32 %v1780, %v1792
      %v1801 = vadd.f32 %v1781, %v1793
      %v1802 = vadd.f32 %v1782, %v1794
      %v1803 = vadd.f32 %v1783, %v1795
      %v1804 = vlaneseq
      %v1805 = vshrl.u32 %v1804, 7
      %v1806 = vsub.s32 3, %v1805
      %v1807 = vrot.slane %v884, %v1806
      %v1808 = vmul.f32 %v1550, %v1807
      %v1809 = vmul.f32 %v1553, %v1807
      %v1810 = vmul.f32 %v1558, %v1807
      %v1811 = vmul.f32 %v1561, %v1807
      %v1812 = vmul.f32 %v1566, %v1807
      %v1813 = vmul.f32 %v1569, %v1807
      %v1814 = vmul.f32 %v1574, %v1807
      %v1815 = vmul.f32 %v1577, %v1807
      %v1816 = vadd.f32 %v1796, %v1808
      %v1817 = vadd.f32 %v1797, %v1809
      %v1818 = vadd.f32 %v1798, %v1810
      %v1819 = vadd.f32 %v1799, %v1811
      %v1820 = vadd.f32 %v1800, %v1812
      %v1821 = vadd.f32 %v1801, %v1813
      %v1822 = vadd.f32 %v1802, %v1814
      %v1823 = vadd.f32 %v1803, %v1815
      %v1824 = vlaneseq
      %v1825 = vshrl.u32 %v1824, 7
      %v1826 = vsub.s32 4, %v1825
      %v1827 = vrot.slane %v884, %v1826
      %v1828 = vmul.f32 %v1582, %v1827
      %v1829 = vmul.f32 %v1585, %v1827
      %v1830 = vmul.f32 %v1590, %v1827
      %v1831 = vmul.f32 %v1593, %v1827
      %v1832 = vmul.f32 %v1598, %v1827
      %v1833 = vmul.f32 %v1601, %v1827
      %v1834 = vmul.f32 %v1606, %v1827
      %v1835 = vmul.f32 %v1609, %v1827
      %v1836 = vadd.f32 %v1816, %v1828
      %v1837 = vadd.f32 %v1817, %v1829
      %v1838 = vadd.f32 %v1818, %v1830
      %v1839 = vadd.f32 %v1819, %v1831
      %v1840 = vadd.f32 %v1820, %v1832
      %v1841 = vadd.f32 %v1821, %v1833
      %v1842 = vadd.f32 %v1822, %v1834
      %v1843 = vadd.f32 %v1823, %v1835
      %v1844 = vlaneseq
      %v1845 = vshrl.u32 %v1844, 7
      %v1846 = vsub.s32 5, %v1845
      %v1847 = vrot.slane %v884, %v1846
      %v1848 = vmul.f32 %v1614, %v1847
      %v1849 = vmul.f32 %v1617, %v1847
      %v1850 = vmul.f32 %v1622, %v1847
      %v1851 = vmul.f32 %v1625, %v1847
      %v1852 = vmul.f32 %v1630, %v1847
      %v1853 = vmul.f32 %v1633, %v1847
      %v1854 = vmul.f32 %v1638, %v1847
      %v1855 = vmul.f32 %v1641, %v1847
      %v1856 = vadd.f32 %v1836, %v1848
      %v1857 = vadd.f32 %v1837, %v1849
      %v1858 = vadd.f32 %v1838, %v1850
      %v1859 = vadd.f32 %v1839, %v1851
      %v1860 = vadd.f32 %v1840, %v1852
      %v1861 = vadd.f32 %v1841, %v1853
      %v1862 = vadd.f32 %v1842, %v1854
      %v1863 = vadd.f32 %v1843, %v1855
      %v1864 = vlaneseq
      %v1865 = vshrl.u32 %v1864, 7
      %v1866 = vsub.s32 6, %v1865
      %v1867 = vrot.slane %v884, %v1866
      %v1868 = vmul.f32 %v1646, %v1867
      %v1869 = vmul.f32 %v1649, %v1867
      %v1870 = vmul.f32 %v1654, %v1867
      %v1871 = vmul.f32 %v1657, %v1867
      %v1872 = vmul.f32 %v1662, %v1867
      %v1873 = vmul.f32 %v1665, %v1867
      %v1874 = vmul.f32 %v1670, %v1867
      %v1875 = vmul.f32 %v1673, %v1867
      %v1876 = vadd.f32 %v1856, %v1868
      %v1877 = vadd.f32 %v1857, %v1869
      %v1878 = vadd.f32 %v1858, %v1870
      %v1879 = vadd.f32 %v1859, %v1871
      %v1880 = vadd.f32 %v1860, %v1872
      %v1881 = vadd.f32 %v1861, %v1873
      %v1882 = vadd.f32 %v1862, %v1874
      %v1883 = vadd.f32 %v1863, %v1875
      %v1884 = vlaneseq
      %v1885 = vshrl.u32 %v1884, 7
      %v1886 = vsub.s32 7, %v1885
      %v1887 = vrot.slane %v884, %v1886
      %v1888 = vmul.f32 %v1678, %v1887
      %v1889 = vmul.f32 %v1681, %v1887
      %v1890 = vmul.f32 %v1686, %v1887
      %v1891 = vmul.f32 %v1689, %v1887
      %v1892 = vmul.f32 %v1694, %v1887
      %v1893 = vmul.f32 %v1697, %v1887
      %v1894 = vmul.f32 %v1702, %v1887
      %v1895 = vmul.f32 %v1705, %v1887
      %v1896 = vadd.f32 %v1876, %v1888
      %v1897 = vadd.f32 %v1877, %v1889
      %v1898 = vadd.f32 %v1878, %v1890
      %v1899 = vadd.f32 %v1879, %v1891
      %v1900 = vadd.f32 %v1880, %v1892
      %v1901 = vadd.f32 %v1881, %v1893
      %v1902 = vadd.f32 %v1882, %v1894
      %v1903 = vadd.f32 %v1883, %v1895
      %v1904 = vlaneseq
      %v1905 = vshrl.u32 %v1904, 7
      %v1906 = vsub.s32 0, %v1905
      %v1907 = vrot.slane %v885, %v1906
      %v1908 = vmul.f32 %v1710, %v1907
      %v1909 = vmul.f32 %v1713, %v1907
      %v1910 = vmul.f32 %v1718, %v1907
      %v1911 = vmul.f32 %v1721, %v1907
      %v1912 = vmul.f32 %v1726, %v1907
      %v1913 = vmul.f32 %v1729, %v1907
      %v1914 = vmul.f32 %v1734, %v1907
      %v1915 = vmul.f32 %v1737, %v1907
      %v1916 = vadd.f32 %v1896, %v1908
      %v1917 = vadd.f32 %v1897, %v1909
      %v1918 = vadd.f32 %v1898, %v1910
      %v1919 = vadd.f32 %v1899, %v1911
      %v1920 = vadd.f32 %v1900, %v1912
      %v1921 = vadd.f32 %v1901, %v1913
      %v1922 = vadd.f32 %v1902, %v1914
      %v1923 = vadd.f32 %v1903, %v1915
      %v1924 = vld [vmem:[%s2] sm:$0xf]
      %v1925 = vld [vmem:[%s2 + $0x4] sm:$0xf]
      %v1926 = vld [vmem:[%s2 + $0x8] sm:$0xf]
      %v1927 = vld [vmem:[%s2 + $0xc] sm:$0xf]
      %v1928 = vld [vmem:[%s2 + $0x10] sm:$0xf]
      %v1929 = vld [vmem:[%s2 + $0x14] sm:$0xf]
      %v1930 = vld [vmem:[%s2 + $0x18] sm:$0xf]
      %v1931 = vld [vmem:[%s2 + $0x1c] sm:$0xf]
      %v1932 = vld [vmem:[%s2 + $0x20] sm:$0xf]
      %v1933 = vld [vmem:[%s2 + $0x24] sm:$0xf]
      %v1934 = vld [vmem:[%s2 + $0x28] sm:$0xf]
      %v1935 = vld [vmem:[%s2 + $0x2c] sm:$0xf]
      %v1936 = vld [vmem:[%s2 + $0x30] sm:$0xf]
      %v1937 = vld [vmem:[%s2 + $0x34] sm:$0xf]
      %v1938 = vld [vmem:[%s2 + $0x38] sm:$0xf]
      %v1939 = vld [vmem:[%s2 + $0x3c] sm:$0xf]
      %v1940 = vld [vmem:[%s2 + $0x40] sm:$0xf]
      %v1941 = vld [vmem:[%s2 + $0x44] sm:$0xf]
      %v1942 = vpack.c.bf16 %v1917, %v1916
      %v1943 = vpack.c.bf16 %v1919, %v1918
      %v1944 = vpack.c.bf16 %v1921, %v1920
      %v1945 = vpack.c.bf16 %v1923, %v1922
      %v1964 = vunpack.c.l.b16 %v1924
      %v1965 = vunpack.c.l.b16 %v1925
      %v1966 = vunpack.c.l.b16 %v1926
      %v1967 = vunpack.c.l.b16 %v1927
      %v1968 = vunpack.c.l.b16 %v1928
      %v1969 = vunpack.c.l.b16 %v1929
      %v1970 = vunpack.c.l.b16 %v1930
      %v1971 = vunpack.c.l.b16 %v1931
      %v1972 = vunpack.c.l.b16 %v1932
      %v1973 = vunpack.c.l.b16 %v1933
      %v1974 = vunpack.c.l.b16 %v1934
      %v1975 = vunpack.c.l.b16 %v1935
      %v1976 = vunpack.c.l.b16 %v1936
      %v1977 = vunpack.c.l.b16 %v1937
      %v1978 = vunpack.c.l.b16 %v1938
      %v1979 = vunpack.c.l.b16 %v1939
      %v1980 = vunpack.c.l.b16 %v1940
      %v1981 = vunpack.c.l.b16 %v1941
      %v1982 = vpack.c.b16 %v1965, %v1964
      %v1983 = vpack.c.b16 %v1967, %v1966
      %v1984 = vpack.c.b16 %v1969, %v1968
      %v1985 = vpack.c.b16 %v1971, %v1970
      %v1986 = vpack.c.b16 %v1973, %v1972
      %v1987 = vpack.c.b16 %v1975, %v1974
      %v1988 = vpack.c.b16 %v1977, %v1976
      %v1989 = vpack.c.b16 %v1979, %v1978
      %v1990 = vpack.c.b16 %v1981, %v1980
      %vm1991 = vcmask 523264
      %v1993 = vsel %vm1991, %v1982, 0
      %v1996 = vsel %vm1991, %v1983, 0
      %v1999 = vsel %vm1991, %v1984, 0
      %v2002 = vsel %vm1991, %v1985, 0
      %v2005 = vsel %vm1991, %v1986, 0
      %v2008 = vsel %vm1991, %v1987, 0
      %v2011 = vsel %vm1991, %v1988, 0
      %v2014 = vsel %vm1991, %v1989, 0
      %v2017 = vsel %vm1991, %v1990, 0
      %2019 = vmatprep.subr.bf16.mxu0 0
      %2020 = vmatpush1.bf16.msra.mxu0 %v1942
      %2021 = vmatprep.subr.bf16.mxu0 0
      %2022 = vmatpush1.bf16.msra.mxu0 %v1943
      %2023 = vmatprep.subr.bf16.mxu0 0
      %2024 = vmatpush1.bf16.msra.mxu0 %v1944
      %2025 = vmatprep.subr.bf16.mxu0 0
      %2026 = vmatpush1.bf16.msra.mxu0 %v1945
      %2027 = vmatprep.subr.bf16.mxu0 0
      %2028 = vmatpush1.bf16.msra.mxu0 0
      %2029 = vmatprep.subr.bf16.mxu0 0
      %2030 = vmatpush1.bf16.msra.mxu0 0
      %2031 = vmatprep.subr.bf16.mxu0 0
      %2032 = vmatpush1.bf16.msra.mxu0 0
      %2033 = vmatprep.subr.bf16.mxu0 0
      %2034 = vmatpush1.bf16.msra.mxu0 0
      %2035 = vmatprep.subr.bf16.mxu0 0
      %2036 = vmatpush1.bf16.msra.mxu0 0
      %2037 = vmatprep.subr.bf16.mxu0 0
      %2038 = vmatpush1.bf16.msra.mxu0 0
      %2039 = vmatprep.subr.bf16.mxu0 0
      %2040 = vmatpush1.bf16.msra.mxu0 0
      %2041 = vmatprep.subr.bf16.mxu0 0
      %2042 = vmatpush1.bf16.msra.mxu0 0
      %2043 = vmatprep.subr.bf16.mxu0 0
      %2044 = vmatpush1.bf16.msra.mxu0 0
      %2045 = vmatprep.subr.bf16.mxu0 0
      %2046 = vmatpush1.bf16.msra.mxu0 0
      %2047 = vmatprep.subr.bf16.mxu0 0
      %2048 = vmatpush1.bf16.msra.mxu0 0
      %2049 = vmatprep.subr.bf16.mxu0 0
      %2050 = vmatpush1.bf16.msra.mxu0 0
      %2051 = vmatprep.mubr.bf16.mxu0 0
      %2052 = vmatmul.mubr.bf16.gmra.mrb[0].mxu0 %v1993
      %v2053 = vpop.f32.mrb[0].mxu0
      %v2054 = vadd.f32 0.0, %v2053
      %v2055 = vpop.f32.mrb[0].mxu0
      %v2056 = vpop.f32.mrb[0].mxu0
      %v2057 = vadd.f32 0.0, %v2056
      %v2058 = vpop.f32.mrb[0].mxu0
      %2059 = vmatprep.mubr.bf16.mxu0 0
      %2060 = vmatmul.mubr.bf16.gmra.mrb[0].mxu0 %v1996
      %v2061 = vpop.f32.mrb[0].mxu0
      %v2062 = vadd.f32 0.0, %v2061
      %v2063 = vpop.f32.mrb[0].mxu0
      %v2064 = vpop.f32.mrb[0].mxu0
      %v2065 = vadd.f32 0.0, %v2064
      %v2066 = vpop.f32.mrb[0].mxu0
      %2067 = vmatprep.mubr.bf16.mxu0 0
      %2068 = vmatmul.mubr.bf16.gmra.mrb[0].mxu0 %v1999
      %v2069 = vpop.f32.mrb[0].mxu0
      %v2070 = vadd.f32 0.0, %v2069
      %v2071 = vpop.f32.mrb[0].mxu0
      %v2072 = vpop.f32.mrb[0].mxu0
      %v2073 = vadd.f32 0.0, %v2072
      %v2074 = vpop.f32.mrb[0].mxu0
      %2075 = vmatprep.mubr.bf16.mxu0 0
      %2076 = vmatmul.mubr.bf16.gmra.mrb[0].mxu0 %v2002
      %v2077 = vpop.f32.mrb[0].mxu0
      %v2078 = vadd.f32 0.0, %v2077
      %v2079 = vpop.f32.mrb[0].mxu0
      %v2080 = vpop.f32.mrb[0].mxu0
      %v2081 = vadd.f32 0.0, %v2080
      %v2082 = vpop.f32.mrb[0].mxu0
      %2083 = vmatprep.mubr.bf16.mxu0 0
      %2084 = vmatmul.mubr.bf16.gmra.mrb[0].mxu0 %v2005
      %v2085 = vpop.f32.mrb[0].mxu0
      %v2086 = vadd.f32 0.0, %v2085
      %v2087 = vpop.f32.mrb[0].mxu0
      %v2088 = vpop.f32.mrb[0].mxu0
      %v2089 = vadd.f32 0.0, %v2088
      %v2090 = vpop.f32.mrb[0].mxu0
      %2091 = vmatprep.mubr.bf16.mxu0 0
      %2092 = vmatmul.mubr.bf16.gmra.mrb[0].mxu0 %v2008
      %v2093 = vpop.f32.mrb[0].mxu0
      %v2094 = vadd.f32 0.0, %v2093
      %v2095 = vpop.f32.mrb[0].mxu0
      %v2096 = vpop.f32.mrb[0].mxu0
      %v2097 = vadd.f32 0.0, %v2096
      %v2098 = vpop.f32.mrb[0].mxu0
      %2099 = vmatprep.mubr.bf16.mxu0 0
      %2100 = vmatmul.mubr.bf16.gmra.mrb[0].mxu0 %v2011
      %v2101 = vpop.f32.mrb[0].mxu0
      %v2102 = vadd.f32 0.0, %v2101
      %v2103 = vpop.f32.mrb[0].mxu0
      %v2104 = vpop.f32.mrb[0].mxu0
      %v2105 = vadd.f32 0.0, %v2104
      %v2106 = vpop.f32.mrb[0].mxu0
      %2107 = vmatprep.mubr.bf16.mxu0 0
      %2108 = vmatmul.mubr.bf16.gmra.mrb[0].mxu0 %v2014
      %v2109 = vpop.f32.mrb[0].mxu0
      %v2110 = vadd.f32 0.0, %v2109
      %v2111 = vpop.f32.mrb[0].mxu0
      %v2112 = vpop.f32.mrb[0].mxu0
      %v2113 = vadd.f32 0.0, %v2112
      %v2114 = vpop.f32.mrb[0].mxu0
      %2115 = vmatprep.mubr.bf16.mxu0 0
      %2116 = vmatmul.mubr.bf16.gmra.mrb[0].mxu0 %v2017
      %v2117 = vpop.f32.mrb[0].mxu0
      %v2118 = vadd.f32 0.0, %v2117
      %v2119 = vpop.f32.mrb[0].mxu0
      %v2120 = vpop.f32.mrb[0].mxu0
      %v2121 = vadd.f32 0.0, %v2120
      %v2122 = vpop.f32.mrb[0].mxu0
      %2123 = vdwg.mxu0
      %v2124 = vlaneseq
      %v2125 = vshrl.u32 %v2124, 7
      %v2126 = vsub.s32 0, %v2125
      %v2127 = vrot.slane %v886, %v2126
      %v2128 = vmul.f32 %v2054, %v2127
      %v2129 = vmul.f32 %v2057, %v2127
      %v2130 = vlaneseq
      %v2131 = vshrl.u32 %v2130, 7
      %v2132 = vsub.s32 1, %v2131
      %v2133 = vrot.slane %v890, %v2132
      %v2134 = vadd.f32 %v2133, %v2128
      %v2135 = vadd.f32 %v2133, %v2129
      %v2136 = vlaneseq
      %v2137 = vshrl.u32 %v2136, 7
      %v2138 = vsub.s32 1, %v2137
      %v2139 = vrot.slane %v886, %v2138
      %v2140 = vmul.f32 %v2062, %v2139
      %v2141 = vmul.f32 %v2065, %v2139
      %v2142 = vadd.f32 %v2134, %v2140
      %v2143 = vadd.f32 %v2135, %v2141
      %v2144 = vlaneseq
      %v2145 = vshrl.u32 %v2144, 7
      %v2146 = vsub.s32 2, %v2145
      %v2147 = vrot.slane %v886, %v2146
      %v2148 = vmul.f32 %v2070, %v2147
      %v2149 = vmul.f32 %v2073, %v2147
      %v2150 = vadd.f32 %v2142, %v2148
      %v2151 = vadd.f32 %v2143, %v2149
      %v2152 = vlaneseq
      %v2153 = vshrl.u32 %v2152, 7
      %v2154 = vsub.s32 3, %v2153
      %v2155 = vrot.slane %v886, %v2154
      %v2156 = vmul.f32 %v2078, %v2155
      %v2157 = vmul.f32 %v2081, %v2155
      %v2158 = vadd.f32 %v2150, %v2156
      %v2159 = vadd.f32 %v2151, %v2157
      %v2160 = vlaneseq
      %v2161 = vshrl.u32 %v2160, 7
      %v2162 = vsub.s32 4, %v2161
      %v2163 = vrot.slane %v886, %v2162
      %v2164 = vmul.f32 %v2086, %v2163
      %v2165 = vmul.f32 %v2089, %v2163
      %v2166 = vadd.f32 %v2158, %v2164
      %v2167 = vadd.f32 %v2159, %v2165
      %v2168 = vlaneseq
      %v2169 = vshrl.u32 %v2168, 7
      %v2170 = vsub.s32 5, %v2169
      %v2171 = vrot.slane %v886, %v2170
      %v2172 = vmul.f32 %v2094, %v2171
      %v2173 = vmul.f32 %v2097, %v2171
      %v2174 = vadd.f32 %v2166, %v2172
      %v2175 = vadd.f32 %v2167, %v2173
      %v2176 = vlaneseq
      %v2177 = vshrl.u32 %v2176, 7
      %v2178 = vsub.s32 6, %v2177
      %v2179 = vrot.slane %v886, %v2178
      %v2180 = vmul.f32 %v2102, %v2179
      %v2181 = vmul.f32 %v2105, %v2179
      %v2182 = vadd.f32 %v2174, %v2180
      %v2183 = vadd.f32 %v2175, %v2181
      %v2184 = vlaneseq
      %v2185 = vshrl.u32 %v2184, 7
      %v2186 = vsub.s32 7, %v2185
      %v2187 = vrot.slane %v886, %v2186
      %v2188 = vmul.f32 %v2110, %v2187
      %v2189 = vmul.f32 %v2113, %v2187
      %v2190 = vadd.f32 %v2182, %v2188
      %v2191 = vadd.f32 %v2183, %v2189
      %v2192 = vlaneseq
      %v2193 = vshrl.u32 %v2192, 7
      %v2194 = vsub.s32 0, %v2193
      %v2195 = vrot.slane %v887, %v2194
      %v2196 = vmul.f32 %v2118, %v2195
      %v2197 = vmul.f32 %v2121, %v2195
      %v2198 = vadd.f32 %v2190, %v2196
      %v2199 = vadd.f32 %v2191, %v2197
      %v2200 = vld [vmem:[%s3] sm:$0xf]
      %v2201 = vld [vmem:[%s3 + $0x4] sm:$0xf]
      %v2202 = vld [vmem:[%s3 + $0x8] sm:$0xf]
      %v2203 = vld [vmem:[%s3 + $0xc] sm:$0xf]
      %v2204 = vld [vmem:[%s3 + $0x10] sm:$0x3]
      %v2205 = vpack.c.bf16 %v2199, %v2198
      %v2211 = vunpack.c.l.b16 %v2200
      %v2212 = vunpack.c.l.b16 %v2201
      %v2213 = vunpack.c.l.b16 %v2202
      %v2214 = vunpack.c.l.b16 %v2203
      %v2215 = vunpack.c.l.b16 %v2204
      %v2216 = vpack.c.b16 %v2212, %v2211
      %v2217 = vpack.c.b16 %v2214, %v2213
      %v2218 = vpack.c.b16 %v2215, %v2215
      %vm2219 = vcmask 130048
      %v2221 = vsel %vm2219, %v2216, 0
      %v2224 = vsel %vm2219, %v2217, 0
      %v2227 = vsel %vm2219, %v2218, 0
      %2229 = vmatprep.subr.bf16.mxu0 0
      %2230 = vmatpush1.bf16.msra.mxu0 %v2205
      %2231 = vmatprep.subr.bf16.mxu0 0
      %2232 = vmatpush1.bf16.msra.mxu0 0
      %2233 = vmatprep.subr.bf16.mxu0 0
      %2234 = vmatpush1.bf16.msra.mxu0 0
      %2235 = vmatprep.subr.bf16.mxu0 0
      %2236 = vmatpush1.bf16.msra.mxu0 0
      %2237 = vmatprep.subr.bf16.mxu0 0
      %2238 = vmatpush1.bf16.msra.mxu0 0
      %2239 = vmatprep.subr.bf16.mxu0 0
      %2240 = vmatpush1.bf16.msra.mxu0 0
      %2241 = vmatprep.subr.bf16.mxu0 0
      %2242 = vmatpush1.bf16.msra.mxu0 0
      %2243 = vmatprep.subr.bf16.mxu0 0
      %2244 = vmatpush1.bf16.msra.mxu0 0
      %2245 = vmatprep.subr.bf16.mxu0 0
      %2246 = vmatpush1.bf16.msra.mxu0 0
      %2247 = vmatprep.subr.bf16.mxu0 0
      %2248 = vmatpush1.bf16.msra.mxu0 0
      %2249 = vmatprep.subr.bf16.mxu0 0
      %2250 = vmatpush1.bf16.msra.mxu0 0
      %2251 = vmatprep.subr.bf16.mxu0 0
      %2252 = vmatpush1.bf16.msra.mxu0 0
      %2253 = vmatprep.subr.bf16.mxu0 0
      %2254 = vmatpush1.bf16.msra.mxu0 0
      %2255 = vmatprep.subr.bf16.mxu0 0
      %2256 = vmatpush1.bf16.msra.mxu0 0
      %2257 = vmatprep.subr.bf16.mxu0 0
      %2258 = vmatpush1.bf16.msra.mxu0 0
      %2259 = vmatprep.subr.bf16.mxu0 0
      %2260 = vmatpush1.bf16.msra.mxu0 0
      %2261 = vmatprep.mubr.bf16.mxu0 0
      %2262 = vmatmul.mubr.bf16.gmra.mrb[0].mxu0 %v2221
      %v2263 = vpop.f32.mrb[0].mxu0
      %v2264 = vadd.f32 0.0, %v2263
      %v2265 = vpop.f32.mrb[0].mxu0
      %v2266 = vpop.f32.mrb[0].mxu0
      %v2267 = vadd.f32 0.0, %v2266
      %v2268 = vpop.f32.mrb[0].mxu0
      %2269 = vmatprep.mubr.bf16.mxu0 0
      %2270 = vmatmul.mubr.bf16.gmra.mrb[0].mxu0 %v2224
      %v2271 = vpop.f32.mrb[0].mxu0
      %v2272 = vadd.f32 0.0, %v2271
      %v2273 = vpop.f32.mrb[0].mxu0
      %v2274 = vpop.f32.mrb[0].mxu0
      %v2275 = vadd.f32 0.0, %v2274
      %v2276 = vpop.f32.mrb[0].mxu0
      %2277 = vmatprep.mubr.bf16.mxu0 0
      %2278 = vmatmul.mubr.bf16.gmra.mrb[0].mxu0 %v2227
      %v2279 = vpop.f32.mrb[0].mxu0
      %v2280 = vadd.f32 0.0, %v2279
      %v2281 = vpop.f32.mrb[0].mxu0
      %v2282 = vpop.f32.mrb[0].mxu0
      %v2283 = vpop.f32.mrb[0].mxu0
      %2284 = vdwg.mxu0
      %v2285 = vlaneseq
      %v2286 = vshrl.u32 %v2285, 7
      %v2287 = vsub.s32 0, %v2286
      %v2288 = vrot.slane %v888, %v2287
      %v2289 = vmul.f32 %v2264, %v2288
      %v2290 = vlaneseq
      %v2291 = vshrl.u32 %v2290, 7
      %v2292 = vsub.s32 2, %v2291
      %v2293 = vrot.slane %v890, %v2292
      %v2294 = vadd.f32 %v2293, %v2289
      %v2295 = vlaneseq
      %v2296 = vshrl.u32 %v2295, 7
      %v2297 = vsub.s32 1, %v2296
      %v2298 = vrot.slane %v888, %v2297
      %v2299 = vmul.f32 %v2264, %v2298
      %v2301 = vrot.slane %v2299, 4
      %v2303 = vadd.f32 %v2294, %v2301
      %v2304 = vlaneseq
      %v2305 = vshrl.u32 %v2304, 7
      %v2306 = vsub.s32 2, %v2305
      %v2307 = vrot.slane %v888, %v2306
      %v2308 = vmul.f32 %v2267, %v2307
      %v2309 = vadd.f32 %v2303, %v2308
      %v2310 = vlaneseq
      %v2311 = vshrl.u32 %v2310, 7
      %v2312 = vsub.s32 3, %v2311
      %v2313 = vrot.slane %v888, %v2312
      %v2314 = vmul.f32 %v2267, %v2313
      %v2316 = vrot.slane %v2314, 4
      %v2318 = vadd.f32 %v2309, %v2316
      %v2319 = vlaneseq
      %v2320 = vshrl.u32 %v2319, 7
      %v2321 = vsub.s32 4, %v2320
      %v2322 = vrot.slane %v888, %v2321
      %v2323 = vmul.f32 %v2272, %v2322
      %v2324 = vadd.f32 %v2318, %v2323
      %v2325 = vlaneseq
      %v2326 = vshrl.u32 %v2325, 7
      %v2327 = vsub.s32 5, %v2326
      %v2328 = vrot.slane %v888, %v2327
      %v2329 = vmul.f32 %v2272, %v2328
      %v2331 = vrot.slane %v2329, 4
      %v2333 = vadd.f32 %v2324, %v2331
      %v2334 = vlaneseq
      %v2335 = vshrl.u32 %v2334, 7
      %v2336 = vsub.s32 6, %v2335
      %v2337 = vrot.slane %v888, %v2336
      %v2338 = vmul.f32 %v2275, %v2337
      %v2339 = vadd.f32 %v2333, %v2338
      %v2340 = vlaneseq
      %v2341 = vshrl.u32 %v2340, 7
      %v2342 = vsub.s32 7, %v2341
      %v2343 = vrot.slane %v888, %v2342
      %v2344 = vmul.f32 %v2275, %v2343
      %v2346 = vrot.slane %v2344, 4
      %v2348 = vadd.f32 %v2339, %v2346
      %v2349 = vlaneseq
      %v2350 = vshrl.u32 %v2349, 7
      %v2351 = vsub.s32 0, %v2350
      %v2352 = vrot.slane %v889, %v2351
      %v2353 = vmul.f32 %v2280, %v2352
      %v2354 = vadd.f32 %v2348, %v2353
      %v2355 = vpack.c.bf16 %v2354, %v2354
      %v2356 = vld [vmem:[%s7] sm:$0xff]
      %v2357 = vld [vmem:[%s7 + $0x8] sm:$0xf]
      %v2358 = vld [vmem:[%s7 + $0xc] sm:$0xff]
      %v2359 = vld [vmem:[%s7 + $0x14] sm:$0xf]
      %v2360 = vld [vmem:[%s7 + $0x18] sm:$0xff]
      %v2361 = vld [vmem:[%s7 + $0x20] sm:$0xf]
      %v2362 = vld [vmem:[%s7 + $0x24] sm:$0xff]
      %v2363 = vld [vmem:[%s7 + $0x2c] sm:$0xf]
      %v2364 = vld [vmem:[%s7 + $0x30] sm:$0xff]
      %v2365 = vld [vmem:[%s7 + $0x38] sm:$0xf]
      %v2366 = vld [vmem:[%s7 + $0x3c] sm:$0xff]
      %v2367 = vld [vmem:[%s7 + $0x44] sm:$0xf]
      %v2368 = vld [vmem:[%s7 + $0x48] sm:$0xff]
      %v2369 = vld [vmem:[%s7 + $0x50] sm:$0xf]
      %v2370 = vld [vmem:[%s7 + $0x54] sm:$0xff]
      %v2371 = vld [vmem:[%s7 + $0x5c] sm:$0xf]
      %v2372 = vld [vmem:[%s7 + $0x60] sm:$0xff]
      %v2373 = vld [vmem:[%s7 + $0x68] sm:$0xf]
      %v2374 = vld [vmem:[%s7 + $0x6c] sm:$0xff]
      %v2375 = vld [vmem:[%s7 + $0x74] sm:$0xf]
      %v2376 = vld [vmem:[%s7 + $0x78] sm:$0xff]
      %v2377 = vld [vmem:[%s7 + $0x80] sm:$0xf]
      %v2378 = vld [vmem:[%s7 + $0x84] sm:$0xff]
      %v2379 = vld [vmem:[%s7 + $0x8c] sm:$0xf]
      %v2380 = vld [vmem:[%s7 + $0x90] sm:$0xff]
      %v2381 = vld [vmem:[%s7 + $0x98] sm:$0xf]
      %v2382 = vld [vmem:[%s7 + $0x9c] sm:$0xff]
      %v2383 = vld [vmem:[%s7 + $0xa4] sm:$0xf]
      %v2384 = vld [vmem:[%s7 + $0xa8] sm:$0xff]
      %v2385 = vld [vmem:[%s7 + $0xb0] sm:$0xf]
      %v2386 = vld [vmem:[%s7 + $0xb4] sm:$0xff]
      %v2387 = vld [vmem:[%s7 + $0xbc] sm:$0xf]
      %v2388 = vld [vmem:[%s8] sm:$0x7]
      %v2390 = vlaneseq
      %v2391 = vshrl.u32 %v2390, 7
      %v2392 = vsub.s32 0, %v2391
      %v2393 = vrot.slane %v2388, %v2392
      %v2394 = vlaneseq
      %v2395 = vshrl.u32 %v2394, 7
      %v2396 = vsub.s32 1, %v2395
      %v2397 = vrot.slane %v2388, %v2396
      %v2398 = vlaneseq
      %v2399 = vshrl.u32 %v2398, 7
      %v2400 = vsub.s32 2, %v2399
      %v2401 = vrot.slane %v2388, %v2400
      %v2437 = vunpack.c.l.b16 %v2356
      %v2438 = vunpack.c.h.b16 %v2356
      %v2439 = vunpack.c.l.b16 %v2357
      %v2440 = vunpack.c.l.b16 %v2358
      %v2441 = vunpack.c.h.b16 %v2358
      %v2442 = vunpack.c.l.b16 %v2359
      %v2443 = vunpack.c.l.b16 %v2360
      %v2444 = vunpack.c.h.b16 %v2360
      %v2445 = vunpack.c.l.b16 %v2361
      %v2446 = vunpack.c.l.b16 %v2362
      %v2447 = vunpack.c.h.b16 %v2362
      %v2448 = vunpack.c.l.b16 %v2363
      %v2449 = vunpack.c.l.b16 %v2364
      %v2450 = vunpack.c.h.b16 %v2364
      %v2451 = vunpack.c.l.b16 %v2365
      %v2452 = vunpack.c.l.b16 %v2366
      %v2453 = vunpack.c.h.b16 %v2366
      %v2454 = vunpack.c.l.b16 %v2367
      %v2455 = vunpack.c.l.b16 %v2368
      %v2456 = vunpack.c.h.b16 %v2368
      %v2457 = vunpack.c.l.b16 %v2369
      %v2458 = vunpack.c.l.b16 %v2370
      %v2459 = vunpack.c.h.b16 %v2370
      %v2460 = vunpack.c.l.b16 %v2371
      %v2461 = vunpack.c.l.b16 %v2372
      %v2462 = vunpack.c.h.b16 %v2372
      %v2463 = vunpack.c.l.b16 %v2373
      %v2464 = vunpack.c.l.b16 %v2374
      %v2465 = vunpack.c.h.b16 %v2374
      %v2466 = vunpack.c.l.b16 %v2375
      %v2467 = vunpack.c.l.b16 %v2376
      %v2468 = vunpack.c.h.b16 %v2376
      %v2469 = vunpack.c.l.b16 %v2377
      %v2470 = vunpack.c.l.b16 %v2378
      %v2471 = vunpack.c.h.b16 %v2378
      %v2472 = vunpack.c.l.b16 %v2379
      %v2473 = vunpack.c.l.b16 %v2380
      %v2474 = vunpack.c.h.b16 %v2380
      %v2475 = vunpack.c.l.b16 %v2381
      %v2476 = vunpack.c.l.b16 %v2382
      %v2477 = vunpack.c.h.b16 %v2382
      %v2478 = vunpack.c.l.b16 %v2383
      %v2479 = vunpack.c.l.b16 %v2384
      %v2480 = vunpack.c.h.b16 %v2384
      %v2481 = vunpack.c.l.b16 %v2385
      %v2482 = vunpack.c.l.b16 %v2386
      %v2483 = vunpack.c.h.b16 %v2386
      %v2484 = vunpack.c.l.b16 %v2387
      %v2485 = vpack.c.b16 %v2440, %v2437
      %v2486 = vpack.c.b16 %v2441, %v2438
      %v2487 = vpack.c.b16 %v2442, %v2439
      %v2488 = vpack.c.b16 %v2446, %v2443
      %v2489 = vpack.c.b16 %v2447, %v2444
      %v2490 = vpack.c.b16 %v2448, %v2445
      %v2491 = vpack.c.b16 %v2452, %v2449
      %v2492 = vpack.c.b16 %v2453, %v2450
      %v2493 = vpack.c.b16 %v2454, %v2451
      %v2494 = vpack.c.b16 %v2458, %v2455
      %v2495 = vpack.c.b16 %v2459, %v2456
      %v2496 = vpack.c.b16 %v2460, %v2457
      %v2497 = vpack.c.b16 %v2464, %v2461
      %v2498 = vpack.c.b16 %v2465, %v2462
      %v2499 = vpack.c.b16 %v2466, %v2463
      %v2500 = vpack.c.b16 %v2470, %v2467
      %v2501 = vpack.c.b16 %v2471, %v2468
      %v2502 = vpack.c.b16 %v2472, %v2469
      %v2503 = vpack.c.b16 %v2476, %v2473
      %v2504 = vpack.c.b16 %v2477, %v2474
      %v2505 = vpack.c.b16 %v2478, %v2475
      %v2506 = vpack.c.b16 %v2482, %v2479
      %v2507 = vpack.c.b16 %v2483, %v2480
      %v2508 = vpack.c.b16 %v2484, %v2481
      %2533 = vmatprep.subr.bf16.mxu0 %v2486
      %2534 = vmatpush1.bf16.msra.mxu0 %v2485
      %2535 = vmatprep.subr.bf16.mxu0 %v2489
      %2536 = vmatpush1.bf16.msra.mxu0 %v2488
      %2537 = vmatprep.subr.bf16.mxu0 %v2492
      %2538 = vmatpush1.bf16.msra.mxu0 %v2491
      %2539 = vmatprep.subr.bf16.mxu0 %v2495
      %2540 = vmatpush1.bf16.msra.mxu0 %v2494
      %2541 = vmatprep.subr.bf16.mxu0 %v2498
      %2542 = vmatpush1.bf16.msra.mxu0 %v2497
      %2543 = vmatprep.subr.bf16.mxu0 %v2501
      %2544 = vmatpush1.bf16.msra.mxu0 %v2500
      %2545 = vmatprep.subr.bf16.mxu0 %v2504
      %2546 = vmatpush1.bf16.msra.mxu0 %v2503
      %2547 = vmatprep.subr.bf16.mxu0 %v2507
      %2548 = vmatpush1.bf16.msra.mxu0 %v2506
      %2549 = vmatprep.subr.bf16.mxu0 0
      %2550 = vmatpush1.bf16.msra.mxu0 0
      %2551 = vmatprep.subr.bf16.mxu0 0
      %2552 = vmatpush1.bf16.msra.mxu0 0
      %2553 = vmatprep.subr.bf16.mxu0 0
      %2554 = vmatpush1.bf16.msra.mxu0 0
      %2555 = vmatprep.subr.bf16.mxu0 0
      %2556 = vmatpush1.bf16.msra.mxu0 0
      %2557 = vmatprep.subr.bf16.mxu0 0
      %2558 = vmatpush1.bf16.msra.mxu0 0
      %2559 = vmatprep.subr.bf16.mxu0 0
      %2560 = vmatpush1.bf16.msra.mxu0 0
      %2561 = vmatprep.subr.bf16.mxu0 0
      %2562 = vmatpush1.bf16.msra.mxu0 0
      %2563 = vmatprep.subr.bf16.mxu0 0
      %2564 = vmatpush1.bf16.msra.mxu0 0
      %2565 = vmatprep.mubr.bf16.mxu0 0
      %2566 = vmatmul.mubr.bf16.gmra.mrb[0].mxu0 %v2355
      %v2567 = vpop.f32.mrb[0].mxu0
      %v2568 = vadd.f32 %v2393, %v2567
      %v2569 = vpop.f32.mrb[0].mxu0
      %v2570 = vadd.f32 %v2397, %v2569
      %v2571 = vpop.f32.mrb[0].mxu0
      %v2572 = vpop.f32.mrb[0].mxu0
      %2573 = vdwg.mxu0
      %2574 = vmatprep.subr.bf16.mxu0 0
      %2575 = vmatpush1.bf16.msra.mxu0 %v2487
      %2576 = vmatprep.subr.bf16.mxu0 0
      %2577 = vmatpush1.bf16.msra.mxu0 %v2490
      %2578 = vmatprep.subr.bf16.mxu0 0
      %2579 = vmatpush1.bf16.msra.mxu0 %v2493
      %2580 = vmatprep.subr.bf16.mxu0 0
      %2581 = vmatpush1.bf16.msra.mxu0 %v2496
      %2582 = vmatprep.subr.bf16.mxu0 0
      %2583 = vmatpush1.bf16.msra.mxu0 %v2499
      %2584 = vmatprep.subr.bf16.mxu0 0
      %2585 = vmatpush1.bf16.msra.mxu0 %v2502
      %2586 = vmatprep.subr.bf16.mxu0 0
      %2587 = vmatpush1.bf16.msra.mxu0 %v2505
      %2588 = vmatprep.subr.bf16.mxu0 0
      %2589 = vmatpush1.bf16.msra.mxu0 %v2508
      %2590 = vmatprep.subr.bf16.mxu0 0
      %2591 = vmatpush1.bf16.msra.mxu0 0
      %2592 = vmatprep.subr.bf16.mxu0 0
      %2593 = vmatpush1.bf16.msra.mxu0 0
      %2594 = vmatprep.subr.bf16.mxu0 0
      %2595 = vmatpush1.bf16.msra.mxu0 0
      %2596 = vmatprep.subr.bf16.mxu0 0
      %2597 = vmatpush1.bf16.msra.mxu0 0
      %2598 = vmatprep.subr.bf16.mxu0 0
      %2599 = vmatpush1.bf16.msra.mxu0 0
      %2600 = vmatprep.subr.bf16.mxu0 0
      %2601 = vmatpush1.bf16.msra.mxu0 0
      %2602 = vmatprep.subr.bf16.mxu0 0
      %2603 = vmatpush1.bf16.msra.mxu0 0
      %2604 = vmatprep.subr.bf16.mxu0 0
      %2605 = vmatpush1.bf16.msra.mxu0 0
      %2606 = vmatprep.mubr.bf16.mxu0 0
      %2607 = vmatmul.mubr.bf16.gmra.mrb[0].mxu0 %v2355
      %v2608 = vpop.f32.mrb[0].mxu0
      %v2609 = vadd.f32 %v2401, %v2608
      %v2610 = vpop.f32.mrb[0].mxu0
      %v2611 = vpop.f32.mrb[0].mxu0
      %v2612 = vpop.f32.mrb[0].mxu0
      %2613 = vdwg.mxu0
      %v2614 = vpack.c.bf16 %v2568, %v2568
      %v2615 = vpack.c.bf16 %v2570, %v2570
      %v2616 = vld [vmem:[%s13] sm:$0x1]
      %v2618 = vlaneseq
      %v2619 = vshrl.u32 %v2618, 7
      %v2620 = vsub.s32 0, %v2619
      %v2621 = vrot.slane %v2616, %v2620
      %2623 = vxpose.xlu0.c.b16.start [1/8] %v2614, 128
      %2624 = vxpose.xlu0.c.b16.cont [2/8] 0, 128
      %2625 = vxpose.xlu0.c.b16.cont [3/8] 0, 128
      %2626 = vxpose.xlu0.c.b16.cont [4/8] 0, 128
      %2627 = vxpose.xlu0.c.b16.cont [5/8] 0, 128
      %2628 = vxpose.xlu0.c.b16.cont [6/8] 0, 128
      %2629 = vxpose.xlu0.c.b16.cont [7/8] 0, 128
      %2630 = vxpose.xlu0.c.b16.end [8/8] 0, 128
      %v2631 = vpop.trf.xlu0
      %v2632 = vpop.trf.xlu0
      %v2633 = vpop.trf.xlu0
      %v2634 = vpop.trf.xlu0
      %v2635 = vpop.trf.xlu0
      %v2636 = vpop.trf.xlu0
      %v2637 = vpop.trf.xlu0
      %v2638 = vpop.trf.xlu0
      %vm2639 = vcmask 31744
      %v2641 = vsel %vm2639, %v2631, 0
      %v2644 = vsel %vm2639, %v2632, 0
      %v2647 = vsel %vm2639, %v2633, 0
      %v2650 = vsel %vm2639, %v2634, 0
      %v2653 = vsel %vm2639, %v2635, 0
      %v2656 = vsel %vm2639, %v2636, 0
      %v2659 = vsel %vm2639, %v2637, 0
      %v2662 = vsel %vm2639, %v2638, 0
      %vm2664 = vcmask 1041408
      %v2666 = vsel %vm2664, %v2615, 0
      %2668 = vmatprep.subr.bf16.mxu0 0
      %2669 = vmatpush1.bf16.msra.mxu0 %v2666
      %2670 = vmatprep.subr.bf16.mxu0 0
      %2671 = vmatpush1.bf16.msra.mxu0 0
      %2672 = vmatprep.subr.bf16.mxu0 0
      %2673 = vmatpush1.bf16.msra.mxu0 0
      %2674 = vmatprep.subr.bf16.mxu0 0
      %2675 = vmatpush1.bf16.msra.mxu0 0
      %2676 = vmatprep.subr.bf16.mxu0 0
      %2677 = vmatpush1.bf16.msra.mxu0 0
      %2678 = vmatprep.subr.bf16.mxu0 0
      %2679 = vmatpush1.bf16.msra.mxu0 0
      %2680 = vmatprep.subr.bf16.mxu0 0
      %2681 = vmatpush1.bf16.msra.mxu0 0
      %2682 = vmatprep.subr.bf16.mxu0 0
      %2683 = vmatpush1.bf16.msra.mxu0 0
      %2684 = vmatprep.subr.bf16.mxu0 0
      %2685 = vmatpush1.bf16.msra.mxu0 0
      %2686 = vmatprep.subr.bf16.mxu0 0
      %2687 = vmatpush1.bf16.msra.mxu0 0
      %2688 = vmatprep.subr.bf16.mxu0 0
      %2689 = vmatpush1.bf16.msra.mxu0 0
      %2690 = vmatprep.subr.bf16.mxu0 0
      %2691 = vmatpush1.bf16.msra.mxu0 0
      %2692 = vmatprep.subr.bf16.mxu0 0
      %2693 = vmatpush1.bf16.msra.mxu0 0
      %2694 = vmatprep.subr.bf16.mxu0 0
      %2695 = vmatpush1.bf16.msra.mxu0 0
      %2696 = vmatprep.subr.bf16.mxu0 0
      %2697 = vmatpush1.bf16.msra.mxu0 0
      %2698 = vmatprep.subr.bf16.mxu0 0
      %2699 = vmatpush1.bf16.msra.mxu0 0
      %2700 = vmatprep.mubr.bf16.mxu0 0
      %2701 = vmatmul.mubr.bf16.gmra.mrb[0].mxu0 %v2641
      %v2702 = vpop.f32.mrb[0].mxu0
      %v2703 = vadd.f32 %v2621, %v2702
      %v2704 = vpop.f32.mrb[0].mxu0
      %v2705 = vpop.f32.mrb[0].mxu0
      %v2706 = vadd.f32 %v2621, %v2705
      %v2707 = vpop.f32.mrb[0].mxu0
      %2708 = vmatprep.mubr.bf16.mxu0 0
      %2709 = vmatmul.mubr.bf16.gmra.mrb[0].mxu0 %v2644
      %v2710 = vpop.f32.mrb[0].mxu0
      %v2711 = vadd.f32 %v2621, %v2710
      %v2712 = vpop.f32.mrb[0].mxu0
      %v2713 = vpop.f32.mrb[0].mxu0
      %v2714 = vadd.f32 %v2621, %v2713
      %v2715 = vpop.f32.mrb[0].mxu0
      %2716 = vmatprep.mubr.bf16.mxu0 0
      %2717 = vmatmul.mubr.bf16.gmra.mrb[0].mxu0 %v2647
      %v2718 = vpop.f32.mrb[0].mxu0
      %v2719 = vadd.f32 %v2621, %v2718
      %v2720 = vpop.f32.mrb[0].mxu0
      %v2721 = vpop.f32.mrb[0].mxu0
      %v2722 = vadd.f32 %v2621, %v2721
      %v2723 = vpop.f32.mrb[0].mxu0
      %2724 = vmatprep.mubr.bf16.mxu0 0
      %2725 = vmatmul.mubr.bf16.gmra.mrb[0].mxu0 %v2650
      %v2726 = vpop.f32.mrb[0].mxu0
      %v2727 = vadd.f32 %v2621, %v2726
      %v2728 = vpop.f32.mrb[0].mxu0
      %v2729 = vpop.f32.mrb[0].mxu0
      %v2730 = vadd.f32 %v2621, %v2729
      %v2731 = vpop.f32.mrb[0].mxu0
      %2732 = vmatprep.mubr.bf16.mxu0 0
      %2733 = vmatmul.mubr.bf16.gmra.mrb[0].mxu0 %v2653
      %v2734 = vpop.f32.mrb[0].mxu0
      %v2735 = vadd.f32 %v2621, %v2734
      %v2736 = vpop.f32.mrb[0].mxu0
      %v2737 = vpop.f32.mrb[0].mxu0
      %v2738 = vadd.f32 %v2621, %v2737
      %v2739 = vpop.f32.mrb[0].mxu0
      %2740 = vmatprep.mubr.bf16.mxu0 0
      %2741 = vmatmul.mubr.bf16.gmra.mrb[0].mxu0 %v2656
      %v2742 = vpop.f32.mrb[0].mxu0
      %v2743 = vadd.f32 %v2621, %v2742
      %v2744 = vpop.f32.mrb[0].mxu0
      %v2745 = vpop.f32.mrb[0].mxu0
      %v2746 = vadd.f32 %v2621, %v2745
      %v2747 = vpop.f32.mrb[0].mxu0
      %2748 = vmatprep.mubr.bf16.mxu0 0
      %2749 = vmatmul.mubr.bf16.gmra.mrb[0].mxu0 %v2659
      %v2750 = vpop.f32.mrb[0].mxu0
      %v2751 = vadd.f32 %v2621, %v2750
      %v2752 = vpop.f32.mrb[0].mxu0
      %v2753 = vpop.f32.mrb[0].mxu0
      %v2754 = vadd.f32 %v2621, %v2753
      %v2755 = vpop.f32.mrb[0].mxu0
      %2756 = vmatprep.mubr.bf16.mxu0 0
      %2757 = vmatmul.mubr.bf16.gmra.mrb[0].mxu0 %v2662
      %v2758 = vpop.f32.mrb[0].mxu0
      %v2759 = vadd.f32 %v2621, %v2758
      %v2760 = vpop.f32.mrb[0].mxu0
      %v2761 = vpop.f32.mrb[0].mxu0
      %v2762 = vadd.f32 %v2621, %v2761
      %v2763 = vpop.f32.mrb[0].mxu0
      %2764 = vdwg.mxu0
      %2765 = vmax.xlane.f32.xlu0 %v2703
      %v2766 = vpop.xlane.xlu0 %2765
      %2767 = vmax.xlane.f32.xlu0 %v2706
      %v2768 = vpop.xlane.xlu0 %2767
      %2769 = vmax.xlane.f32.xlu0 %v2711
      %v2770 = vpop.xlane.xlu0 %2769
      %2771 = vmax.xlane.f32.xlu0 %v2714
      %v2772 = vpop.xlane.xlu0 %2771
      %2773 = vmax.xlane.f32.xlu0 %v2719
      %v2774 = vpop.xlane.xlu0 %2773
      %2775 = vmax.xlane.f32.xlu0 %v2722
      %v2776 = vpop.xlane.xlu0 %2775
      %2777 = vmax.xlane.f32.xlu0 %v2727
      %v2778 = vpop.xlane.xlu0 %2777
      %2779 = vmax.xlane.f32.xlu0 %v2730
      %v2780 = vpop.xlane.xlu0 %2779
      %2781 = vmax.xlane.f32.xlu0 %v2735
      %v2782 = vpop.xlane.xlu0 %2781
      %2783 = vmax.xlane.f32.xlu0 %v2738
      %v2784 = vpop.xlane.xlu0 %2783
      %2785 = vmax.xlane.f32.xlu0 %v2743
      %v2786 = vpop.xlane.xlu0 %2785
      %2787 = vmax.xlane.f32.xlu0 %v2746
      %v2788 = vpop.xlane.xlu0 %2787
      %2789 = vmax.xlane.f32.xlu0 %v2751
      %v2790 = vpop.xlane.xlu0 %2789
      %2791 = vmax.xlane.f32.xlu0 %v2754
      %v2792 = vpop.xlane.xlu0 %2791
      %2793 = vmax.xlane.f32.xlu0 %v2759
      %v2794 = vpop.xlane.xlu0 %2793
      %2795 = vmax.xlane.f32.xlu0 %v2762
      %v2796 = vpop.xlane.xlu0 %2795
      %v2797 = vsub.f32 %v2703, %v2766
      %v2798 = vsub.f32 %v2706, %v2768
      %v2799 = vsub.f32 %v2711, %v2770
      %v2800 = vsub.f32 %v2714, %v2772
      %v2801 = vsub.f32 %v2719, %v2774
      %v2802 = vsub.f32 %v2722, %v2776
      %v2803 = vsub.f32 %v2727, %v2778
      %v2804 = vsub.f32 %v2730, %v2780
      %v2805 = vsub.f32 %v2735, %v2782
      %v2806 = vsub.f32 %v2738, %v2784
      %v2807 = vsub.f32 %v2743, %v2786
      %v2808 = vsub.f32 %v2746, %v2788
      %v2809 = vsub.f32 %v2751, %v2790
      %v2810 = vsub.f32 %v2754, %v2792
      %v2811 = vsub.f32 %v2759, %v2794
      %v2812 = vsub.f32 %v2762, %v2796
      %v2813 = vmul.f32 %v2797, 1.442695
      %v2814 = vpow.pop %v2813
      %v2815 = vmul.f32 %v2798, 1.442695
      %v2816 = vpow.pop %v2815
      %v2817 = vmul.f32 %v2799, 1.442695
      %v2818 = vpow.pop %v2817
      %v2819 = vmul.f32 %v2800, 1.442695
      %v2820 = vpow.pop %v2819
      %v2821 = vmul.f32 %v2801, 1.442695
      %v2822 = vpow.pop %v2821
      %v2823 = vmul.f32 %v2802, 1.442695
      %v2824 = vpow.pop %v2823
      %v2825 = vmul.f32 %v2803, 1.442695
      %v2826 = vpow.pop %v2825
      %v2827 = vmul.f32 %v2804, 1.442695
      %v2828 = vpow.pop %v2827
      %v2829 = vmul.f32 %v2805, 1.442695
      %v2830 = vpow.pop %v2829
      %v2831 = vmul.f32 %v2806, 1.442695
      %v2832 = vpow.pop %v2831
      %v2833 = vmul.f32 %v2807, 1.442695
      %v2834 = vpow.pop %v2833
      %v2835 = vmul.f32 %v2808, 1.442695
      %v2836 = vpow.pop %v2835
      %v2837 = vmul.f32 %v2809, 1.442695
      %v2838 = vpow.pop %v2837
      %v2839 = vmul.f32 %v2810, 1.442695
      %v2840 = vpow.pop %v2839
      %v2841 = vmul.f32 %v2811, 1.442695
      %v2842 = vpow.pop %v2841
      %v2843 = vmul.f32 %v2812, 1.442695
      %v2844 = vpow.pop %v2843
      %2845 = vadd.xlane.f32.xlu0 %v2814
      %v2846 = vpop.xlane.xlu0 %2845
      %2847 = vadd.xlane.f32.xlu0 %v2816
      %v2848 = vpop.xlane.xlu0 %2847
      %2849 = vadd.xlane.f32.xlu0 %v2818
      %v2850 = vpop.xlane.xlu0 %2849
      %2851 = vadd.xlane.f32.xlu0 %v2820
      %v2852 = vpop.xlane.xlu0 %2851
      %2853 = vadd.xlane.f32.xlu0 %v2822
      %v2854 = vpop.xlane.xlu0 %2853
      %2855 = vadd.xlane.f32.xlu0 %v2824
      %v2856 = vpop.xlane.xlu0 %2855
      %2857 = vadd.xlane.f32.xlu0 %v2826
      %v2858 = vpop.xlane.xlu0 %2857
      %2859 = vadd.xlane.f32.xlu0 %v2828
      %v2860 = vpop.xlane.xlu0 %2859
      %2861 = vadd.xlane.f32.xlu0 %v2830
      %v2862 = vpop.xlane.xlu0 %2861
      %2863 = vadd.xlane.f32.xlu0 %v2832
      %v2864 = vpop.xlane.xlu0 %2863
      %2865 = vadd.xlane.f32.xlu0 %v2834
      %v2866 = vpop.xlane.xlu0 %2865
      %2867 = vadd.xlane.f32.xlu0 %v2836
      %v2868 = vpop.xlane.xlu0 %2867
      %2869 = vadd.xlane.f32.xlu0 %v2838
      %v2870 = vpop.xlane.xlu0 %2869
      %2871 = vadd.xlane.f32.xlu0 %v2840
      %v2872 = vpop.xlane.xlu0 %2871
      %2873 = vadd.xlane.f32.xlu0 %v2842
      %v2874 = vpop.xlane.xlu0 %2873
      %2875 = vadd.xlane.f32.xlu0 %v2844
      %v2876 = vpop.xlane.xlu0 %2875
      %v2877 = vrcp.pop %v2846
      %v2878 = vrcp.pop %v2848
      %v2879 = vrcp.pop %v2850
      %v2880 = vrcp.pop %v2852
      %v2881 = vrcp.pop %v2854
      %v2882 = vrcp.pop %v2856
      %v2883 = vrcp.pop %v2858
      %v2884 = vrcp.pop %v2860
      %v2885 = vrcp.pop %v2862
      %v2886 = vrcp.pop %v2864
      %v2887 = vrcp.pop %v2866
      %v2888 = vrcp.pop %v2868
      %v2889 = vrcp.pop %v2870
      %v2890 = vrcp.pop %v2872
      %v2891 = vrcp.pop %v2874
      %v2892 = vrcp.pop %v2876
      %v2893 = vmul.f32 %v2814, %v2877
      %v2894 = vmul.f32 %v2816, %v2878
      %v2895 = vmul.f32 %v2818, %v2879
      %v2896 = vmul.f32 %v2820, %v2880
      %v2897 = vmul.f32 %v2822, %v2881
      %v2898 = vmul.f32 %v2824, %v2882
      %v2899 = vmul.f32 %v2826, %v2883
      %v2900 = vmul.f32 %v2828, %v2884
      %v2901 = vmul.f32 %v2830, %v2885
      %v2902 = vmul.f32 %v2832, %v2886
      %v2903 = vmul.f32 %v2834, %v2887
      %v2904 = vmul.f32 %v2836, %v2888
      %v2905 = vmul.f32 %v2838, %v2889
      %v2906 = vmul.f32 %v2840, %v2890
      %v2907 = vmul.f32 %v2842, %v2891
      %v2908 = vmul.f32 %v2844, %v2892
      %v2909 = vpack.c.bf16 %v2609, %v2609
      %v2910 = vpack.c.bf16 %v2894, %v2893
      %v2911 = vpack.c.bf16 %v2896, %v2895
      %v2912 = vpack.c.bf16 %v2898, %v2897
      %v2913 = vpack.c.bf16 %v2900, %v2899
      %v2914 = vpack.c.bf16 %v2902, %v2901
      %v2915 = vpack.c.bf16 %v2904, %v2903
      %v2916 = vpack.c.bf16 %v2906, %v2905
      %v2917 = vpack.c.bf16 %v2908, %v2907
      %2918 = vmatprep.subr.bf16.mxu0 0
      %2919 = vmatpush1.bf16.msra.mxu0 %v2910
      %2920 = vmatprep.subr.bf16.mxu0 0
      %2921 = vmatpush1.bf16.msra.mxu0 %v2911
      %2922 = vmatprep.subr.bf16.mxu0 0
      %2923 = vmatpush1.bf16.msra.mxu0 %v2912
      %2924 = vmatprep.subr.bf16.mxu0 0
      %2925 = vmatpush1.bf16.msra.mxu0 %v2913
      %2926 = vmatprep.subr.bf16.mxu0 0
      %2927 = vmatpush1.bf16.msra.mxu0 %v2914
      %2928 = vmatprep.subr.bf16.mxu0 0
      %2929 = vmatpush1.bf16.msra.mxu0 %v2915
      %2930 = vmatprep.subr.bf16.mxu0 0
      %2931 = vmatpush1.bf16.msra.mxu0 %v2916
      %2932 = vmatprep.subr.bf16.mxu0 0
      %2933 = vmatpush1.bf16.msra.mxu0 %v2917
      %2934 = vmatprep.subr.bf16.mxu0 0
      %2935 = vmatpush1.bf16.msra.mxu0 0
      %2936 = vmatprep.subr.bf16.mxu0 0
      %2937 = vmatpush1.bf16.msra.mxu0 0
      %2938 = vmatprep.subr.bf16.mxu0 0
      %2939 = vmatpush1.bf16.msra.mxu0 0
      %2940 = vmatprep.subr.bf16.mxu0 0
      %2941 = vmatpush1.bf16.msra.mxu0 0
      %2942 = vmatprep.subr.bf16.mxu0 0
      %2943 = vmatpush1.bf16.msra.mxu0 0
      %2944 = vmatprep.subr.bf16.mxu0 0
      %2945 = vmatpush1.bf16.msra.mxu0 0
      %2946 = vmatprep.subr.bf16.mxu0 0
      %2947 = vmatpush1.bf16.msra.mxu0 0
      %2948 = vmatprep.subr.bf16.mxu0 0
      %2949 = vmatpush1.bf16.msra.mxu0 0
      %2950 = vmatprep.mubr.bf16.mxu0 0
      %2951 = vmatmul.mubr.bf16.gmra.mrb[0].mxu0 %v2909
      %v2952 = vpop.f32.mrb[0].mxu0
      %v2953 = vadd.f32 0.0, %v2952
      %v2954 = vpop.f32.mrb[0].mxu0
      %v2955 = vpop.f32.mrb[0].mxu0
      %v2956 = vpop.f32.mrb[0].mxu0
      %2957 = vdwg.mxu0
      %v2958 = vpack.c.bf16 %v2953, %v2953
      %v2959 = vld [vmem:[%s9] sm:$0xf]
      %v2960 = vld [vmem:[%s9 + $0x4] sm:$0xf]
      %v2961 = vld [vmem:[%s9 + $0x8] sm:$0xf]
      %v2962 = vld [vmem:[%s9 + $0xc] sm:$0xf]
      %v2963 = vld [vmem:[%s9 + $0x10] sm:$0xf]
      %v2964 = vld [vmem:[%s9 + $0x14] sm:$0xf]
      %v2965 = vld [vmem:[%s9 + $0x18] sm:$0xf]
      %v2966 = vld [vmem:[%s9 + $0x1c] sm:$0xf]
      %v2967 = vld [vmem:[%s9 + $0x20] sm:$0xf]
      %v2968 = vld [vmem:[%s9 + $0x24] sm:$0xf]
      %v2969 = vld [vmem:[%s9 + $0x28] sm:$0xf]
      %v2970 = vld [vmem:[%s9 + $0x2c] sm:$0xf]
      %v2971 = vld [vmem:[%s9 + $0x30] sm:$0xf]
      %v2972 = vld [vmem:[%s9 + $0x34] sm:$0xf]
      %v2973 = vld [vmem:[%s9 + $0x38] sm:$0xf]
      %v2974 = vld [vmem:[%s9 + $0x3c] sm:$0xf]
      %v2975 = vld [vmem:[%s10] sm:$0x1]
      %v2977 = vlaneseq
      %v2978 = vshrl.u32 %v2977, 7
      %v2979 = vsub.s32 0, %v2978
      %v2980 = vrot.slane %v2975, %v2979
      %v2998 = vunpack.c.l.b16 %v2959
      %v2999 = vunpack.c.l.b16 %v2960
      %v3000 = vunpack.c.l.b16 %v2961
      %v3001 = vunpack.c.l.b16 %v2962
      %v3002 = vunpack.c.l.b16 %v2963
      %v3003 = vunpack.c.l.b16 %v2964
      %v3004 = vunpack.c.l.b16 %v2965
      %v3005 = vunpack.c.l.b16 %v2966
      %v3006 = vunpack.c.l.b16 %v2967
      %v3007 = vunpack.c.l.b16 %v2968
      %v3008 = vunpack.c.l.b16 %v2969
      %v3009 = vunpack.c.l.b16 %v2970
      %v3010 = vunpack.c.l.b16 %v2971
      %v3011 = vunpack.c.l.b16 %v2972
      %v3012 = vunpack.c.l.b16 %v2973
      %v3013 = vunpack.c.l.b16 %v2974
      %v3014 = vpack.c.b16 %v2999, %v2998
      %v3015 = vpack.c.b16 %v3001, %v3000
      %v3016 = vpack.c.b16 %v3003, %v3002
      %v3017 = vpack.c.b16 %v3005, %v3004
      %v3018 = vpack.c.b16 %v3007, %v3006
      %v3019 = vpack.c.b16 %v3009, %v3008
      %v3020 = vpack.c.b16 %v3011, %v3010
      %v3021 = vpack.c.b16 %v3013, %v3012
      %3030 = vmatprep.subr.bf16.mxu0 0
      %3031 = vmatpush1.bf16.msra.mxu0 %v3014
      %3032 = vmatprep.subr.bf16.mxu0 0
      %3033 = vmatpush1.bf16.msra.mxu0 %v3015
      %3034 = vmatprep.subr.bf16.mxu0 0
      %3035 = vmatpush1.bf16.msra.mxu0 %v3016
      %3036 = vmatprep.subr.bf16.mxu0 0
      %3037 = vmatpush1.bf16.msra.mxu0 %v3017
      %3038 = vmatprep.subr.bf16.mxu0 0
      %3039 = vmatpush1.bf16.msra.mxu0 %v3018
      %3040 = vmatprep.subr.bf16.mxu0 0
      %3041 = vmatpush1.bf16.msra.mxu0 %v3019
      %3042 = vmatprep.subr.bf16.mxu0 0
      %3043 = vmatpush1.bf16.msra.mxu0 %v3020
      %3044 = vmatprep.subr.bf16.mxu0 0
      %3045 = vmatpush1.bf16.msra.mxu0 %v3021
      %3046 = vmatprep.subr.bf16.mxu0 0
      %3047 = vmatpush1.bf16.msra.mxu0 0
      %3048 = vmatprep.subr.bf16.mxu0 0
      %3049 = vmatpush1.bf16.msra.mxu0 0
      %3050 = vmatprep.subr.bf16.mxu0 0
      %3051 = vmatpush1.bf16.msra.mxu0 0
      %3052 = vmatprep.subr.bf16.mxu0 0
      %3053 = vmatpush1.bf16.msra.mxu0 0
      %3054 = vmatprep.subr.bf16.mxu0 0
      %3055 = vmatpush1.bf16.msra.mxu0 0
      %3056 = vmatprep.subr.bf16.mxu0 0
      %3057 = vmatpush1.bf16.msra.mxu0 0
      %3058 = vmatprep.subr.bf16.mxu0 0
      %3059 = vmatpush1.bf16.msra.mxu0 0
      %3060 = vmatprep.subr.bf16.mxu0 0
      %3061 = vmatpush1.bf16.msra.mxu0 0
      %3062 = vmatprep.mubr.bf16.mxu0 0
      %3063 = vmatmul.mubr.bf16.gmra.mrb[0].mxu0 %v2958
      %v3064 = vpop.f32.mrb[0].mxu0
      %v3065 = vadd.f32 %v2980, %v3064
      %v3066 = vpop.f32.mrb[0].mxu0
      %v3067 = vpop.f32.mrb[0].mxu0
      %v3068 = vpop.f32.mrb[0].mxu0
      %3069 = vdwg.mxu0
      %v3070 = vpack.c.bf16 %v3065, %v3065
      %v3071 = vld [vmem:[%s11] sm:$0xf]
      %v3072 = vld [vmem:[%s11 + $0x4] sm:$0xf]
      %v3073 = vld [vmem:[%s11 + $0x8] sm:$0xf]
      %v3074 = vld [vmem:[%s11 + $0xc] sm:$0xf]
      %v3075 = vld [vmem:[%s11 + $0x10] sm:$0xf]
      %v3076 = vld [vmem:[%s11 + $0x14] sm:$0xf]
      %v3077 = vld [vmem:[%s11 + $0x18] sm:$0xf]
      %v3078 = vld [vmem:[%s11 + $0x1c] sm:$0xf]
      %v3079 = vld [vmem:[%s11 + $0x20] sm:$0xf]
      %v3080 = vld [vmem:[%s11 + $0x24] sm:$0xf]
      %v3081 = vld [vmem:[%s11 + $0x28] sm:$0xf]
      %v3082 = vld [vmem:[%s11 + $0x2c] sm:$0xf]
      %v3083 = vld [vmem:[%s11 + $0x30] sm:$0xf]
      %v3084 = vld [vmem:[%s11 + $0x34] sm:$0xf]
      %v3085 = vld [vmem:[%s11 + $0x38] sm:$0xf]
      %v3086 = vld [vmem:[%s11 + $0x3c] sm:$0xf]
      %v3087 = vld [vmem:[%s12] sm:$0x1]
      %v3089 = vlaneseq
      %v3090 = vshrl.u32 %v3089, 7
      %v3091 = vsub.s32 0, %v3090
      %v3092 = vrot.slane %v3087, %v3091
      %v3110 = vunpack.c.l.b16 %v3071
      %v3111 = vunpack.c.l.b16 %v3072
      %v3112 = vunpack.c.l.b16 %v3073
      %v3113 = vunpack.c.l.b16 %v3074
      %v3114 = vunpack.c.l.b16 %v3075
      %v3115 = vunpack.c.l.b16 %v3076
      %v3116 = vunpack.c.l.b16 %v3077
      %v3117 = vunpack.c.l.b16 %v3078
      %v3118 = vunpack.c.l.b16 %v3079
      %v3119 = vunpack.c.l.b16 %v3080
      %v3120 = vunpack.c.l.b16 %v3081
      %v3121 = vunpack.c.l.b16 %v3082
      %v3122 = vunpack.c.l.b16 %v3083
      %v3123 = vunpack.c.l.b16 %v3084
      %v3124 = vunpack.c.l.b16 %v3085
      %v3125 = vunpack.c.l.b16 %v3086
      %v3126 = vpack.c.b16 %v3111, %v3110
      %v3127 = vpack.c.b16 %v3113, %v3112
      %v3128 = vpack.c.b16 %v3115, %v3114
      %v3129 = vpack.c.b16 %v3117, %v3116
      %v3130 = vpack.c.b16 %v3119, %v3118
      %v3131 = vpack.c.b16 %v3121, %v3120
      %v3132 = vpack.c.b16 %v3123, %v3122
      %v3133 = vpack.c.b16 %v3125, %v3124
      %3142 = vmatprep.subr.bf16.mxu0 0
      %3143 = vmatpush1.bf16.msra.mxu0 %v3126
      %3144 = vmatprep.subr.bf16.mxu0 0
      %3145 = vmatpush1.bf16.msra.mxu0 %v3127
      %3146 = vmatprep.subr.bf16.mxu0 0
      %3147 = vmatpush1.bf16.msra.mxu0 %v3128
      %3148 = vmatprep.subr.bf16.mxu0 0
      %3149 = vmatpush1.bf16.msra.mxu0 %v3129
      %3150 = vmatprep.subr.bf16.mxu0 0
      %3151 = vmatpush1.bf16.msra.mxu0 %v3130
      %3152 = vmatprep.subr.bf16.mxu0 0
      %3153 = vmatpush1.bf16.msra.mxu0 %v3131
      %3154 = vmatprep.subr.bf16.mxu0 0
      %3155 = vmatpush1.bf16.msra.mxu0 %v3132
      %3156 = vmatprep.subr.bf16.mxu0 0
      %3157 = vmatpush1.bf16.msra.mxu0 %v3133
      %3158 = vmatprep.subr.bf16.mxu0 0
      %3159 = vmatpush1.bf16.msra.mxu0 0
      %3160 = vmatprep.subr.bf16.mxu0 0
      %3161 = vmatpush1.bf16.msra.mxu0 0
      %3162 = vmatprep.subr.bf16.mxu0 0
      %3163 = vmatpush1.bf16.msra.mxu0 0
      %3164 = vmatprep.subr.bf16.mxu0 0
      %3165 = vmatpush1.bf16.msra.mxu0 0
      %3166 = vmatprep.subr.bf16.mxu0 0
      %3167 = vmatpush1.bf16.msra.mxu0 0
      %3168 = vmatprep.subr.bf16.mxu0 0
      %3169 = vmatpush1.bf16.msra.mxu0 0
      %3170 = vmatprep.subr.bf16.mxu0 0
      %3171 = vmatpush1.bf16.msra.mxu0 0
      %3172 = vmatprep.subr.bf16.mxu0 0
      %3173 = vmatpush1.bf16.msra.mxu0 0
      %3174 = vmatprep.mubr.bf16.mxu0 0
      %3175 = vmatmul.mubr.bf16.gmra.mrb[0].mxu0 %v3070
      %v3176 = vpop.f32.mrb[0].mxu0
      %v3177 = vadd.f32 %v3092, %v3176
      %v3178 = vpop.f32.mrb[0].mxu0
      %v3179 = vpop.f32.mrb[0].mxu0
      %v3180 = vpop.f32.mrb[0].mxu0
      %3181 = vdwg.mxu0
      %v3182 = vadd.f32 %v3177, %v2354
      %v3183 = vmax.f32 %v3182, 0.0
      %v3184 = vld [vmem:[%s6] sm:$0xff]
      %v3185 = vld [vmem:[%s6 + $0x8] sm:$0xff]
      %v3186 = vld [vmem:[%s6 + $0x10] sm:$0xff]
      %v3187 = vld [vmem:[%s6 + $0x18] sm:$0xff]
      %v3188 = vld [vmem:[%s6 + $0x20] sm:$0xff]
      %v3189 = vld [vmem:[%s6 + $0x28] sm:$0xff]
      %v3190 = vld [vmem:[%s6 + $0x30] sm:$0xff]
      %v3191 = vld [vmem:[%s6 + $0x38] sm:$0xff]
      %v3192 = vld [vmem:[%s6 + $0x40] sm:$0xff]
      %v3193 = vld [vmem:[%s6 + $0x48] sm:$0xff]
      %v3194 = vld [vmem:[%s6 + $0x50] sm:$0xff]
      %v3195 = vld [vmem:[%s6 + $0x58] sm:$0xff]
      %v3196 = vld [vmem:[%s6 + $0x60] sm:$0xff]
      %v3197 = vld [vmem:[%s6 + $0x68] sm:$0xff]
      %v3198 = vld [vmem:[%s6 + $0x70] sm:$0xff]
      %v3199 = vld [vmem:[%s6 + $0x78] sm:$0xff]
      %v3200 = vld [vmem:[%s6 + $0x80] sm:$0xff]
      %v3201 = vld [vmem:[%s6 + $0x88] sm:$0xff]
      %v3202 = vld [vmem:[%s6 + $0x90] sm:$0xff]
      %v3203 = vld [vmem:[%s6 + $0x98] sm:$0xff]
      %v3204 = vld [vmem:[%s6 + $0xa0] sm:$0xff]
      %v3205 = vld [vmem:[%s6 + $0xa8] sm:$0xff]
      %v3206 = vld [vmem:[%s6 + $0xb0] sm:$0xff]
      %v3207 = vld [vmem:[%s6 + $0xb8] sm:$0xff]
      %v3208 = vld [vmem:[%s6 + $0xc0] sm:$0xff]
      %v3209 = vld [vmem:[%s6 + $0xc8] sm:$0xff]
      %v3210 = vld [vmem:[%s6 + $0xd0] sm:$0xff]
      %v3211 = vld [vmem:[%s6 + $0xd8] sm:$0xff]
      %v3212 = vld [vmem:[%s6 + $0xe0] sm:$0xff]
      %v3213 = vld [vmem:[%s6 + $0xe8] sm:$0xff]
      %v3214 = vld [vmem:[%s6 + $0xf0] sm:$0xff]
      %v3215 = vld [vmem:[%s6 + $0xf8] sm:$0xff]
      %v3217 = vsel %vm2639, %v3184, 0
      %v3220 = vsel %vm2639, %v3185, 0
      %v3223 = vsel %vm2639, %v3186, 0
      %v3226 = vsel %vm2639, %v3187, 0
      %v3229 = vsel %vm2639, %v3188, 0
      %v3232 = vsel %vm2639, %v3189, 0
      %v3235 = vsel %vm2639, %v3190, 0
      %v3238 = vsel %vm2639, %v3191, 0
      %v3241 = vsel %vm2639, %v3192, 0
      %v3244 = vsel %vm2639, %v3193, 0
      %v3247 = vsel %vm2639, %v3194, 0
      %v3250 = vsel %vm2639, %v3195, 0
      %v3253 = vsel %vm2639, %v3196, 0
      %v3256 = vsel %vm2639, %v3197, 0
      %v3259 = vsel %vm2639, %v3198, 0
      %v3262 = vsel %vm2639, %v3199, 0
      %v3265 = vsel %vm2639, %v3200, 0
      %v3268 = vsel %vm2639, %v3201, 0
      %v3271 = vsel %vm2639, %v3202, 0
      %v3274 = vsel %vm2639, %v3203, 0
      %v3277 = vsel %vm2639, %v3204, 0
      %v3280 = vsel %vm2639, %v3205, 0
      %v3283 = vsel %vm2639, %v3206, 0
      %v3286 = vsel %vm2639, %v3207, 0
      %v3289 = vsel %vm2639, %v3208, 0
      %v3292 = vsel %vm2639, %v3209, 0
      %v3295 = vsel %vm2639, %v3210, 0
      %v3298 = vsel %vm2639, %v3211, 0
      %v3301 = vsel %vm2639, %v3212, 0
      %v3304 = vsel %vm2639, %v3213, 0
      %v3307 = vsel %vm2639, %v3214, 0
      %v3310 = vsel %vm2639, %v3215, 0
      %vm3312 = vcmask 1043456
      %v3314 = vsel %vm3312, %v3183, 0
      %3316 = vmatprep.subr.mxu0 0.0
      %3317 = vmatpush1.msra.mxu0 %v3314
      %3318 = vmatprep.subr.mxu0 0.0
      %3319 = vmatpush1.msra.mxu0 0.0
      %3320 = vmatprep.subr.mxu0 0.0
      %3321 = vmatpush1.msra.mxu0 0.0
      %3322 = vmatprep.subr.mxu0 0.0
      %3323 = vmatpush1.msra.mxu0 0.0
      %3324 = vmatprep.subr.mxu0 0.0
      %3325 = vmatpush1.msra.mxu0 0.0
      %3326 = vmatprep.subr.mxu0 0.0
      %3327 = vmatpush1.msra.mxu0 0.0
      %3328 = vmatprep.subr.mxu0 0.0
      %3329 = vmatpush1.msra.mxu0 0.0
      %3330 = vmatprep.subr.mxu0 0.0
      %3331 = vmatpush1.msra.mxu0 0.0
      %3332 = vmatprep.subr.mxu0 0.0
      %3333 = vmatpush1.msra.mxu0 0.0
      %3334 = vmatprep.subr.mxu0 0.0
      %3335 = vmatpush1.msra.mxu0 0.0
      %3336 = vmatprep.subr.mxu0 0.0
      %3337 = vmatpush1.msra.mxu0 0.0
      %3338 = vmatprep.subr.mxu0 0.0
      %3339 = vmatpush1.msra.mxu0 0.0
      %3340 = vmatprep.subr.mxu0 0.0
      %3341 = vmatpush1.msra.mxu0 0.0
      %3342 = vmatprep.subr.mxu0 0.0
      %3343 = vmatpush1.msra.mxu0 0.0
      %3344 = vmatprep.subr.mxu0 0.0
      %3345 = vmatpush1.msra.mxu0 0.0
      %3346 = vmatprep.subr.mxu0 0.0
      %3347 = vmatpush1.msra.mxu0 0.0
      %3348 = vmatprep.subr.mxu0 0.0
      %3349 = vmatpush1.msra.mxu0 0.0
      %3350 = vmatprep.subr.mxu0 0.0
      %3351 = vmatpush1.msra.mxu0 0.0
      %3352 = vmatprep.subr.mxu0 0.0
      %3353 = vmatpush1.msra.mxu0 0.0
      %3354 = vmatprep.subr.mxu0 0.0
      %3355 = vmatpush1.msra.mxu0 0.0
      %3356 = vmatprep.subr.mxu0 0.0
      %3357 = vmatpush1.msra.mxu0 0.0
      %3358 = vmatprep.subr.mxu0 0.0
      %3359 = vmatpush1.msra.mxu0 0.0
      %3360 = vmatprep.subr.mxu0 0.0
      %3361 = vmatpush1.msra.mxu0 0.0
      %3362 = vmatprep.subr.mxu0 0.0
      %3363 = vmatpush1.msra.mxu0 0.0
      %3364 = vmatprep.subr.mxu0 0.0
      %3365 = vmatpush1.msra.mxu0 0.0
      %3366 = vmatprep.subr.mxu0 0.0
      %3367 = vmatpush1.msra.mxu0 0.0
      %3368 = vmatprep.subr.mxu0 0.0
      %3369 = vmatpush1.msra.mxu0 0.0
      %3370 = vmatprep.subr.mxu0 0.0
      %3371 = vmatpush1.msra.mxu0 0.0
      %3372 = vmatprep.subr.mxu0 0.0
      %3373 = vmatpush1.msra.mxu0 0.0
      %3374 = vmatprep.subr.mxu0 0.0
      %3375 = vmatpush1.msra.mxu0 0.0
      %3376 = vmatprep.subr.mxu0 0.0
      %3377 = vmatpush1.msra.mxu0 0.0
      %3378 = vmatprep.subr.mxu0 0.0
      %3379 = vmatpush1.msra.mxu0 0.0
      %3380 = vmatprep.mubr.f32.mxu0 0.0
      %3381 = vmatmul.mubr.f32.gmra.mrb[0].mxu0 %v3217
      %v3382 = vpop.f32.mrb[0].mxu0
      %v3383 = vadd.f32 0.0, %v3382
      %v3384 = vpop.f32.mrb[0].mxu0
      %3385 = vmatprep.mubr.f32.mxu0 0.0
      %3386 = vmatmul.mubr.f32.gmra.mrb[0].mxu0 %v3220
      %v3387 = vpop.f32.mrb[0].mxu0
      %v3388 = vadd.f32 0.0, %v3387
      %v3389 = vpop.f32.mrb[0].mxu0
      %3390 = vmatprep.mubr.f32.mxu0 0.0
      %3391 = vmatmul.mubr.f32.gmra.mrb[0].mxu0 %v3223
      %v3392 = vpop.f32.mrb[0].mxu0
      %v3393 = vadd.f32 0.0, %v3392
      %v3394 = vpop.f32.mrb[0].mxu0
      %3395 = vmatprep.mubr.f32.mxu0 0.0
      %3396 = vmatmul.mubr.f32.gmra.mrb[0].mxu0 %v3226
      %v3397 = vpop.f32.mrb[0].mxu0
      %v3398 = vadd.f32 0.0, %v3397
      %v3399 = vpop.f32.mrb[0].mxu0
      %3400 = vmatprep.mubr.f32.mxu0 0.0
      %3401 = vmatmul.mubr.f32.gmra.mrb[0].mxu0 %v3229
      %v3402 = vpop.f32.mrb[0].mxu0
      %v3403 = vadd.f32 0.0, %v3402
      %v3404 = vpop.f32.mrb[0].mxu0
      %3405 = vmatprep.mubr.f32.mxu0 0.0
      %3406 = vmatmul.mubr.f32.gmra.mrb[0].mxu0 %v3232
      %v3407 = vpop.f32.mrb[0].mxu0
      %v3408 = vadd.f32 0.0, %v3407
      %v3409 = vpop.f32.mrb[0].mxu0
      %3410 = vmatprep.mubr.f32.mxu0 0.0
      %3411 = vmatmul.mubr.f32.gmra.mrb[0].mxu0 %v3235
      %v3412 = vpop.f32.mrb[0].mxu0
      %v3413 = vadd.f32 0.0, %v3412
      %v3414 = vpop.f32.mrb[0].mxu0
      %3415 = vmatprep.mubr.f32.mxu0 0.0
      %3416 = vmatmul.mubr.f32.gmra.mrb[0].mxu0 %v3238
      %v3417 = vpop.f32.mrb[0].mxu0
      %v3418 = vadd.f32 0.0, %v3417
      %v3419 = vpop.f32.mrb[0].mxu0
      %3420 = vmatprep.mubr.f32.mxu0 0.0
      %3421 = vmatmul.mubr.f32.gmra.mrb[0].mxu0 %v3241
      %v3422 = vpop.f32.mrb[0].mxu0
      %v3423 = vadd.f32 0.0, %v3422
      %v3424 = vpop.f32.mrb[0].mxu0
      %3425 = vmatprep.mubr.f32.mxu0 0.0
      %3426 = vmatmul.mubr.f32.gmra.mrb[0].mxu0 %v3244
      %v3427 = vpop.f32.mrb[0].mxu0
      %v3428 = vadd.f32 0.0, %v3427
      %v3429 = vpop.f32.mrb[0].mxu0
      %3430 = vmatprep.mubr.f32.mxu0 0.0
      %3431 = vmatmul.mubr.f32.gmra.mrb[0].mxu0 %v3247
      %v3432 = vpop.f32.mrb[0].mxu0
      %v3433 = vadd.f32 0.0, %v3432
      %v3434 = vpop.f32.mrb[0].mxu0
      %3435 = vmatprep.mubr.f32.mxu0 0.0
      %3436 = vmatmul.mubr.f32.gmra.mrb[0].mxu0 %v3250
      %v3437 = vpop.f32.mrb[0].mxu0
      %v3438 = vadd.f32 0.0, %v3437
      %v3439 = vpop.f32.mrb[0].mxu0
      %3440 = vmatprep.mubr.f32.mxu0 0.0
      %3441 = vmatmul.mubr.f32.gmra.mrb[0].mxu0 %v3253
      %v3442 = vpop.f32.mrb[0].mxu0
      %v3443 = vadd.f32 0.0, %v3442
      %v3444 = vpop.f32.mrb[0].mxu0
      %3445 = vmatprep.mubr.f32.mxu0 0.0
      %3446 = vmatmul.mubr.f32.gmra.mrb[0].mxu0 %v3256
      %v3447 = vpop.f32.mrb[0].mxu0
      %v3448 = vadd.f32 0.0, %v3447
      %v3449 = vpop.f32.mrb[0].mxu0
      %3450 = vmatprep.mubr.f32.mxu0 0.0
      %3451 = vmatmul.mubr.f32.gmra.mrb[0].mxu0 %v3259
      %v3452 = vpop.f32.mrb[0].mxu0
      %v3453 = vadd.f32 0.0, %v3452
      %v3454 = vpop.f32.mrb[0].mxu0
      %3455 = vmatprep.mubr.f32.mxu0 0.0
      %3456 = vmatmul.mubr.f32.gmra.mrb[0].mxu0 %v3262
      %v3457 = vpop.f32.mrb[0].mxu0
      %v3458 = vadd.f32 0.0, %v3457
      %v3459 = vpop.f32.mrb[0].mxu0
      %3460 = vmatprep.mubr.f32.mxu0 0.0
      %3461 = vmatmul.mubr.f32.gmra.mrb[0].mxu0 %v3265
      %v3462 = vpop.f32.mrb[0].mxu0
      %v3463 = vadd.f32 0.0, %v3462
      %v3464 = vpop.f32.mrb[0].mxu0
      %3465 = vmatprep.mubr.f32.mxu0 0.0
      %3466 = vmatmul.mubr.f32.gmra.mrb[0].mxu0 %v3268
      %v3467 = vpop.f32.mrb[0].mxu0
      %v3468 = vadd.f32 0.0, %v3467
      %v3469 = vpop.f32.mrb[0].mxu0
      %3470 = vmatprep.mubr.f32.mxu0 0.0
      %3471 = vmatmul.mubr.f32.gmra.mrb[0].mxu0 %v3271
      %v3472 = vpop.f32.mrb[0].mxu0
      %v3473 = vadd.f32 0.0, %v3472
      %v3474 = vpop.f32.mrb[0].mxu0
      %3475 = vmatprep.mubr.f32.mxu0 0.0
      %3476 = vmatmul.mubr.f32.gmra.mrb[0].mxu0 %v3274
      %v3477 = vpop.f32.mrb[0].mxu0
      %v3478 = vadd.f32 0.0, %v3477
      %v3479 = vpop.f32.mrb[0].mxu0
      %3480 = vmatprep.mubr.f32.mxu0 0.0
      %3481 = vmatmul.mubr.f32.gmra.mrb[0].mxu0 %v3277
      %v3482 = vpop.f32.mrb[0].mxu0
      %v3483 = vadd.f32 0.0, %v3482
      %v3484 = vpop.f32.mrb[0].mxu0
      %3485 = vmatprep.mubr.f32.mxu0 0.0
      %3486 = vmatmul.mubr.f32.gmra.mrb[0].mxu0 %v3280
      %v3487 = vpop.f32.mrb[0].mxu0
      %v3488 = vadd.f32 0.0, %v3487
      %v3489 = vpop.f32.mrb[0].mxu0
      %3490 = vmatprep.mubr.f32.mxu0 0.0
      %3491 = vmatmul.mubr.f32.gmra.mrb[0].mxu0 %v3283
      %v3492 = vpop.f32.mrb[0].mxu0
      %v3493 = vadd.f32 0.0, %v3492
      %v3494 = vpop.f32.mrb[0].mxu0
      %3495 = vmatprep.mubr.f32.mxu0 0.0
      %3496 = vmatmul.mubr.f32.gmra.mrb[0].mxu0 %v3286
      %v3497 = vpop.f32.mrb[0].mxu0
      %v3498 = vadd.f32 0.0, %v3497
      %v3499 = vpop.f32.mrb[0].mxu0
      %3500 = vmatprep.mubr.f32.mxu0 0.0
      %3501 = vmatmul.mubr.f32.gmra.mrb[0].mxu0 %v3289
      %v3502 = vpop.f32.mrb[0].mxu0
      %v3503 = vadd.f32 0.0, %v3502
      %v3504 = vpop.f32.mrb[0].mxu0
      %3505 = vmatprep.mubr.f32.mxu0 0.0
      %3506 = vmatmul.mubr.f32.gmra.mrb[0].mxu0 %v3292
      %v3507 = vpop.f32.mrb[0].mxu0
      %v3508 = vadd.f32 0.0, %v3507
      %v3509 = vpop.f32.mrb[0].mxu0
      %3510 = vmatprep.mubr.f32.mxu0 0.0
      %3511 = vmatmul.mubr.f32.gmra.mrb[0].mxu0 %v3295
      %v3512 = vpop.f32.mrb[0].mxu0
      %v3513 = vadd.f32 0.0, %v3512
      %v3514 = vpop.f32.mrb[0].mxu0
      %3515 = vmatprep.mubr.f32.mxu0 0.0
      %3516 = vmatmul.mubr.f32.gmra.mrb[0].mxu0 %v3298
      %v3517 = vpop.f32.mrb[0].mxu0
      %v3518 = vadd.f32 0.0, %v3517
      %v3519 = vpop.f32.mrb[0].mxu0
      %3520 = vmatprep.mubr.f32.mxu0 0.0
      %3521 = vmatmul.mubr.f32.gmra.mrb[0].mxu0 %v3301
      %v3522 = vpop.f32.mrb[0].mxu0
      %v3523 = vadd.f32 0.0, %v3522
      %v3524 = vpop.f32.mrb[0].mxu0
      %3525 = vmatprep.mubr.f32.mxu0 0.0
      %3526 = vmatmul.mubr.f32.gmra.mrb[0].mxu0 %v3304
      %v3527 = vpop.f32.mrb[0].mxu0
      %v3528 = vadd.f32 0.0, %v3527
      %v3529 = vpop.f32.mrb[0].mxu0
      %3530 = vmatprep.mubr.f32.mxu0 0.0
      %3531 = vmatmul.mubr.f32.gmra.mrb[0].mxu0 %v3307
      %v3532 = vpop.f32.mrb[0].mxu0
      %v3533 = vadd.f32 0.0, %v3532
      %v3534 = vpop.f32.mrb[0].mxu0
      %3535 = vmatprep.mubr.f32.mxu0 0.0
      %3536 = vmatmul.mubr.f32.gmra.mrb[0].mxu0 %v3310
      %v3537 = vpop.f32.mrb[0].mxu0
      %v3538 = vadd.f32 0.0, %v3537
      %v3539 = vpop.f32.mrb[0].mxu0
      %3540 = vdwg.mxu0
      %v3541 = vmul.f32 %v852, %v3383
      %v3542 = vmul.f32 %v853, %v3388
      %v3543 = vmul.f32 %v854, %v3393
      %v3544 = vmul.f32 %v855, %v3398
      %v3545 = vmul.f32 %v856, %v3403
      %v3546 = vmul.f32 %v857, %v3408
      %v3547 = vmul.f32 %v858, %v3413
      %v3548 = vmul.f32 %v859, %v3418
      %v3549 = vmul.f32 %v860, %v3423
      %v3550 = vmul.f32 %v861, %v3428
      %v3551 = vmul.f32 %v862, %v3433
      %v3552 = vmul.f32 %v863, %v3438
      %v3553 = vmul.f32 %v864, %v3443
      %v3554 = vmul.f32 %v865, %v3448
      %v3555 = vmul.f32 %v866, %v3453
      %v3556 = vmul.f32 %v867, %v3458
      %v3557 = vmul.f32 %v868, %v3463
      %v3558 = vmul.f32 %v869, %v3468
      %v3559 = vmul.f32 %v870, %v3473
      %v3560 = vmul.f32 %v871, %v3478
      %v3561 = vmul.f32 %v872, %v3483
      %v3562 = vmul.f32 %v873, %v3488
      %v3563 = vmul.f32 %v874, %v3493
      %v3564 = vmul.f32 %v875, %v3498
      %v3565 = vmul.f32 %v876, %v3503
      %v3566 = vmul.f32 %v877, %v3508
      %v3567 = vmul.f32 %v878, %v3513
      %v3568 = vmul.f32 %v879, %v3518
      %v3569 = vmul.f32 %v880, %v3523
      %v3570 = vmul.f32 %v881, %v3528
      %v3571 = vmul.f32 %v882, %v3533
      %v3572 = vmul.f32 %v883, %v3538
      %v3573 = vadd.f32 %v3541, %v852
      %v3574 = vadd.f32 %v3542, %v853
      %v3575 = vadd.f32 %v3543, %v854
      %v3576 = vadd.f32 %v3544, %v855
      %v3577 = vadd.f32 %v3545, %v856
      %v3578 = vadd.f32 %v3546, %v857
      %v3579 = vadd.f32 %v3547, %v858
      %v3580 = vadd.f32 %v3548, %v859
      %v3581 = vadd.f32 %v3549, %v860
      %v3582 = vadd.f32 %v3550, %v861
      %v3583 = vadd.f32 %v3551, %v862
      %v3584 = vadd.f32 %v3552, %v863
      %v3585 = vadd.f32 %v3553, %v864
      %v3586 = vadd.f32 %v3554, %v865
      %v3587 = vadd.f32 %v3555, %v866
      %v3588 = vadd.f32 %v3556, %v867
      %v3589 = vadd.f32 %v3557, %v868
      %v3590 = vadd.f32 %v3558, %v869
      %v3591 = vadd.f32 %v3559, %v870
      %v3592 = vadd.f32 %v3560, %v871
      %v3593 = vadd.f32 %v3561, %v872
      %v3594 = vadd.f32 %v3562, %v873
      %v3595 = vadd.f32 %v3563, %v874
      %v3596 = vadd.f32 %v3564, %v875
      %v3597 = vadd.f32 %v3565, %v876
      %v3598 = vadd.f32 %v3566, %v877
      %v3599 = vadd.f32 %v3567, %v878
      %v3600 = vadd.f32 %v3568, %v879
      %v3601 = vadd.f32 %v3569, %v880
      %v3602 = vadd.f32 %v3570, %v881
      %v3603 = vadd.f32 %v3571, %v882
      %v3604 = vadd.f32 %v3572, %v883
      %v3605 = vld [vmem:[%s14] sm:$0xf]
      %v3606 = vld [vmem:[%s14 + $0x4] sm:$0xf]
      %v3607 = vld [vmem:[%s14 + $0x8] sm:$0xf]
      %v3608 = vld [vmem:[%s14 + $0xc] sm:$0xf]
      %v3609 = vld [vmem:[%s14 + $0x10] sm:$0xf]
      %v3610 = vld [vmem:[%s14 + $0x14] sm:$0xf]
      %v3611 = vld [vmem:[%s14 + $0x18] sm:$0xf]
      %v3612 = vld [vmem:[%s14 + $0x1c] sm:$0xf]
      %v3613 = vld [vmem:[%s14 + $0x20] sm:$0xf]
      %v3614 = vld [vmem:[%s14 + $0x24] sm:$0xf]
      %v3615 = vld [vmem:[%s14 + $0x28] sm:$0xf]
      %v3616 = vld [vmem:[%s14 + $0x2c] sm:$0xf]
      %v3617 = vld [vmem:[%s14 + $0x30] sm:$0xf]
      %v3618 = vld [vmem:[%s14 + $0x34] sm:$0xf]
      %v3619 = vld [vmem:[%s14 + $0x38] sm:$0xf]
      %v3620 = vld [vmem:[%s14 + $0x3c] sm:$0xf]
      %v3621 = vld [vmem:[%s15] sm:$0x1]
      %v3623 = vlaneseq
      %v3624 = vshrl.u32 %v3623, 7
      %v3625 = vsub.s32 0, %v3624
      %v3626 = vrot.slane %v3621, %v3625
      %v3644 = vunpack.c.l.b16 %v3605
      %v3645 = vunpack.c.l.b16 %v3606
      %v3646 = vunpack.c.l.b16 %v3607
      %v3647 = vunpack.c.l.b16 %v3608
      %v3648 = vunpack.c.l.b16 %v3609
      %v3649 = vunpack.c.l.b16 %v3610
      %v3650 = vunpack.c.l.b16 %v3611
      %v3651 = vunpack.c.l.b16 %v3612
      %v3652 = vunpack.c.l.b16 %v3613
      %v3653 = vunpack.c.l.b16 %v3614
      %v3654 = vunpack.c.l.b16 %v3615
      %v3655 = vunpack.c.l.b16 %v3616
      %v3656 = vunpack.c.l.b16 %v3617
      %v3657 = vunpack.c.l.b16 %v3618
      %v3658 = vunpack.c.l.b16 %v3619
      %v3659 = vunpack.c.l.b16 %v3620
      %v3660 = vpack.c.b16 %v3645, %v3644
      %v3661 = vpack.c.b16 %v3647, %v3646
      %v3662 = vpack.c.b16 %v3649, %v3648
      %v3663 = vpack.c.b16 %v3651, %v3650
      %v3664 = vpack.c.b16 %v3653, %v3652
      %v3665 = vpack.c.b16 %v3655, %v3654
      %v3666 = vpack.c.b16 %v3657, %v3656
      %v3667 = vpack.c.b16 %v3659, %v3658
      %3676 = vmatprep.subr.bf16.mxu0 0
      %3677 = vmatpush1.bf16.msra.mxu0 %v3660
      %3678 = vmatprep.subr.bf16.mxu0 0
      %3679 = vmatpush1.bf16.msra.mxu0 %v3661
      %3680 = vmatprep.subr.bf16.mxu0 0
      %3681 = vmatpush1.bf16.msra.mxu0 %v3662
      %3682 = vmatprep.subr.bf16.mxu0 0
      %3683 = vmatpush1.bf16.msra.mxu0 %v3663
      %3684 = vmatprep.subr.bf16.mxu0 0
      %3685 = vmatpush1.bf16.msra.mxu0 %v3664
      %3686 = vmatprep.subr.bf16.mxu0 0
      %3687 = vmatpush1.bf16.msra.mxu0 %v3665
      %3688 = vmatprep.subr.bf16.mxu0 0
      %3689 = vmatpush1.bf16.msra.mxu0 %v3666
      %3690 = vmatprep.subr.bf16.mxu0 0
      %3691 = vmatpush1.bf16.msra.mxu0 %v3667
      %3692 = vmatprep.subr.bf16.mxu0 0
      %3693 = vmatpush1.bf16.msra.mxu0 0
      %3694 = vmatprep.subr.bf16.mxu0 0
      %3695 = vmatpush1.bf16.msra.mxu0 0
      %3696 = vmatprep.subr.bf16.mxu0 0
      %3697 = vmatpush1.bf16.msra.mxu0 0
      %3698 = vmatprep.subr.bf16.mxu0 0
      %3699 = vmatpush1.bf16.msra.mxu0 0
      %3700 = vmatprep.subr.bf16.mxu0 0
      %3701 = vmatpush1.bf16.msra.mxu0 0
      %3702 = vmatprep.subr.bf16.mxu0 0
      %3703 = vmatpush1.bf16.msra.mxu0 0
      %3704 = vmatprep.subr.bf16.mxu0 0
      %3705 = vmatpush1.bf16.msra.mxu0 0
      %3706 = vmatprep.subr.bf16.mxu0 0
      %3707 = vmatpush1.bf16.msra.mxu0 0
      %3708 = vmatprep.mubr.bf16.mxu0 0
      %3709 = vmatmul.mubr.bf16.gmra.mrb[0].mxu0 %v1387
      %v3710 = vpop.f32.mrb[0].mxu0
      %v3711 = vadd.f32 %v3626, %v3710
      %v3712 = vpop.f32.mrb[0].mxu0
      %v3713 = vpop.f32.mrb[0].mxu0
      %v3714 = vadd.f32 %v3626, %v3713
      %v3715 = vpop.f32.mrb[0].mxu0
      %3716 = vmatprep.mubr.bf16.mxu0 0
      %3717 = vmatmul.mubr.bf16.gmra.mrb[0].mxu0 %v1388
      %v3718 = vpop.f32.mrb[0].mxu0
      %v3719 = vadd.f32 %v3626, %v3718
      %v3720 = vpop.f32.mrb[0].mxu0
      %v3721 = vpop.f32.mrb[0].mxu0
      %v3722 = vadd.f32 %v3626, %v3721
      %v3723 = vpop.f32.mrb[0].mxu0
      %3724 = vmatprep.mubr.bf16.mxu0 0
      %3725 = vmatmul.mubr.bf16.gmra.mrb[0].mxu0 %v1389
      %v3726 = vpop.f32.mrb[0].mxu0
      %v3727 = vadd.f32 %v3626, %v3726
      %v3728 = vpop.f32.mrb[0].mxu0
      %v3729 = vpop.f32.mrb[0].mxu0
      %v3730 = vadd.f32 %v3626, %v3729
      %v3731 = vpop.f32.mrb[0].mxu0
      %3732 = vmatprep.mubr.bf16.mxu0 0
      %3733 = vmatmul.mubr.bf16.gmra.mrb[0].mxu0 %v1390
      %v3734 = vpop.f32.mrb[0].mxu0
      %v3735 = vadd.f32 %v3626, %v3734
      %v3736 = vpop.f32.mrb[0].mxu0
      %v3737 = vpop.f32.mrb[0].mxu0
      %v3738 = vadd.f32 %v3626, %v3737
      %v3739 = vpop.f32.mrb[0].mxu0
      %3740 = vmatprep.mubr.bf16.mxu0 0
      %3741 = vmatmul.mubr.bf16.gmra.mrb[0].mxu0 %v1391
      %v3742 = vpop.f32.mrb[0].mxu0
      %v3743 = vadd.f32 %v3626, %v3742
      %v3744 = vpop.f32.mrb[0].mxu0
      %v3745 = vpop.f32.mrb[0].mxu0
      %v3746 = vadd.f32 %v3626, %v3745
      %v3747 = vpop.f32.mrb[0].mxu0
      %3748 = vmatprep.mubr.bf16.mxu0 0
      %3749 = vmatmul.mubr.bf16.gmra.mrb[0].mxu0 %v1392
      %v3750 = vpop.f32.mrb[0].mxu0
      %v3751 = vadd.f32 %v3626, %v3750
      %v3752 = vpop.f32.mrb[0].mxu0
      %v3753 = vpop.f32.mrb[0].mxu0
      %v3754 = vadd.f32 %v3626, %v3753
      %v3755 = vpop.f32.mrb[0].mxu0
      %3756 = vmatprep.mubr.bf16.mxu0 0
      %3757 = vmatmul.mubr.bf16.gmra.mrb[0].mxu0 %v1393
      %v3758 = vpop.f32.mrb[0].mxu0
      %v3759 = vadd.f32 %v3626, %v3758
      %v3760 = vpop.f32.mrb[0].mxu0
      %v3761 = vpop.f32.mrb[0].mxu0
      %v3762 = vadd.f32 %v3626, %v3761
      %v3763 = vpop.f32.mrb[0].mxu0
      %3764 = vmatprep.mubr.bf16.mxu0 0
      %3765 = vmatmul.mubr.bf16.gmra.mrb[0].mxu0 %v1394
      %v3766 = vpop.f32.mrb[0].mxu0
      %v3767 = vadd.f32 %v3626, %v3766
      %v3768 = vpop.f32.mrb[0].mxu0
      %v3769 = vpop.f32.mrb[0].mxu0
      %v3770 = vadd.f32 %v3626, %v3769
      %v3771 = vpop.f32.mrb[0].mxu0
      %3772 = vmatprep.mubr.bf16.mxu0 0
      %3773 = vmatmul.mubr.bf16.gmra.mrb[0].mxu0 %v1395
      %v3774 = vpop.f32.mrb[0].mxu0
      %v3775 = vadd.f32 %v3626, %v3774
      %v3776 = vpop.f32.mrb[0].mxu0
      %v3777 = vpop.f32.mrb[0].mxu0
      %v3778 = vadd.f32 %v3626, %v3777
      %v3779 = vpop.f32.mrb[0].mxu0
      %3780 = vmatprep.mubr.bf16.mxu0 0
      %3781 = vmatmul.mubr.bf16.gmra.mrb[0].mxu0 %v1396
      %v3782 = vpop.f32.mrb[0].mxu0
      %v3783 = vadd.f32 %v3626, %v3782
      %v3784 = vpop.f32.mrb[0].mxu0
      %v3785 = vpop.f32.mrb[0].mxu0
      %v3786 = vadd.f32 %v3626, %v3785
      %v3787 = vpop.f32.mrb[0].mxu0
      %3788 = vmatprep.mubr.bf16.mxu0 0
      %3789 = vmatmul.mubr.bf16.gmra.mrb[0].mxu0 %v1397
      %v3790 = vpop.f32.mrb[0].mxu0
      %v3791 = vadd.f32 %v3626, %v3790
      %v3792 = vpop.f32.mrb[0].mxu0
      %v3793 = vpop.f32.mrb[0].mxu0
      %v3794 = vadd.f32 %v3626, %v3793
      %v3795 = vpop.f32.mrb[0].mxu0
      %3796 = vmatprep.mubr.bf16.mxu0 0
      %3797 = vmatmul.mubr.bf16.gmra.mrb[0].mxu0 %v1398
      %v3798 = vpop.f32.mrb[0].mxu0
      %v3799 = vadd.f32 %v3626, %v3798
      %v3800 = vpop.f32.mrb[0].mxu0
      %v3801 = vpop.f32.mrb[0].mxu0
      %v3802 = vadd.f32 %v3626, %v3801
      %v3803 = vpop.f32.mrb[0].mxu0
      %3804 = vmatprep.mubr.bf16.mxu0 0
      %3805 = vmatmul.mubr.bf16.gmra.mrb[0].mxu0 %v1399
      %v3806 = vpop.f32.mrb[0].mxu0
      %v3807 = vadd.f32 %v3626, %v3806
      %v3808 = vpop.f32.mrb[0].mxu0
      %v3809 = vpop.f32.mrb[0].mxu0
      %v3810 = vadd.f32 %v3626, %v3809
      %v3811 = vpop.f32.mrb[0].mxu0
      %3812 = vmatprep.mubr.bf16.mxu0 0
      %3813 = vmatmul.mubr.bf16.gmra.mrb[0].mxu0 %v1400
      %v3814 = vpop.f32.mrb[0].mxu0
      %v3815 = vadd.f32 %v3626, %v3814
      %v3816 = vpop.f32.mrb[0].mxu0
      %v3817 = vpop.f32.mrb[0].mxu0
      %v3818 = vadd.f32 %v3626, %v3817
      %v3819 = vpop.f32.mrb[0].mxu0
      %3820 = vmatprep.mubr.bf16.mxu0 0
      %3821 = vmatmul.mubr.bf16.gmra.mrb[0].mxu0 %v1401
      %v3822 = vpop.f32.mrb[0].mxu0
      %v3823 = vadd.f32 %v3626, %v3822
      %v3824 = vpop.f32.mrb[0].mxu0
      %v3825 = vpop.f32.mrb[0].mxu0
      %v3826 = vadd.f32 %v3626, %v3825
      %v3827 = vpop.f32.mrb[0].mxu0
      %3828 = vmatprep.mubr.bf16.mxu0 0
      %3829 = vmatmul.mubr.bf16.gmra.mrb[0].mxu0 %v1402
      %v3830 = vpop.f32.mrb[0].mxu0
      %v3831 = vadd.f32 %v3626, %v3830
      %v3832 = vpop.f32.mrb[0].mxu0
      %v3833 = vpop.f32.mrb[0].mxu0
      %v3834 = vadd.f32 %v3626, %v3833
      %v3835 = vpop.f32.mrb[0].mxu0
      %3836 = vdwg.mxu0
      %v3837 = vld [vmem:[%s16] sm:$0xf]
      %v3838 = vld [vmem:[%s16 + $0x4] sm:$0xf]
      %v3839 = vld [vmem:[%s16 + $0x8] sm:$0xf]
      %v3840 = vld [vmem:[%s16 + $0xc] sm:$0xf]
      %v3841 = vld [vmem:[%s16 + $0x10] sm:$0xf]
      %v3842 = vld [vmem:[%s16 + $0x14] sm:$0xf]
      %v3843 = vld [vmem:[%s16 + $0x18] sm:$0xf]
      %v3844 = vld [vmem:[%s16 + $0x1c] sm:$0xf]
      %v3845 = vld [vmem:[%s16 + $0x20] sm:$0xf]
      %v3846 = vld [vmem:[%s16 + $0x24] sm:$0xf]
      %v3847 = vld [vmem:[%s16 + $0x28] sm:$0xf]
      %v3848 = vld [vmem:[%s16 + $0x2c] sm:$0xf]
      %v3849 = vld [vmem:[%s16 + $0x30] sm:$0xf]
      %v3850 = vld [vmem:[%s16 + $0x34] sm:$0xf]
      %v3851 = vld [vmem:[%s16 + $0x38] sm:$0xf]
      %v3852 = vld [vmem:[%s16 + $0x3c] sm:$0xf]
      %v3853 = vld [vmem:[%s17] sm:$0x1]
      %v3855 = vlaneseq
      %v3856 = vshrl.u32 %v3855, 7
      %v3857 = vsub.s32 0, %v3856
      %v3858 = vrot.slane %v3853, %v3857
      %v3876 = vunpack.c.l.b16 %v3837
      %v3877 = vunpack.c.l.b16 %v3838
      %v3878 = vunpack.c.l.b16 %v3839
      %v3879 = vunpack.c.l.b16 %v3840
      %v3880 = vunpack.c.l.b16 %v3841
      %v3881 = vunpack.c.l.b16 %v3842
      %v3882 = vunpack.c.l.b16 %v3843
      %v3883 = vunpack.c.l.b16 %v3844
      %v3884 = vunpack.c.l.b16 %v3845
      %v3885 = vunpack.c.l.b16 %v3846
      %v3886 = vunpack.c.l.b16 %v3847
      %v3887 = vunpack.c.l.b16 %v3848
      %v3888 = vunpack.c.l.b16 %v3849
      %v3889 = vunpack.c.l.b16 %v3850
      %v3890 = vunpack.c.l.b16 %v3851
      %v3891 = vunpack.c.l.b16 %v3852
      %v3892 = vpack.c.b16 %v3877, %v3876
      %v3893 = vpack.c.b16 %v3879, %v3878
      %v3894 = vpack.c.b16 %v3881, %v3880
      %v3895 = vpack.c.b16 %v3883, %v3882
      %v3896 = vpack.c.b16 %v3885, %v3884
      %v3897 = vpack.c.b16 %v3887, %v3886
      %v3898 = vpack.c.b16 %v3889, %v3888
      %v3899 = vpack.c.b16 %v3891, %v3890
      %3908 = vmatprep.subr.bf16.mxu0 0
      %3909 = vmatpush1.bf16.msra.mxu0 %v3892
      %3910 = vmatprep.subr.bf16.mxu0 0
      %3911 = vmatpush1.bf16.msra.mxu0 %v3893
      %3912 = vmatprep.subr.bf16.mxu0 0
      %3913 = vmatpush1.bf16.msra.mxu0 %v3894
      %3914 = vmatprep.subr.bf16.mxu0 0
      %3915 = vmatpush1.bf16.msra.mxu0 %v3895
      %3916 = vmatprep.subr.bf16.mxu0 0
      %3917 = vmatpush1.bf16.msra.mxu0 %v3896
      %3918 = vmatprep.subr.bf16.mxu0 0
      %3919 = vmatpush1.bf16.msra.mxu0 %v3897
      %3920 = vmatprep.subr.bf16.mxu0 0
      %3921 = vmatpush1.bf16.msra.mxu0 %v3898
      %3922 = vmatprep.subr.bf16.mxu0 0
      %3923 = vmatpush1.bf16.msra.mxu0 %v3899
      %3924 = vmatprep.subr.bf16.mxu0 0
      %3925 = vmatpush1.bf16.msra.mxu0 0
      %3926 = vmatprep.subr.bf16.mxu0 0
      %3927 = vmatpush1.bf16.msra.mxu0 0
      %3928 = vmatprep.subr.bf16.mxu0 0
      %3929 = vmatpush1.bf16.msra.mxu0 0
      %3930 = vmatprep.subr.bf16.mxu0 0
      %3931 = vmatpush1.bf16.msra.mxu0 0
      %3932 = vmatprep.subr.bf16.mxu0 0
      %3933 = vmatpush1.bf16.msra.mxu0 0
      %3934 = vmatprep.subr.bf16.mxu0 0
      %3935 = vmatpush1.bf16.msra.mxu0 0
      %3936 = vmatprep.subr.bf16.mxu0 0
      %3937 = vmatpush1.bf16.msra.mxu0 0
      %3938 = vmatprep.subr.bf16.mxu0 0
      %3939 = vmatpush1.bf16.msra.mxu0 0
      %3940 = vmatprep.mubr.bf16.mxu0 0
      %3941 = vmatmul.mubr.bf16.gmra.mrb[0].mxu0 %v1387
      %v3942 = vpop.f32.mrb[0].mxu0
      %v3943 = vadd.f32 %v3858, %v3942
      %v3944 = vpop.f32.mrb[0].mxu0
      %v3945 = vpop.f32.mrb[0].mxu0
      %v3946 = vadd.f32 %v3858, %v3945
      %v3947 = vpop.f32.mrb[0].mxu0
      %3948 = vmatprep.mubr.bf16.mxu0 0
      %3949 = vmatmul.mubr.bf16.gmra.mrb[0].mxu0 %v1388
      %v3950 = vpop.f32.mrb[0].mxu0
      %v3951 = vadd.f32 %v3858, %v3950
      %v3952 = vpop.f32.mrb[0].mxu0
      %v3953 = vpop.f32.mrb[0].mxu0
      %v3954 = vadd.f32 %v3858, %v3953
      %v3955 = vpop.f32.mrb[0].mxu0
      %3956 = vmatprep.mubr.bf16.mxu0 0
      %3957 = vmatmul.mubr.bf16.gmra.mrb[0].mxu0 %v1389
      %v3958 = vpop.f32.mrb[0].mxu0
      %v3959 = vadd.f32 %v3858, %v3958
      %v3960 = vpop.f32.mrb[0].mxu0
      %v3961 = vpop.f32.mrb[0].mxu0
      %v3962 = vadd.f32 %v3858, %v3961
      %v3963 = vpop.f32.mrb[0].mxu0
      %3964 = vmatprep.mubr.bf16.mxu0 0
      %3965 = vmatmul.mubr.bf16.gmra.mrb[0].mxu0 %v1390
      %v3966 = vpop.f32.mrb[0].mxu0
      %v3967 = vadd.f32 %v3858, %v3966
      %v3968 = vpop.f32.mrb[0].mxu0
      %v3969 = vpop.f32.mrb[0].mxu0
      %v3970 = vadd.f32 %v3858, %v3969
      %v3971 = vpop.f32.mrb[0].mxu0
      %3972 = vmatprep.mubr.bf16.mxu0 0
      %3973 = vmatmul.mubr.bf16.gmra.mrb[0].mxu0 %v1391
      %v3974 = vpop.f32.mrb[0].mxu0
      %v3975 = vadd.f32 %v3858, %v3974
      %v3976 = vpop.f32.mrb[0].mxu0
      %v3977 = vpop.f32.mrb[0].mxu0
      %v3978 = vadd.f32 %v3858, %v3977
      %v3979 = vpop.f32.mrb[0].mxu0
      %3980 = vmatprep.mubr.bf16.mxu0 0
      %3981 = vmatmul.mubr.bf16.gmra.mrb[0].mxu0 %v1392
      %v3982 = vpop.f32.mrb[0].mxu0
      %v3983 = vadd.f32 %v3858, %v3982
      %v3984 = vpop.f32.mrb[0].mxu0
      %v3985 = vpop.f32.mrb[0].mxu0
      %v3986 = vadd.f32 %v3858, %v3985
      %v3987 = vpop.f32.mrb[0].mxu0
      %3988 = vmatprep.mubr.bf16.mxu0 0
      %3989 = vmatmul.mubr.bf16.gmra.mrb[0].mxu0 %v1393
      %v3990 = vpop.f32.mrb[0].mxu0
      %v3991 = vadd.f32 %v3858, %v3990
      %v3992 = vpop.f32.mrb[0].mxu0
      %v3993 = vpop.f32.mrb[0].mxu0
      %v3994 = vadd.f32 %v3858, %v3993
      %v3995 = vpop.f32.mrb[0].mxu0
      %3996 = vmatprep.mubr.bf16.mxu0 0
      %3997 = vmatmul.mubr.bf16.gmra.mrb[0].mxu0 %v1394
      %v3998 = vpop.f32.mrb[0].mxu0
      %v3999 = vadd.f32 %v3858, %v3998
      %v4000 = vpop.f32.mrb[0].mxu0
      %v4001 = vpop.f32.mrb[0].mxu0
      %v4002 = vadd.f32 %v3858, %v4001
      %v4003 = vpop.f32.mrb[0].mxu0
      %4004 = vmatprep.mubr.bf16.mxu0 0
      %4005 = vmatmul.mubr.bf16.gmra.mrb[0].mxu0 %v1395
      %v4006 = vpop.f32.mrb[0].mxu0
      %v4007 = vadd.f32 %v3858, %v4006
      %v4008 = vpop.f32.mrb[0].mxu0
      %v4009 = vpop.f32.mrb[0].mxu0
      %v4010 = vadd.f32 %v3858, %v4009
      %v4011 = vpop.f32.mrb[0].mxu0
      %4012 = vmatprep.mubr.bf16.mxu0 0
      %4013 = vmatmul.mubr.bf16.gmra.mrb[0].mxu0 %v1396
      %v4014 = vpop.f32.mrb[0].mxu0
      %v4015 = vadd.f32 %v3858, %v4014
      %v4016 = vpop.f32.mrb[0].mxu0
      %v4017 = vpop.f32.mrb[0].mxu0
      %v4018 = vadd.f32 %v3858, %v4017
      %v4019 = vpop.f32.mrb[0].mxu0
      %4020 = vmatprep.mubr.bf16.mxu0 0
      %4021 = vmatmul.mubr.bf16.gmra.mrb[0].mxu0 %v1397
      %v4022 = vpop.f32.mrb[0].mxu0
      %v4023 = vadd.f32 %v3858, %v4022
      %v4024 = vpop.f32.mrb[0].mxu0
      %v4025 = vpop.f32.mrb[0].mxu0
      %v4026 = vadd.f32 %v3858, %v4025
      %v4027 = vpop.f32.mrb[0].mxu0
      %4028 = vmatprep.mubr.bf16.mxu0 0
      %4029 = vmatmul.mubr.bf16.gmra.mrb[0].mxu0 %v1398
      %v4030 = vpop.f32.mrb[0].mxu0
      %v4031 = vadd.f32 %v3858, %v4030
      %v4032 = vpop.f32.mrb[0].mxu0
      %v4033 = vpop.f32.mrb[0].mxu0
      %v4034 = vadd.f32 %v3858, %v4033
      %v4035 = vpop.f32.mrb[0].mxu0
      %4036 = vmatprep.mubr.bf16.mxu0 0
      %4037 = vmatmul.mubr.bf16.gmra.mrb[0].mxu0 %v1399
      %v4038 = vpop.f32.mrb[0].mxu0
      %v4039 = vadd.f32 %v3858, %v4038
      %v4040 = vpop.f32.mrb[0].mxu0
      %v4041 = vpop.f32.mrb[0].mxu0
      %v4042 = vadd.f32 %v3858, %v4041
      %v4043 = vpop.f32.mrb[0].mxu0
      %4044 = vmatprep.mubr.bf16.mxu0 0
      %4045 = vmatmul.mubr.bf16.gmra.mrb[0].mxu0 %v1400
      %v4046 = vpop.f32.mrb[0].mxu0
      %v4047 = vadd.f32 %v3858, %v4046
      %v4048 = vpop.f32.mrb[0].mxu0
      %v4049 = vpop.f32.mrb[0].mxu0
      %v4050 = vadd.f32 %v3858, %v4049
      %v4051 = vpop.f32.mrb[0].mxu0
      %4052 = vmatprep.mubr.bf16.mxu0 0
      %4053 = vmatmul.mubr.bf16.gmra.mrb[0].mxu0 %v1401
      %v4054 = vpop.f32.mrb[0].mxu0
      %v4055 = vadd.f32 %v3858, %v4054
      %v4056 = vpop.f32.mrb[0].mxu0
      %v4057 = vpop.f32.mrb[0].mxu0
      %v4058 = vadd.f32 %v3858, %v4057
      %v4059 = vpop.f32.mrb[0].mxu0
      %4060 = vmatprep.mubr.bf16.mxu0 0
      %4061 = vmatmul.mubr.bf16.gmra.mrb[0].mxu0 %v1402
      %v4062 = vpop.f32.mrb[0].mxu0
      %v4063 = vadd.f32 %v3858, %v4062
      %v4064 = vpop.f32.mrb[0].mxu0
      %v4065 = vpop.f32.mrb[0].mxu0
      %v4066 = vadd.f32 %v3858, %v4065
      %v4067 = vpop.f32.mrb[0].mxu0
      %4068 = vdwg.mxu0
      %v4069 = vpack.c.bf16 %v3714, %v3711
      %v4070 = vpack.c.bf16 %v3722, %v3719
      %v4071 = vpack.c.bf16 %v3730, %v3727
      %v4072 = vpack.c.bf16 %v3738, %v3735
      %v4073 = vpack.c.bf16 %v3746, %v3743
      %v4074 = vpack.c.bf16 %v3754, %v3751
      %v4075 = vpack.c.bf16 %v3762, %v3759
      %v4076 = vpack.c.bf16 %v3770, %v3767
      %v4077 = vpack.c.bf16 %v3778, %v3775
      %v4078 = vpack.c.bf16 %v3786, %v3783
      %v4079 = vpack.c.bf16 %v3794, %v3791
      %v4080 = vpack.c.bf16 %v3802, %v3799
      %v4081 = vpack.c.bf16 %v3810, %v3807
      %v4082 = vpack.c.bf16 %v3818, %v3815
      %v4083 = vpack.c.bf16 %v3826, %v3823
      %v4084 = vpack.c.bf16 %v3834, %v3831
      %v4085 = vpack.c.bf16 %v3946, %v3943
      %v4086 = vpack.c.bf16 %v3954, %v3951
      %v4087 = vpack.c.bf16 %v3962, %v3959
      %v4088 = vpack.c.bf16 %v3970, %v3967
      %v4089 = vpack.c.bf16 %v3978, %v3975
      %v4090 = vpack.c.bf16 %v3986, %v3983
      %v4091 = vpack.c.bf16 %v3994, %v3991
      %v4092 = vpack.c.bf16 %v4002, %v3999
      %v4093 = vpack.c.bf16 %v4010, %v4007
      %v4094 = vpack.c.bf16 %v4018, %v4015
      %v4095 = vpack.c.bf16 %v4026, %v4023
      %v4096 = vpack.c.bf16 %v4034, %v4031
      %v4097 = vpack.c.bf16 %v4042, %v4039
      %v4098 = vpack.c.bf16 %v4050, %v4047
      %v4099 = vpack.c.bf16 %v4058, %v4055
      %v4100 = vpack.c.bf16 %v4066, %v4063
      %4101 = vxpose.xlu0.c.b16.start [1/8] %v4069, 128
      %4102 = vxpose.xlu0.c.b16.cont [2/8] %v4070, 128
      %4103 = vxpose.xlu0.c.b16.cont [3/8] %v4071, 128
      %4104 = vxpose.xlu0.c.b16.cont [4/8] %v4072, 128
      %4105 = vxpose.xlu0.c.b16.cont [5/8] %v4073, 128
      %4106 = vxpose.xlu0.c.b16.cont [6/8] %v4074, 128
      %4107 = vxpose.xlu0.c.b16.cont [7/8] %v4075, 128
      %4108 = vxpose.xlu0.c.b16.end [8/8] %v4076, 128
      %v4109 = vpop.trf.xlu0
      %v4110 = vpop.trf.xlu0
      %v4111 = vpop.trf.xlu0
      %v4112 = vpop.trf.xlu0
      %v4113 = vpop.trf.xlu0
      %v4114 = vpop.trf.xlu0
      %v4115 = vpop.trf.xlu0
      %v4116 = vpop.trf.xlu0
      %4117 = vxpose.xlu0.c.b16.start [1/8] %v4077, 128
      %4118 = vxpose.xlu0.c.b16.cont [2/8] %v4078, 128
      %4119 = vxpose.xlu0.c.b16.cont [3/8] %v4079, 128
      %4120 = vxpose.xlu0.c.b16.cont [4/8] %v4080, 128
      %4121 = vxpose.xlu0.c.b16.cont [5/8] %v4081, 128
      %4122 = vxpose.xlu0.c.b16.cont [6/8] %v4082, 128
      %4123 = vxpose.xlu0.c.b16.cont [7/8] %v4083, 128
      %4124 = vxpose.xlu0.c.b16.end [8/8] %v4084, 128
      %v4125 = vpop.trf.xlu0
      %v4126 = vpop.trf.xlu0
      %v4127 = vpop.trf.xlu0
      %v4128 = vpop.trf.xlu0
      %v4129 = vpop.trf.xlu0
      %v4130 = vpop.trf.xlu0
      %v4131 = vpop.trf.xlu0
      %v4132 = vpop.trf.xlu0
      %4133 = vmatprep.subr.bf16.mxu0 0
      %4134 = vmatpush1.bf16.msra.mxu0 %v4085
      %4135 = vmatprep.subr.bf16.mxu0 0
      %4136 = vmatpush1.bf16.msra.mxu0 %v4086
      %4137 = vmatprep.subr.bf16.mxu0 0
      %4138 = vmatpush1.bf16.msra.mxu0 %v4087
      %4139 = vmatprep.subr.bf16.mxu0 0
      %4140 = vmatpush1.bf16.msra.mxu0 %v4088
      %4141 = vmatprep.subr.bf16.mxu0 0
      %4142 = vmatpush1.bf16.msra.mxu0 %v4089
      %4143 = vmatprep.subr.bf16.mxu0 0
      %4144 = vmatpush1.bf16.msra.mxu0 %v4090
      %4145 = vmatprep.subr.bf16.mxu0 0
      %4146 = vmatpush1.bf16.msra.mxu0 %v4091
      %4147 = vmatprep.subr.bf16.mxu0 0
      %4148 = vmatpush1.bf16.msra.mxu0 %v4092
      %4149 = vmatprep.subr.bf16.mxu0 0
      %4150 = vmatpush1.bf16.msra.mxu0 %v4093
      %4151 = vmatprep.subr.bf16.mxu0 0
      %4152 = vmatpush1.bf16.msra.mxu0 %v4094
      %4153 = vmatprep.subr.bf16.mxu0 0
      %4154 = vmatpush1.bf16.msra.mxu0 %v4095
      %4155 = vmatprep.subr.bf16.mxu0 0
      %4156 = vmatpush1.bf16.msra.mxu0 %v4096
      %4157 = vmatprep.subr.bf16.mxu0 0
      %4158 = vmatpush1.bf16.msra.mxu0 %v4097
      %4159 = vmatprep.subr.bf16.mxu0 0
      %4160 = vmatpush1.bf16.msra.mxu0 %v4098
      %4161 = vmatprep.subr.bf16.mxu0 0
      %4162 = vmatpush1.bf16.msra.mxu0 %v4099
      %4163 = vmatprep.subr.bf16.mxu0 0
      %4164 = vmatpush1.bf16.msra.mxu0 %v4100
      %4165 = vmatprep.mubr.bf16.mxu0 %v4125
      %4166 = vmatmul.mubr.bf16.gmra.mrb[0].mxu0 %v4109
      %v4167 = vpop.f32.mrb[0].mxu0
      %v4168 = vadd.f32 0.0, %v4167
      %v4169 = vpop.f32.mrb[0].mxu0
      %v4170 = vpop.f32.mrb[0].mxu0
      %v4171 = vadd.f32 0.0, %v4170
      %v4172 = vpop.f32.mrb[0].mxu0
      %4173 = vmatprep.mubr.bf16.mxu0 %v4126
      %4174 = vmatmul.mubr.bf16.gmra.mrb[0].mxu0 %v4110
      %v4175 = vpop.f32.mrb[0].mxu0
      %v4176 = vadd.f32 0.0, %v4175
      %v4177 = vpop.f32.mrb[0].mxu0
      %v4178 = vpop.f32.mrb[0].mxu0
      %v4179 = vadd.f32 0.0, %v4178
      %v4180 = vpop.f32.mrb[0].mxu0
      %4181 = vmatprep.mubr.bf16.mxu0 %v4127
      %4182 = vmatmul.mubr.bf16.gmra.mrb[0].mxu0 %v4111
      %v4183 = vpop.f32.mrb[0].mxu0
      %v4184 = vadd.f32 0.0, %v4183
      %v4185 = vpop.f32.mrb[0].mxu0
      %v4186 = vpop.f32.mrb[0].mxu0
      %v4187 = vadd.f32 0.0, %v4186
      %v4188 = vpop.f32.mrb[0].mxu0
      %4189 = vmatprep.mubr.bf16.mxu0 %v4128
      %4190 = vmatmul.mubr.bf16.gmra.mrb[0].mxu0 %v4112
      %v4191 = vpop.f32.mrb[0].mxu0
      %v4192 = vadd.f32 0.0, %v4191
      %v4193 = vpop.f32.mrb[0].mxu0
      %v4194 = vpop.f32.mrb[0].mxu0
      %v4195 = vadd.f32 0.0, %v4194
      %v4196 = vpop.f32.mrb[0].mxu0
      %4197 = vmatprep.mubr.bf16.mxu0 %v4129
      %4198 = vmatmul.mubr.bf16.gmra.mrb[0].mxu0 %v4113
      %v4199 = vpop.f32.mrb[0].mxu0
      %v4200 = vadd.f32 0.0, %v4199
      %v4201 = vpop.f32.mrb[0].mxu0
      %v4202 = vpop.f32.mrb[0].mxu0
      %v4203 = vadd.f32 0.0, %v4202
      %v4204 = vpop.f32.mrb[0].mxu0
      %4205 = vmatprep.mubr.bf16.mxu0 %v4130
      %4206 = vmatmul.mubr.bf16.gmra.mrb[0].mxu0 %v4114
      %v4207 = vpop.f32.mrb[0].mxu0
      %v4208 = vadd.f32 0.0, %v4207
      %v4209 = vpop.f32.mrb[0].mxu0
      %v4210 = vpop.f32.mrb[0].mxu0
      %v4211 = vadd.f32 0.0, %v4210
      %v4212 = vpop.f32.mrb[0].mxu0
      %4213 = vmatprep.mubr.bf16.mxu0 %v4131
      %4214 = vmatmul.mubr.bf16.gmra.mrb[0].mxu0 %v4115
      %v4215 = vpop.f32.mrb[0].mxu0
      %v4216 = vadd.f32 0.0, %v4215
      %v4217 = vpop.f32.mrb[0].mxu0
      %v4218 = vpop.f32.mrb[0].mxu0
      %v4219 = vadd.f32 0.0, %v4218
      %v4220 = vpop.f32.mrb[0].mxu0
      %4221 = vmatprep.mubr.bf16.mxu0 %v4132
      %4222 = vmatmul.mubr.bf16.gmra.mrb[0].mxu0 %v4116
      %v4223 = vpop.f32.mrb[0].mxu0
      %v4224 = vadd.f32 0.0, %v4223
      %v4225 = vpop.f32.mrb[0].mxu0
      %v4226 = vpop.f32.mrb[0].mxu0
      %v4227 = vadd.f32 0.0, %v4226
      %v4228 = vpop.f32.mrb[0].mxu0
      %4229 = vdwg.mxu0
      %v4230 = vpack.c.bf16 %v4171, %v4168
      %v4231 = vpack.c.bf16 %v4179, %v4176
      %v4232 = vpack.c.bf16 %v4187, %v4184
      %v4233 = vpack.c.bf16 %v4195, %v4192
      %v4234 = vpack.c.bf16 %v4203, %v4200
      %v4235 = vpack.c.bf16 %v4211, %v4208
      %v4236 = vpack.c.bf16 %v4219, %v4216
      %v4237 = vpack.c.bf16 %v4227, %v4224
      %v4238 = vld [vmem:[%s18] sm:$0xf]
      %v4239 = vld [vmem:[%s18 + $0x4] sm:$0xf]
      %v4240 = vld [vmem:[%s18 + $0x8] sm:$0xf]
      %v4241 = vld [vmem:[%s18 + $0xc] sm:$0xf]
      %v4242 = vld [vmem:[%s18 + $0x10] sm:$0xf]
      %v4243 = vld [vmem:[%s18 + $0x14] sm:$0xf]
      %v4244 = vld [vmem:[%s18 + $0x18] sm:$0xf]
      %v4245 = vld [vmem:[%s18 + $0x1c] sm:$0xf]
      %v4246 = vld [vmem:[%s18 + $0x20] sm:$0xf]
      %v4247 = vld [vmem:[%s18 + $0x24] sm:$0xf]
      %v4248 = vld [vmem:[%s18 + $0x28] sm:$0xf]
      %v4249 = vld [vmem:[%s18 + $0x2c] sm:$0xf]
      %v4250 = vld [vmem:[%s18 + $0x30] sm:$0xf]
      %v4251 = vld [vmem:[%s18 + $0x34] sm:$0xf]
      %v4252 = vld [vmem:[%s18 + $0x38] sm:$0xf]
      %v4253 = vld [vmem:[%s18 + $0x3c] sm:$0xf]
      %v4270 = vunpack.c.l.b16 %v4238
      %v4271 = vunpack.c.l.b16 %v4239
      %v4272 = vunpack.c.l.b16 %v4240
      %v4273 = vunpack.c.l.b16 %v4241
      %v4274 = vunpack.c.l.b16 %v4242
      %v4275 = vunpack.c.l.b16 %v4243
      %v4276 = vunpack.c.l.b16 %v4244
      %v4277 = vunpack.c.l.b16 %v4245
      %v4278 = vunpack.c.l.b16 %v4246
      %v4279 = vunpack.c.l.b16 %v4247
      %v4280 = vunpack.c.l.b16 %v4248
      %v4281 = vunpack.c.l.b16 %v4249
      %v4282 = vunpack.c.l.b16 %v4250
      %v4283 = vunpack.c.l.b16 %v4251
      %v4284 = vunpack.c.l.b16 %v4252
      %v4285 = vunpack.c.l.b16 %v4253
      %v4286 = vpack.c.b16 %v4271, %v4270
      %v4287 = vpack.c.b16 %v4273, %v4272
      %v4288 = vpack.c.b16 %v4275, %v4274
      %v4289 = vpack.c.b16 %v4277, %v4276
      %v4290 = vpack.c.b16 %v4279, %v4278
      %v4291 = vpack.c.b16 %v4281, %v4280
      %v4292 = vpack.c.b16 %v4283, %v4282
      %v4293 = vpack.c.b16 %v4285, %v4284
      %4302 = vmatprep.subr.bf16.mxu0 0
      %4303 = vmatpush1.bf16.msra.mxu0 %v4286
      %4304 = vmatprep.subr.bf16.mxu0 0
      %4305 = vmatpush1.bf16.msra.mxu0 %v4287
      %4306 = vmatprep.subr.bf16.mxu0 0
      %4307 = vmatpush1.bf16.msra.mxu0 %v4288
      %4308 = vmatprep.subr.bf16.mxu0 0
      %4309 = vmatpush1.bf16.msra.mxu0 %v4289
      %4310 = vmatprep.subr.bf16.mxu0 0
      %4311 = vmatpush1.bf16.msra.mxu0 %v4290
      %4312 = vmatprep.subr.bf16.mxu0 0
      %4313 = vmatpush1.bf16.msra.mxu0 %v4291
      %4314 = vmatprep.subr.bf16.mxu0 0
      %4315 = vmatpush1.bf16.msra.mxu0 %v4292
      %4316 = vmatprep.subr.bf16.mxu0 0
      %4317 = vmatpush1.bf16.msra.mxu0 %v4293
      %4318 = vmatprep.subr.bf16.mxu0 0
      %4319 = vmatpush1.bf16.msra.mxu0 0
      %4320 = vmatprep.subr.bf16.mxu0 0
      %4321 = vmatpush1.bf16.msra.mxu0 0
      %4322 = vmatprep.subr.bf16.mxu0 0
      %4323 = vmatpush1.bf16.msra.mxu0 0
      %4324 = vmatprep.subr.bf16.mxu0 0
      %4325 = vmatpush1.bf16.msra.mxu0 0
      %4326 = vmatprep.subr.bf16.mxu0 0
      %4327 = vmatpush1.bf16.msra.mxu0 0
      %4328 = vmatprep.subr.bf16.mxu0 0
      %4329 = vmatpush1.bf16.msra.mxu0 0
      %4330 = vmatprep.subr.bf16.mxu0 0
      %4331 = vmatpush1.bf16.msra.mxu0 0
      %4332 = vmatprep.subr.bf16.mxu0 0
      %4333 = vmatpush1.bf16.msra.mxu0 0
      %4334 = vmatprep.mubr.bf16.mxu0 0
      %4335 = vmatmul.mubr.bf16.gmra.mrb[0].mxu0 %v4230
      %v4336 = vpop.f32.mrb[0].mxu0
      %v4337 = vadd.f32 0.0, %v4336
      %v4338 = vpop.f32.mrb[0].mxu0
      %v4339 = vpop.f32.mrb[0].mxu0
      %v4340 = vadd.f32 0.0, %v4339
      %v4341 = vpop.f32.mrb[0].mxu0
      %4342 = vmatprep.mubr.bf16.mxu0 0
      %4343 = vmatmul.mubr.bf16.gmra.mrb[0].mxu0 %v4231
      %v4344 = vpop.f32.mrb[0].mxu0
      %v4345 = vadd.f32 0.0, %v4344
      %v4346 = vpop.f32.mrb[0].mxu0
      %v4347 = vpop.f32.mrb[0].mxu0
      %v4348 = vadd.f32 0.0, %v4347
      %v4349 = vpop.f32.mrb[0].mxu0
      %4350 = vmatprep.mubr.bf16.mxu0 0
      %4351 = vmatmul.mubr.bf16.gmra.mrb[0].mxu0 %v4232
      %v4352 = vpop.f32.mrb[0].mxu0
      %v4353 = vadd.f32 0.0, %v4352
      %v4354 = vpop.f32.mrb[0].mxu0
      %v4355 = vpop.f32.mrb[0].mxu0
      %v4356 = vadd.f32 0.0, %v4355
      %v4357 = vpop.f32.mrb[0].mxu0
      %4358 = vmatprep.mubr.bf16.mxu0 0
      %4359 = vmatmul.mubr.bf16.gmra.mrb[0].mxu0 %v4233
      %v4360 = vpop.f32.mrb[0].mxu0
      %v4361 = vadd.f32 0.0, %v4360
      %v4362 = vpop.f32.mrb[0].mxu0
      %v4363 = vpop.f32.mrb[0].mxu0
      %v4364 = vadd.f32 0.0, %v4363
      %v4365 = vpop.f32.mrb[0].mxu0
      %4366 = vmatprep.mubr.bf16.mxu0 0
      %4367 = vmatmul.mubr.bf16.gmra.mrb[0].mxu0 %v4234
      %v4368 = vpop.f32.mrb[0].mxu0
      %v4369 = vadd.f32 0.0, %v4368
      %v4370 = vpop.f32.mrb[0].mxu0
      %v4371 = vpop.f32.mrb[0].mxu0
      %v4372 = vadd.f32 0.0, %v4371
      %v4373 = vpop.f32.mrb[0].mxu0
      %4374 = vmatprep.mubr.bf16.mxu0 0
      %4375 = vmatmul.mubr.bf16.gmra.mrb[0].mxu0 %v4235
      %v4376 = vpop.f32.mrb[0].mxu0
      %v4377 = vadd.f32 0.0, %v4376
      %v4378 = vpop.f32.mrb[0].mxu0
      %v4379 = vpop.f32.mrb[0].mxu0
      %v4380 = vadd.f32 0.0, %v4379
      %v4381 = vpop.f32.mrb[0].mxu0
      %4382 = vmatprep.mubr.bf16.mxu0 0
      %4383 = vmatmul.mubr.bf16.gmra.mrb[0].mxu0 %v4236
      %v4384 = vpop.f32.mrb[0].mxu0
      %v4385 = vadd.f32 0.0, %v4384
      %v4386 = vpop.f32.mrb[0].mxu0
      %v4387 = vpop.f32.mrb[0].mxu0
      %v4388 = vadd.f32 0.0, %v4387
      %v4389 = vpop.f32.mrb[0].mxu0
      %4390 = vmatprep.mubr.bf16.mxu0 0
      %4391 = vmatmul.mubr.bf16.gmra.mrb[0].mxu0 %v4237
      %v4392 = vpop.f32.mrb[0].mxu0
      %v4393 = vadd.f32 0.0, %v4392
      %v4394 = vpop.f32.mrb[0].mxu0
      %v4395 = vpop.f32.mrb[0].mxu0
      %v4396 = vadd.f32 0.0, %v4395
      %v4397 = vpop.f32.mrb[0].mxu0
      %4398 = vdwg.mxu0
      %v4399 = vadd.f32 %v4168, %v4337
      %v4400 = vadd.f32 %v4171, %v4340
      %v4401 = vadd.f32 %v4176, %v4345
      %v4402 = vadd.f32 %v4179, %v4348
      %v4403 = vadd.f32 %v4184, %v4353
      %v4404 = vadd.f32 %v4187, %v4356
      %v4405 = vadd.f32 %v4192, %v4361
      %v4406 = vadd.f32 %v4195, %v4364
      %v4407 = vadd.f32 %v4200, %v4369
      %v4408 = vadd.f32 %v4203, %v4372
      %v4409 = vadd.f32 %v4208, %v4377
      %v4410 = vadd.f32 %v4211, %v4380
      %v4411 = vadd.f32 %v4216, %v4385
      %v4412 = vadd.f32 %v4219, %v4388
      %v4413 = vadd.f32 %v4224, %v4393
      %v4414 = vadd.f32 %v4227, %v4396
      %v4415 = vld [vmem:[%s19] sm:$0x1]
      %v4417 = vlaneseq
      %v4418 = vshrl.u32 %v4417, 7
      %v4419 = vsub.s32 0, %v4418
      %v4420 = vrot.slane %v4415, %v4419
      %v4422 = vadd.f32 %v4399, %v4420
      %v4423 = vadd.f32 %v4400, %v4420
      %v4424 = vadd.f32 %v4401, %v4420
      %v4425 = vadd.f32 %v4402, %v4420
      %v4426 = vadd.f32 %v4403, %v4420
      %v4427 = vadd.f32 %v4404, %v4420
      %v4428 = vadd.f32 %v4405, %v4420
      %v4429 = vadd.f32 %v4406, %v4420
      %v4430 = vadd.f32 %v4407, %v4420
      %v4431 = vadd.f32 %v4408, %v4420
      %v4432 = vadd.f32 %v4409, %v4420
      %v4433 = vadd.f32 %v4410, %v4420
      %v4434 = vadd.f32 %v4411, %v4420
      %v4435 = vadd.f32 %v4412, %v4420
      %v4436 = vadd.f32 %v4413, %v4420
      %v4437 = vadd.f32 %v4414, %v4420
      %v4438 = vld [vmem:[%s20] sm:$0xf]
      %v4439 = vld [vmem:[%s20 + $0x4] sm:$0xf]
      %v4440 = vld [vmem:[%s20 + $0x8] sm:$0xf]
      %v4441 = vld [vmem:[%s20 + $0xc] sm:$0xf]
      %v4442 = vld [vmem:[%s20 + $0x10] sm:$0xf]
      %v4443 = vld [vmem:[%s20 + $0x14] sm:$0xf]
      %v4444 = vld [vmem:[%s20 + $0x18] sm:$0xf]
      %v4445 = vld [vmem:[%s20 + $0x1c] sm:$0xf]
      %v4446 = vld [vmem:[%s20 + $0x20] sm:$0xf]
      %v4447 = vld [vmem:[%s20 + $0x24] sm:$0xf]
      %v4448 = vld [vmem:[%s20 + $0x28] sm:$0xf]
      %v4449 = vld [vmem:[%s20 + $0x2c] sm:$0xf]
      %v4450 = vld [vmem:[%s20 + $0x30] sm:$0xf]
      %v4451 = vld [vmem:[%s20 + $0x34] sm:$0xf]
      %v4452 = vld [vmem:[%s20 + $0x38] sm:$0xf]
      %v4453 = vld [vmem:[%s20 + $0x3c] sm:$0xf]
      %v4454 = vpack.c.bf16 %v4423, %v4422
      %v4455 = vpack.c.bf16 %v4425, %v4424
      %v4456 = vpack.c.bf16 %v4427, %v4426
      %v4457 = vpack.c.bf16 %v4429, %v4428
      %v4458 = vpack.c.bf16 %v4431, %v4430
      %v4459 = vpack.c.bf16 %v4433, %v4432
      %v4460 = vpack.c.bf16 %v4435, %v4434
      %v4461 = vpack.c.bf16 %v4437, %v4436
      %v4462 = vld [vmem:[%s21] sm:$0xff]
      %v4463 = vld [vmem:[%s21 + $0x8] sm:$0xff]
      %v4464 = vld [vmem:[%s21 + $0x10] sm:$0xff]
      %v4465 = vld [vmem:[%s21 + $0x18] sm:$0xff]
      %v4466 = vld [vmem:[%s21 + $0x20] sm:$0xff]
      %v4467 = vld [vmem:[%s21 + $0x28] sm:$0xff]
      %v4468 = vld [vmem:[%s21 + $0x30] sm:$0xff]
      %v4469 = vld [vmem:[%s21 + $0x38] sm:$0xff]
      %v4470 = vld [vmem:[%s21 + $0x40] sm:$0xff]
      %v4471 = vld [vmem:[%s21 + $0x48] sm:$0xff]
      %v4472 = vld [vmem:[%s21 + $0x50] sm:$0xff]
      %v4473 = vld [vmem:[%s21 + $0x58] sm:$0xff]
      %v4474 = vld [vmem:[%s21 + $0x60] sm:$0xff]
      %v4475 = vld [vmem:[%s21 + $0x68] sm:$0xff]
      %v4476 = vld [vmem:[%s21 + $0x70] sm:$0xff]
      %v4477 = vld [vmem:[%s21 + $0x78] sm:$0xff]
      %4479 = vset.pattern.permute.xlu0 0
      %4480 = vperm.xlu0 %4479, %v4462
      %v4481 = vpop.permute.xlu0 %4480
      %4484 = vset.pattern.permute.xlu0 0
      %4485 = vperm.xlu0 %4484, %v4463
      %v4486 = vpop.permute.xlu0 %4485
      %4489 = vset.pattern.permute.xlu0 0
      %4490 = vperm.xlu0 %4489, %v4464
      %v4491 = vpop.permute.xlu0 %4490
      %4494 = vset.pattern.permute.xlu0 0
      %4495 = vperm.xlu0 %4494, %v4465
      %v4496 = vpop.permute.xlu0 %4495
      %4499 = vset.pattern.permute.xlu0 0
      %4500 = vperm.xlu0 %4499, %v4466
      %v4501 = vpop.permute.xlu0 %4500
      %4504 = vset.pattern.permute.xlu0 0
      %4505 = vperm.xlu0 %4504, %v4467
      %v4506 = vpop.permute.xlu0 %4505
      %4509 = vset.pattern.permute.xlu0 0
      %4510 = vperm.xlu0 %4509, %v4468
      %v4511 = vpop.permute.xlu0 %4510
      %4514 = vset.pattern.permute.xlu0 0
      %4515 = vperm.xlu0 %4514, %v4469
      %v4516 = vpop.permute.xlu0 %4515
      %4519 = vset.pattern.permute.xlu0 0
      %4520 = vperm.xlu0 %4519, %v4470
      %v4521 = vpop.permute.xlu0 %4520
      %4524 = vset.pattern.permute.xlu0 0
      %4525 = vperm.xlu0 %4524, %v4471
      %v4526 = vpop.permute.xlu0 %4525
      %4529 = vset.pattern.permute.xlu0 0
      %4530 = vperm.xlu0 %4529, %v4472
      %v4531 = vpop.permute.xlu0 %4530
      %4534 = vset.pattern.permute.xlu0 0
      %4535 = vperm.xlu0 %4534, %v4473
      %v4536 = vpop.permute.xlu0 %4535
      %4539 = vset.pattern.permute.xlu0 0
      %4540 = vperm.xlu0 %4539, %v4474
      %v4541 = vpop.permute.xlu0 %4540
      %4544 = vset.pattern.permute.xlu0 0
      %4545 = vperm.xlu0 %4544, %v4475
      %v4546 = vpop.permute.xlu0 %4545
      %4549 = vset.pattern.permute.xlu0 0
      %4550 = vperm.xlu0 %4549, %v4476
      %v4551 = vpop.permute.xlu0 %4550
      %4554 = vset.pattern.permute.xlu0 0
      %4555 = vperm.xlu0 %4554, %v4477
      %v4556 = vpop.permute.xlu0 %4555
      %v4574 = vunpack.c.l.b16 %v4438
      %v4575 = vunpack.c.l.b16 %v4439
      %v4576 = vunpack.c.l.b16 %v4440
      %v4577 = vunpack.c.l.b16 %v4441
      %v4578 = vunpack.c.l.b16 %v4442
      %v4579 = vunpack.c.l.b16 %v4443
      %v4580 = vunpack.c.l.b16 %v4444
      %v4581 = vunpack.c.l.b16 %v4445
      %v4582 = vunpack.c.l.b16 %v4446
      %v4583 = vunpack.c.l.b16 %v4447
      %v4584 = vunpack.c.l.b16 %v4448
      %v4585 = vunpack.c.l.b16 %v4449
      %v4586 = vunpack.c.l.b16 %v4450
      %v4587 = vunpack.c.l.b16 %v4451
      %v4588 = vunpack.c.l.b16 %v4452
      %v4589 = vunpack.c.l.b16 %v4453
      %v4590 = vpack.c.b16 %v4575, %v4574
      %v4591 = vpack.c.b16 %v4577, %v4576
      %v4592 = vpack.c.b16 %v4579, %v4578
      %v4593 = vpack.c.b16 %v4581, %v4580
      %v4594 = vpack.c.b16 %v4583, %v4582
      %v4595 = vpack.c.b16 %v4585, %v4584
      %v4596 = vpack.c.b16 %v4587, %v4586
      %v4597 = vpack.c.b16 %v4589, %v4588
      %4606 = vmatprep.subr.bf16.mxu0 0
      %4607 = vmatpush1.bf16.msra.mxu0 %v4454
      %4608 = vmatprep.subr.bf16.mxu0 0
      %4609 = vmatpush1.bf16.msra.mxu0 %v4455
      %4610 = vmatprep.subr.bf16.mxu0 0
      %4611 = vmatpush1.bf16.msra.mxu0 %v4456
      %4612 = vmatprep.subr.bf16.mxu0 0
      %4613 = vmatpush1.bf16.msra.mxu0 %v4457
      %4614 = vmatprep.subr.bf16.mxu0 0
      %4615 = vmatpush1.bf16.msra.mxu0 %v4458
      %4616 = vmatprep.subr.bf16.mxu0 0
      %4617 = vmatpush1.bf16.msra.mxu0 %v4459
      %4618 = vmatprep.subr.bf16.mxu0 0
      %4619 = vmatpush1.bf16.msra.mxu0 %v4460
      %4620 = vmatprep.subr.bf16.mxu0 0
      %4621 = vmatpush1.bf16.msra.mxu0 %v4461
      %4622 = vmatprep.subr.bf16.mxu0 0
      %4623 = vmatpush1.bf16.msra.mxu0 0
      %4624 = vmatprep.subr.bf16.mxu0 0
      %4625 = vmatpush1.bf16.msra.mxu0 0
      %4626 = vmatprep.subr.bf16.mxu0 0
      %4627 = vmatpush1.bf16.msra.mxu0 0
      %4628 = vmatprep.subr.bf16.mxu0 0
      %4629 = vmatpush1.bf16.msra.mxu0 0
      %4630 = vmatprep.subr.bf16.mxu0 0
      %4631 = vmatpush1.bf16.msra.mxu0 0
      %4632 = vmatprep.subr.bf16.mxu0 0
      %4633 = vmatpush1.bf16.msra.mxu0 0
      %4634 = vmatprep.subr.bf16.mxu0 0
      %4635 = vmatpush1.bf16.msra.mxu0 0
      %4636 = vmatprep.subr.bf16.mxu0 0
      %4637 = vmatpush1.bf16.msra.mxu0 0
      %4638 = vmatprep.mubr.bf16.mxu0 0
      %4639 = vmatmul.mubr.bf16.gmra.mrb[0].mxu0 %v4590
      %v4640 = vpop.f32.mrb[0].mxu0
      %v4641 = vadd.f32 %v4481, %v4640
      %v4642 = vpop.f32.mrb[0].mxu0
      %v4643 = vpop.f32.mrb[0].mxu0
      %v4644 = vadd.f32 %v4486, %v4643
      %v4645 = vpop.f32.mrb[0].mxu0
      %4646 = vmatprep.mubr.bf16.mxu0 0
      %4647 = vmatmul.mubr.bf16.gmra.mrb[0].mxu0 %v4591
      %v4648 = vpop.f32.mrb[0].mxu0
      %v4649 = vadd.f32 %v4491, %v4648
      %v4650 = vpop.f32.mrb[0].mxu0
      %v4651 = vpop.f32.mrb[0].mxu0
      %v4652 = vadd.f32 %v4496, %v4651
      %v4653 = vpop.f32.mrb[0].mxu0
      %4654 = vmatprep.mubr.bf16.mxu0 0
      %4655 = vmatmul.mubr.bf16.gmra.mrb[0].mxu0 %v4592
      %v4656 = vpop.f32.mrb[0].mxu0
      %v4657 = vadd.f32 %v4501, %v4656
      %v4658 = vpop.f32.mrb[0].mxu0
      %v4659 = vpop.f32.mrb[0].mxu0
      %v4660 = vadd.f32 %v4506, %v4659
      %v4661 = vpop.f32.mrb[0].mxu0
      %4662 = vmatprep.mubr.bf16.mxu0 0
      %4663 = vmatmul.mubr.bf16.gmra.mrb[0].mxu0 %v4593
      %v4664 = vpop.f32.mrb[0].mxu0
      %v4665 = vadd.f32 %v4511, %v4664
      %v4666 = vpop.f32.mrb[0].mxu0
      %v4667 = vpop.f32.mrb[0].mxu0
      %v4668 = vadd.f32 %v4516, %v4667
      %v4669 = vpop.f32.mrb[0].mxu0
      %4670 = vmatprep.mubr.bf16.mxu0 0
      %4671 = vmatmul.mubr.bf16.gmra.mrb[0].mxu0 %v4594
      %v4672 = vpop.f32.mrb[0].mxu0
      %v4673 = vadd.f32 %v4521, %v4672
      %v4674 = vpop.f32.mrb[0].mxu0
      %v4675 = vpop.f32.mrb[0].mxu0
      %v4676 = vadd.f32 %v4526, %v4675
      %v4677 = vpop.f32.mrb[0].mxu0
      %4678 = vmatprep.mubr.bf16.mxu0 0
      %4679 = vmatmul.mubr.bf16.gmra.mrb[0].mxu0 %v4595
      %v4680 = vpop.f32.mrb[0].mxu0
      %v4681 = vadd.f32 %v4531, %v4680
      %v4682 = vpop.f32.mrb[0].mxu0
      %v4683 = vpop.f32.mrb[0].mxu0
      %v4684 = vadd.f32 %v4536, %v4683
      %v4685 = vpop.f32.mrb[0].mxu0
      %4686 = vmatprep.mubr.bf16.mxu0 0
      %4687 = vmatmul.mubr.bf16.gmra.mrb[0].mxu0 %v4596
      %v4688 = vpop.f32.mrb[0].mxu0
      %v4689 = vadd.f32 %v4541, %v4688
      %v4690 = vpop.f32.mrb[0].mxu0
      %v4691 = vpop.f32.mrb[0].mxu0
      %v4692 = vadd.f32 %v4546, %v4691
      %v4693 = vpop.f32.mrb[0].mxu0
      %4694 = vmatprep.mubr.bf16.mxu0 0
      %4695 = vmatmul.mubr.bf16.gmra.mrb[0].mxu0 %v4597
      %v4696 = vpop.f32.mrb[0].mxu0
      %v4697 = vadd.f32 %v4551, %v4696
      %v4698 = vpop.f32.mrb[0].mxu0
      %v4699 = vpop.f32.mrb[0].mxu0
      %v4700 = vadd.f32 %v4556, %v4699
      %v4701 = vpop.f32.mrb[0].mxu0
      %4702 = vdwg.mxu0
      %v4703 = vpack.c.bf16 %v4644, %v4641
      %v4704 = vpack.c.bf16 %v4652, %v4649
      %v4705 = vpack.c.bf16 %v4660, %v4657
      %v4706 = vpack.c.bf16 %v4668, %v4665
      %v4707 = vpack.c.bf16 %v4676, %v4673
      %v4708 = vpack.c.bf16 %v4684, %v4681
      %v4709 = vpack.c.bf16 %v4692, %v4689
      %v4710 = vpack.c.bf16 %v4700, %v4697
      %4711 = vmatprep.subr.bf16.mxu0 0
      %4712 = vmatpush1.bf16.xpose.msra.mxu0 %v4703
      %4713 = vmatprep.subr.bf16.mxu0 0
      %4714 = vmatpush1.bf16.xpose.msra.mxu0 %v4704
      %4715 = vmatprep.subr.bf16.mxu0 0
      %4716 = vmatpush1.bf16.xpose.msra.mxu0 %v4705
      %4717 = vmatprep.subr.bf16.mxu0 0
      %4718 = vmatpush1.bf16.xpose.msra.mxu0 %v4706
      %4719 = vmatprep.subr.bf16.mxu0 0
      %4720 = vmatpush1.bf16.xpose.msra.mxu0 %v4707
      %4721 = vmatprep.subr.bf16.mxu0 0
      %4722 = vmatpush1.bf16.xpose.msra.mxu0 %v4708
      %4723 = vmatprep.subr.bf16.mxu0 0
      %4724 = vmatpush1.bf16.xpose.msra.mxu0 %v4709
      %4725 = vmatprep.subr.bf16.mxu0 0
      %4726 = vmatpush1.bf16.xpose.msra.mxu0 %v4710
      %4727 = vmatprep.subr.bf16.mxu0 0
      %4728 = vmatpush1.bf16.xpose.msra.mxu0 0
      %4729 = vmatprep.subr.bf16.mxu0 0
      %4730 = vmatpush1.bf16.xpose.msra.mxu0 0
      %4731 = vmatprep.subr.bf16.mxu0 0
      %4732 = vmatpush1.bf16.xpose.msra.mxu0 0
      %4733 = vmatprep.subr.bf16.mxu0 0
      %4734 = vmatpush1.bf16.xpose.msra.mxu0 0
      %4735 = vmatprep.subr.bf16.mxu0 0
      %4736 = vmatpush1.bf16.xpose.msra.mxu0 0
      %4737 = vmatprep.subr.bf16.mxu0 0
      %4738 = vmatpush1.bf16.xpose.msra.mxu0 0
      %4739 = vmatprep.subr.bf16.mxu0 0
      %4740 = vmatpush1.bf16.xpose.msra.mxu0 0
      %4741 = vmatprep.subr.bf16.mxu0 0
      %4742 = vmatpush1.bf16.xpose.msra.mxu0 0
      %4743 = vmatprep.mubr.bf16.mxu0 0
      %4744 = vmatmul.mubr.bf16.gmra.mrb[0].mxu0 %v4085
      %v4745 = vpop.f32.mrb[0].mxu0
      %v4746 = vadd.f32 0.0, %v4745
      %v4747 = vpop.f32.mrb[0].mxu0
      %v4748 = vpop.f32.mrb[0].mxu0
      %v4749 = vadd.f32 0.0, %v4748
      %v4750 = vpop.f32.mrb[0].mxu0
      %4751 = vmatprep.mubr.bf16.mxu0 0
      %4752 = vmatmul.mubr.bf16.gmra.mrb[0].mxu0 %v4086
      %v4753 = vpop.f32.mrb[0].mxu0
      %v4754 = vadd.f32 0.0, %v4753
      %v4755 = vpop.f32.mrb[0].mxu0
      %v4756 = vpop.f32.mrb[0].mxu0
      %v4757 = vadd.f32 0.0, %v4756
      %v4758 = vpop.f32.mrb[0].mxu0
      %4759 = vmatprep.mubr.bf16.mxu0 0
      %4760 = vmatmul.mubr.bf16.gmra.mrb[0].mxu0 %v4087
      %v4761 = vpop.f32.mrb[0].mxu0
      %v4762 = vadd.f32 0.0, %v4761
      %v4763 = vpop.f32.mrb[0].mxu0
      %v4764 = vpop.f32.mrb[0].mxu0
      %v4765 = vadd.f32 0.0, %v4764
      %v4766 = vpop.f32.mrb[0].mxu0
      %4767 = vmatprep.mubr.bf16.mxu0 0
      %4768 = vmatmul.mubr.bf16.gmra.mrb[0].mxu0 %v4088
      %v4769 = vpop.f32.mrb[0].mxu0
      %v4770 = vadd.f32 0.0, %v4769
      %v4771 = vpop.f32.mrb[0].mxu0
      %v4772 = vpop.f32.mrb[0].mxu0
      %v4773 = vadd.f32 0.0, %v4772
      %v4774 = vpop.f32.mrb[0].mxu0
      %4775 = vmatprep.mubr.bf16.mxu0 0
      %4776 = vmatmul.mubr.bf16.gmra.mrb[0].mxu0 %v4089
      %v4777 = vpop.f32.mrb[0].mxu0
      %v4778 = vadd.f32 0.0, %v4777
      %v4779 = vpop.f32.mrb[0].mxu0
      %v4780 = vpop.f32.mrb[0].mxu0
      %v4781 = vadd.f32 0.0, %v4780
      %v4782 = vpop.f32.mrb[0].mxu0
      %4783 = vmatprep.mubr.bf16.mxu0 0
      %4784 = vmatmul.mubr.bf16.gmra.mrb[0].mxu0 %v4090
      %v4785 = vpop.f32.mrb[0].mxu0
      %v4786 = vadd.f32 0.0, %v4785
      %v4787 = vpop.f32.mrb[0].mxu0
      %v4788 = vpop.f32.mrb[0].mxu0
      %v4789 = vadd.f32 0.0, %v4788
      %v4790 = vpop.f32.mrb[0].mxu0
      %4791 = vmatprep.mubr.bf16.mxu0 0
      %4792 = vmatmul.mubr.bf16.gmra.mrb[0].mxu0 %v4091
      %v4793 = vpop.f32.mrb[0].mxu0
      %v4794 = vadd.f32 0.0, %v4793
      %v4795 = vpop.f32.mrb[0].mxu0
      %v4796 = vpop.f32.mrb[0].mxu0
      %v4797 = vadd.f32 0.0, %v4796
      %v4798 = vpop.f32.mrb[0].mxu0
      %4799 = vmatprep.mubr.bf16.mxu0 0
      %4800 = vmatmul.mubr.bf16.gmra.mrb[0].mxu0 %v4092
      %v4801 = vpop.f32.mrb[0].mxu0
      %v4802 = vadd.f32 0.0, %v4801
      %v4803 = vpop.f32.mrb[0].mxu0
      %v4804 = vpop.f32.mrb[0].mxu0
      %v4805 = vadd.f32 0.0, %v4804
      %v4806 = vpop.f32.mrb[0].mxu0
      %4807 = vmatprep.mubr.bf16.mxu0 0
      %4808 = vmatmul.mubr.bf16.gmra.mrb[0].mxu0 %v4093
      %v4809 = vpop.f32.mrb[0].mxu0
      %v4810 = vadd.f32 0.0, %v4809
      %v4811 = vpop.f32.mrb[0].mxu0
      %v4812 = vpop.f32.mrb[0].mxu0
      %v4813 = vadd.f32 0.0, %v4812
      %v4814 = vpop.f32.mrb[0].mxu0
      %4815 = vmatprep.mubr.bf16.mxu0 0
      %4816 = vmatmul.mubr.bf16.gmra.mrb[0].mxu0 %v4094
      %v4817 = vpop.f32.mrb[0].mxu0
      %v4818 = vadd.f32 0.0, %v4817
      %v4819 = vpop.f32.mrb[0].mxu0
      %v4820 = vpop.f32.mrb[0].mxu0
      %v4821 = vadd.f32 0.0, %v4820
      %v4822 = vpop.f32.mrb[0].mxu0
      %4823 = vmatprep.mubr.bf16.mxu0 0
      %4824 = vmatmul.mubr.bf16.gmra.mrb[0].mxu0 %v4095
      %v4825 = vpop.f32.mrb[0].mxu0
      %v4826 = vadd.f32 0.0, %v4825
      %v4827 = vpop.f32.mrb[0].mxu0
      %v4828 = vpop.f32.mrb[0].mxu0
      %v4829 = vadd.f32 0.0, %v4828
      %v4830 = vpop.f32.mrb[0].mxu0
      %4831 = vmatprep.mubr.bf16.mxu0 0
      %4832 = vmatmul.mubr.bf16.gmra.mrb[0].mxu0 %v4096
      %v4833 = vpop.f32.mrb[0].mxu0
      %v4834 = vadd.f32 0.0, %v4833
      %v4835 = vpop.f32.mrb[0].mxu0
      %v4836 = vpop.f32.mrb[0].mxu0
      %v4837 = vadd.f32 0.0, %v4836
      %v4838 = vpop.f32.mrb[0].mxu0
      %4839 = vmatprep.mubr.bf16.mxu0 0
      %4840 = vmatmul.mubr.bf16.gmra.mrb[0].mxu0 %v4097
      %v4841 = vpop.f32.mrb[0].mxu0
      %v4842 = vadd.f32 0.0, %v4841
      %v4843 = vpop.f32.mrb[0].mxu0
      %v4844 = vpop.f32.mrb[0].mxu0
      %v4845 = vadd.f32 0.0, %v4844
      %v4846 = vpop.f32.mrb[0].mxu0
      %4847 = vmatprep.mubr.bf16.mxu0 0
      %4848 = vmatmul.mubr.bf16.gmra.mrb[0].mxu0 %v4098
      %v4849 = vpop.f32.mrb[0].mxu0
      %v4850 = vadd.f32 0.0, %v4849
      %v4851 = vpop.f32.mrb[0].mxu0
      %v4852 = vpop.f32.mrb[0].mxu0
      %v4853 = vadd.f32 0.0, %v4852
      %v4854 = vpop.f32.mrb[0].mxu0
      %4855 = vmatprep.mubr.bf16.mxu0 0
      %4856 = vmatmul.mubr.bf16.gmra.mrb[0].mxu0 %v4099
      %v4857 = vpop.f32.mrb[0].mxu0
      %v4858 = vadd.f32 0.0, %v4857
      %v4859 = vpop.f32.mrb[0].mxu0
      %v4860 = vpop.f32.mrb[0].mxu0
      %v4861 = vadd.f32 0.0, %v4860
      %v4862 = vpop.f32.mrb[0].mxu0
      %4863 = vmatprep.mubr.bf16.mxu0 0
      %4864 = vmatmul.mubr.bf16.gmra.mrb[0].mxu0 %v4100
      %v4865 = vpop.f32.mrb[0].mxu0
      %v4866 = vadd.f32 0.0, %v4865
      %v4867 = vpop.f32.mrb[0].mxu0
      %v4868 = vpop.f32.mrb[0].mxu0
      %v4869 = vadd.f32 0.0, %v4868
      %v4870 = vpop.f32.mrb[0].mxu0
      %4871 = vdwg.mxu0
      %v4872 = vpack.c.bf16 %v4749, %v4746
      %v4873 = vpack.c.bf16 %v4757, %v4754
      %v4874 = vpack.c.bf16 %v4765, %v4762
      %v4875 = vpack.c.bf16 %v4773, %v4770
      %v4876 = vpack.c.bf16 %v4781, %v4778
      %v4877 = vpack.c.bf16 %v4789, %v4786
      %v4878 = vpack.c.bf16 %v4797, %v4794
      %v4879 = vpack.c.bf16 %v4805, %v4802
      %v4880 = vpack.c.bf16 %v4813, %v4810
      %v4881 = vpack.c.bf16 %v4821, %v4818
      %v4882 = vpack.c.bf16 %v4829, %v4826
      %v4883 = vpack.c.bf16 %v4837, %v4834
      %v4884 = vpack.c.bf16 %v4845, %v4842
      %v4885 = vpack.c.bf16 %v4853, %v4850
      %v4886 = vpack.c.bf16 %v4861, %v4858
      %v4887 = vpack.c.bf16 %v4869, %v4866
      %v4888 = vld [vmem:[%s22] sm:$0xf]
      %v4889 = vld [vmem:[%s22 + $0x4] sm:$0xf]
      %v4890 = vld [vmem:[%s22 + $0x8] sm:$0xf]
      %v4891 = vld [vmem:[%s22 + $0xc] sm:$0xf]
      %v4892 = vld [vmem:[%s22 + $0x10] sm:$0xf]
      %v4893 = vld [vmem:[%s22 + $0x14] sm:$0xf]
      %v4894 = vld [vmem:[%s22 + $0x18] sm:$0xf]
      %v4895 = vld [vmem:[%s22 + $0x1c] sm:$0xf]
      %v4896 = vld [vmem:[%s22 + $0x20] sm:$0xf]
      %v4897 = vld [vmem:[%s22 + $0x24] sm:$0xf]
      %v4898 = vld [vmem:[%s22 + $0x28] sm:$0xf]
      %v4899 = vld [vmem:[%s22 + $0x2c] sm:$0xf]
      %v4900 = vld [vmem:[%s22 + $0x30] sm:$0xf]
      %v4901 = vld [vmem:[%s22 + $0x34] sm:$0xf]
      %v4902 = vld [vmem:[%s22 + $0x38] sm:$0xf]
      %v4903 = vld [vmem:[%s22 + $0x3c] sm:$0xf]
      %v4920 = vunpack.c.l.b16 %v4888
      %v4921 = vunpack.c.l.b16 %v4889
      %v4922 = vunpack.c.l.b16 %v4890
      %v4923 = vunpack.c.l.b16 %v4891
      %v4924 = vunpack.c.l.b16 %v4892
      %v4925 = vunpack.c.l.b16 %v4893
      %v4926 = vunpack.c.l.b16 %v4894
      %v4927 = vunpack.c.l.b16 %v4895
      %v4928 = vunpack.c.l.b16 %v4896
      %v4929 = vunpack.c.l.b16 %v4897
      %v4930 = vunpack.c.l.b16 %v4898
      %v4931 = vunpack.c.l.b16 %v4899
      %v4932 = vunpack.c.l.b16 %v4900
      %v4933 = vunpack.c.l.b16 %v4901
      %v4934 = vunpack.c.l.b16 %v4902
      %v4935 = vunpack.c.l.b16 %v4903
      %v4936 = vpack.c.b16 %v4921, %v4920
      %v4937 = vpack.c.b16 %v4923, %v4922
      %v4938 = vpack.c.b16 %v4925, %v4924
      %v4939 = vpack.c.b16 %v4927, %v4926
      %v4940 = vpack.c.b16 %v4929, %v4928
      %v4941 = vpack.c.b16 %v4931, %v4930
      %v4942 = vpack.c.b16 %v4933, %v4932
      %v4943 = vpack.c.b16 %v4935, %v4934
      %4952 = vmatprep.subr.bf16.mxu0 0
      %4953 = vmatpush1.bf16.msra.mxu0 %v4936
      %4954 = vmatprep.subr.bf16.mxu0 0
      %4955 = vmatpush1.bf16.msra.mxu0 %v4937
      %4956 = vmatprep.subr.bf16.mxu0 0
      %4957 = vmatpush1.bf16.msra.mxu0 %v4938
      %4958 = vmatprep.subr.bf16.mxu0 0
      %4959 = vmatpush1.bf16.msra.mxu0 %v4939
      %4960 = vmatprep.subr.bf16.mxu0 0
      %4961 = vmatpush1.bf16.msra.mxu0 %v4940
      %4962 = vmatprep.subr.bf16.mxu0 0
      %4963 = vmatpush1.bf16.msra.mxu0 %v4941
      %4964 = vmatprep.subr.bf16.mxu0 0
      %4965 = vmatpush1.bf16.msra.mxu0 %v4942
      %4966 = vmatprep.subr.bf16.mxu0 0
      %4967 = vmatpush1.bf16.msra.mxu0 %v4943
      %4968 = vmatprep.subr.bf16.mxu0 0
      %4969 = vmatpush1.bf16.msra.mxu0 0
      %4970 = vmatprep.subr.bf16.mxu0 0
      %4971 = vmatpush1.bf16.msra.mxu0 0
      %4972 = vmatprep.subr.bf16.mxu0 0
      %4973 = vmatpush1.bf16.msra.mxu0 0
      %4974 = vmatprep.subr.bf16.mxu0 0
      %4975 = vmatpush1.bf16.msra.mxu0 0
      %4976 = vmatprep.subr.bf16.mxu0 0
      %4977 = vmatpush1.bf16.msra.mxu0 0
      %4978 = vmatprep.subr.bf16.mxu0 0
      %4979 = vmatpush1.bf16.msra.mxu0 0
      %4980 = vmatprep.subr.bf16.mxu0 0
      %4981 = vmatpush1.bf16.msra.mxu0 0
      %4982 = vmatprep.subr.bf16.mxu0 0
      %4983 = vmatpush1.bf16.msra.mxu0 0
      %4984 = vmatprep.mubr.bf16.mxu0 0
      %4985 = vmatmul.mubr.bf16.gmra.mrb[0].mxu0 %v4872
      %v4986 = vpop.f32.mrb[0].mxu0
      %v4987 = vadd.f32 0.0, %v4986
      %v4988 = vpop.f32.mrb[0].mxu0
      %v4989 = vpop.f32.mrb[0].mxu0
      %v4990 = vadd.f32 0.0, %v4989
      %v4991 = vpop.f32.mrb[0].mxu0
      %4992 = vmatprep.mubr.bf16.mxu0 0
      %4993 = vmatmul.mubr.bf16.gmra.mrb[0].mxu0 %v4873
      %v4994 = vpop.f32.mrb[0].mxu0
      %v4995 = vadd.f32 0.0, %v4994
      %v4996 = vpop.f32.mrb[0].mxu0
      %v4997 = vpop.f32.mrb[0].mxu0
      %v4998 = vadd.f32 0.0, %v4997
      %v4999 = vpop.f32.mrb[0].mxu0
      %5000 = vmatprep.mubr.bf16.mxu0 0
      %5001 = vmatmul.mubr.bf16.gmra.mrb[0].mxu0 %v4874
      %v5002 = vpop.f32.mrb[0].mxu0
      %v5003 = vadd.f32 0.0, %v5002
      %v5004 = vpop.f32.mrb[0].mxu0
      %v5005 = vpop.f32.mrb[0].mxu0
      %v5006 = vadd.f32 0.0, %v5005
      %v5007 = vpop.f32.mrb[0].mxu0
      %5008 = vmatprep.mubr.bf16.mxu0 0
      %5009 = vmatmul.mubr.bf16.gmra.mrb[0].mxu0 %v4875
      %v5010 = vpop.f32.mrb[0].mxu0
      %v5011 = vadd.f32 0.0, %v5010
      %v5012 = vpop.f32.mrb[0].mxu0
      %v5013 = vpop.f32.mrb[0].mxu0
      %v5014 = vadd.f32 0.0, %v5013
      %v5015 = vpop.f32.mrb[0].mxu0
      %5016 = vmatprep.mubr.bf16.mxu0 0
      %5017 = vmatmul.mubr.bf16.gmra.mrb[0].mxu0 %v4876
      %v5018 = vpop.f32.mrb[0].mxu0
      %v5019 = vadd.f32 0.0, %v5018
      %v5020 = vpop.f32.mrb[0].mxu0
      %v5021 = vpop.f32.mrb[0].mxu0
      %v5022 = vadd.f32 0.0, %v5021
      %v5023 = vpop.f32.mrb[0].mxu0
      %5024 = vmatprep.mubr.bf16.mxu0 0
      %5025 = vmatmul.mubr.bf16.gmra.mrb[0].mxu0 %v4877
      %v5026 = vpop.f32.mrb[0].mxu0
      %v5027 = vadd.f32 0.0, %v5026
      %v5028 = vpop.f32.mrb[0].mxu0
      %v5029 = vpop.f32.mrb[0].mxu0
      %v5030 = vadd.f32 0.0, %v5029
      %v5031 = vpop.f32.mrb[0].mxu0
      %5032 = vmatprep.mubr.bf16.mxu0 0
      %5033 = vmatmul.mubr.bf16.gmra.mrb[0].mxu0 %v4878
      %v5034 = vpop.f32.mrb[0].mxu0
      %v5035 = vadd.f32 0.0, %v5034
      %v5036 = vpop.f32.mrb[0].mxu0
      %v5037 = vpop.f32.mrb[0].mxu0
      %v5038 = vadd.f32 0.0, %v5037
      %v5039 = vpop.f32.mrb[0].mxu0
      %5040 = vmatprep.mubr.bf16.mxu0 0
      %5041 = vmatmul.mubr.bf16.gmra.mrb[0].mxu0 %v4879
      %v5042 = vpop.f32.mrb[0].mxu0
      %v5043 = vadd.f32 0.0, %v5042
      %v5044 = vpop.f32.mrb[0].mxu0
      %v5045 = vpop.f32.mrb[0].mxu0
      %v5046 = vadd.f32 0.0, %v5045
      %v5047 = vpop.f32.mrb[0].mxu0
      %5048 = vmatprep.mubr.bf16.mxu0 0
      %5049 = vmatmul.mubr.bf16.gmra.mrb[0].mxu0 %v4880
      %v5050 = vpop.f32.mrb[0].mxu0
      %v5051 = vadd.f32 0.0, %v5050
      %v5052 = vpop.f32.mrb[0].mxu0
      %v5053 = vpop.f32.mrb[0].mxu0
      %v5054 = vadd.f32 0.0, %v5053
      %v5055 = vpop.f32.mrb[0].mxu0
      %5056 = vmatprep.mubr.bf16.mxu0 0
      %5057 = vmatmul.mubr.bf16.gmra.mrb[0].mxu0 %v4881
      %v5058 = vpop.f32.mrb[0].mxu0
      %v5059 = vadd.f32 0.0, %v5058
      %v5060 = vpop.f32.mrb[0].mxu0
      %v5061 = vpop.f32.mrb[0].mxu0
      %v5062 = vadd.f32 0.0, %v5061
      %v5063 = vpop.f32.mrb[0].mxu0
      %5064 = vmatprep.mubr.bf16.mxu0 0
      %5065 = vmatmul.mubr.bf16.gmra.mrb[0].mxu0 %v4882
      %v5066 = vpop.f32.mrb[0].mxu0
      %v5067 = vadd.f32 0.0, %v5066
      %v5068 = vpop.f32.mrb[0].mxu0
      %v5069 = vpop.f32.mrb[0].mxu0
      %v5070 = vadd.f32 0.0, %v5069
      %v5071 = vpop.f32.mrb[0].mxu0
      %5072 = vmatprep.mubr.bf16.mxu0 0
      %5073 = vmatmul.mubr.bf16.gmra.mrb[0].mxu0 %v4883
      %v5074 = vpop.f32.mrb[0].mxu0
      %v5075 = vadd.f32 0.0, %v5074
      %v5076 = vpop.f32.mrb[0].mxu0
      %v5077 = vpop.f32.mrb[0].mxu0
      %v5078 = vadd.f32 0.0, %v5077
      %v5079 = vpop.f32.mrb[0].mxu0
      %5080 = vmatprep.mubr.bf16.mxu0 0
      %5081 = vmatmul.mubr.bf16.gmra.mrb[0].mxu0 %v4884
      %v5082 = vpop.f32.mrb[0].mxu0
      %v5083 = vadd.f32 0.0, %v5082
      %v5084 = vpop.f32.mrb[0].mxu0
      %v5085 = vpop.f32.mrb[0].mxu0
      %v5086 = vadd.f32 0.0, %v5085
      %v5087 = vpop.f32.mrb[0].mxu0
      %5088 = vmatprep.mubr.bf16.mxu0 0
      %5089 = vmatmul.mubr.bf16.gmra.mrb[0].mxu0 %v4885
      %v5090 = vpop.f32.mrb[0].mxu0
      %v5091 = vadd.f32 0.0, %v5090
      %v5092 = vpop.f32.mrb[0].mxu0
      %v5093 = vpop.f32.mrb[0].mxu0
      %v5094 = vadd.f32 0.0, %v5093
      %v5095 = vpop.f32.mrb[0].mxu0
      %5096 = vmatprep.mubr.bf16.mxu0 0
      %5097 = vmatmul.mubr.bf16.gmra.mrb[0].mxu0 %v4886
      %v5098 = vpop.f32.mrb[0].mxu0
      %v5099 = vadd.f32 0.0, %v5098
      %v5100 = vpop.f32.mrb[0].mxu0
      %v5101 = vpop.f32.mrb[0].mxu0
      %v5102 = vadd.f32 0.0, %v5101
      %v5103 = vpop.f32.mrb[0].mxu0
      %5104 = vmatprep.mubr.bf16.mxu0 0
      %5105 = vmatmul.mubr.bf16.gmra.mrb[0].mxu0 %v4887
      %v5106 = vpop.f32.mrb[0].mxu0
      %v5107 = vadd.f32 0.0, %v5106
      %v5108 = vpop.f32.mrb[0].mxu0
      %v5109 = vpop.f32.mrb[0].mxu0
      %v5110 = vadd.f32 0.0, %v5109
      %v5111 = vpop.f32.mrb[0].mxu0
      %5112 = vdwg.mxu0
      %v5113 = vadd.f32 %v852, %v4987
      %v5114 = vadd.f32 %v853, %v4990
      %v5115 = vadd.f32 %v854, %v4995
      %v5116 = vadd.f32 %v855, %v4998
      %v5117 = vadd.f32 %v856, %v5003
      %v5118 = vadd.f32 %v857, %v5006
      %v5119 = vadd.f32 %v858, %v5011
      %v5120 = vadd.f32 %v859, %v5014
      %v5121 = vadd.f32 %v860, %v5019
      %v5122 = vadd.f32 %v861, %v5022
      %v5123 = vadd.f32 %v862, %v5027
      %v5124 = vadd.f32 %v863, %v5030
      %v5125 = vadd.f32 %v864, %v5035
      %v5126 = vadd.f32 %v865, %v5038
      %v5127 = vadd.f32 %v866, %v5043
      %v5128 = vadd.f32 %v867, %v5046
      %v5129 = vadd.f32 %v868, %v5051
      %v5130 = vadd.f32 %v869, %v5054
      %v5131 = vadd.f32 %v870, %v5059
      %v5132 = vadd.f32 %v871, %v5062
      %v5133 = vadd.f32 %v872, %v5067
      %v5134 = vadd.f32 %v873, %v5070
      %v5135 = vadd.f32 %v874, %v5075
      %v5136 = vadd.f32 %v875, %v5078
      %v5137 = vadd.f32 %v876, %v5083
      %v5138 = vadd.f32 %v877, %v5086
      %v5139 = vadd.f32 %v878, %v5091
      %v5140 = vadd.f32 %v879, %v5094
      %v5141 = vadd.f32 %v880, %v5099
      %v5142 = vadd.f32 %v881, %v5102
      %v5143 = vadd.f32 %v882, %v5107
      %v5144 = vadd.f32 %v883, %v5110
      %v5145 = vld [vmem:[%s23] sm:$0x1]
      %v5147 = vlaneseq
      %v5148 = vshrl.u32 %v5147, 7
      %v5149 = vsub.s32 0, %v5148
      %v5150 = vrot.slane %v5145, %v5149
      %v5152 = vadd.f32 %v5113, %v5150
      %v5153 = vadd.f32 %v5114, %v5150
      %v5154 = vadd.f32 %v5115, %v5150
      %v5155 = vadd.f32 %v5116, %v5150
      %v5156 = vadd.f32 %v5117, %v5150
      %v5157 = vadd.f32 %v5118, %v5150
      %v5158 = vadd.f32 %v5119, %v5150
      %v5159 = vadd.f32 %v5120, %v5150
      %v5160 = vadd.f32 %v5121, %v5150
      %v5161 = vadd.f32 %v5122, %v5150
      %v5162 = vadd.f32 %v5123, %v5150
      %v5163 = vadd.f32 %v5124, %v5150
      %v5164 = vadd.f32 %v5125, %v5150
      %v5165 = vadd.f32 %v5126, %v5150
      %v5166 = vadd.f32 %v5127, %v5150
      %v5167 = vadd.f32 %v5128, %v5150
      %v5168 = vadd.f32 %v5129, %v5150
      %v5169 = vadd.f32 %v5130, %v5150
      %v5170 = vadd.f32 %v5131, %v5150
      %v5171 = vadd.f32 %v5132, %v5150
      %v5172 = vadd.f32 %v5133, %v5150
      %v5173 = vadd.f32 %v5134, %v5150
      %v5174 = vadd.f32 %v5135, %v5150
      %v5175 = vadd.f32 %v5136, %v5150
      %v5176 = vadd.f32 %v5137, %v5150
      %v5177 = vadd.f32 %v5138, %v5150
      %v5178 = vadd.f32 %v5139, %v5150
      %v5179 = vadd.f32 %v5140, %v5150
      %v5180 = vadd.f32 %v5141, %v5150
      %v5181 = vadd.f32 %v5142, %v5150
      %v5182 = vadd.f32 %v5143, %v5150
      %v5183 = vadd.f32 %v5144, %v5150
      %v5184 = vmax.f32 %v5152, 0.0
      %v5185 = vmax.f32 %v5153, 0.0
      %v5186 = vmax.f32 %v5154, 0.0
      %v5187 = vmax.f32 %v5155, 0.0
      %v5188 = vmax.f32 %v5156, 0.0
      %v5189 = vmax.f32 %v5157, 0.0
      %v5190 = vmax.f32 %v5158, 0.0
      %v5191 = vmax.f32 %v5159, 0.0
      %v5192 = vmax.f32 %v5160, 0.0
      %v5193 = vmax.f32 %v5161, 0.0
      %v5194 = vmax.f32 %v5162, 0.0
      %v5195 = vmax.f32 %v5163, 0.0
      %v5196 = vmax.f32 %v5164, 0.0
      %v5197 = vmax.f32 %v5165, 0.0
      %v5198 = vmax.f32 %v5166, 0.0
      %v5199 = vmax.f32 %v5167, 0.0
      %v5200 = vmax.f32 %v5168, 0.0
      %v5201 = vmax.f32 %v5169, 0.0
      %v5202 = vmax.f32 %v5170, 0.0
      %v5203 = vmax.f32 %v5171, 0.0
      %v5204 = vmax.f32 %v5172, 0.0
      %v5205 = vmax.f32 %v5173, 0.0
      %v5206 = vmax.f32 %v5174, 0.0
      %v5207 = vmax.f32 %v5175, 0.0
      %v5208 = vmax.f32 %v5176, 0.0
      %v5209 = vmax.f32 %v5177, 0.0
      %v5210 = vmax.f32 %v5178, 0.0
      %v5211 = vmax.f32 %v5179, 0.0
      %v5212 = vmax.f32 %v5180, 0.0
      %v5213 = vmax.f32 %v5181, 0.0
      %v5214 = vmax.f32 %v5182, 0.0
      %v5215 = vmax.f32 %v5183, 0.0
      %v5216 = vpack.c.bf16 %v3574, %v3573
      %v5217 = vpack.c.bf16 %v3576, %v3575
      %v5218 = vpack.c.bf16 %v3578, %v3577
      %v5219 = vpack.c.bf16 %v3580, %v3579
      %v5220 = vpack.c.bf16 %v3582, %v3581
      %v5221 = vpack.c.bf16 %v3584, %v3583
      %v5222 = vpack.c.bf16 %v3586, %v3585
      %v5223 = vpack.c.bf16 %v3588, %v3587
      %v5224 = vpack.c.bf16 %v3590, %v3589
      %v5225 = vpack.c.bf16 %v3592, %v3591
      %v5226 = vpack.c.bf16 %v3594, %v3593
      %v5227 = vpack.c.bf16 %v3596, %v3595
      %v5228 = vpack.c.bf16 %v3598, %v3597
      %v5229 = vpack.c.bf16 %v3600, %v3599
      %v5230 = vpack.c.bf16 %v3602, %v3601
      %v5231 = vpack.c.bf16 %v3604, %v3603
      %v5232 = vld [vmem:[%s24] sm:$0xf]
      %v5233 = vld [vmem:[%s24 + $0x4] sm:$0xf]
      %v5234 = vld [vmem:[%s24 + $0x8] sm:$0xf]
      %v5235 = vld [vmem:[%s24 + $0xc] sm:$0xf]
      %v5236 = vld [vmem:[%s24 + $0x10] sm:$0xf]
      %v5237 = vld [vmem:[%s24 + $0x14] sm:$0xf]
      %v5238 = vld [vmem:[%s24 + $0x18] sm:$0xf]
      %v5239 = vld [vmem:[%s24 + $0x1c] sm:$0xf]
      %v5240 = vld [vmem:[%s24 + $0x20] sm:$0xf]
      %v5241 = vld [vmem:[%s24 + $0x24] sm:$0xf]
      %v5242 = vld [vmem:[%s24 + $0x28] sm:$0xf]
      %v5243 = vld [vmem:[%s24 + $0x2c] sm:$0xf]
      %v5244 = vld [vmem:[%s24 + $0x30] sm:$0xf]
      %v5245 = vld [vmem:[%s24 + $0x34] sm:$0xf]
      %v5246 = vld [vmem:[%s24 + $0x38] sm:$0xf]
      %v5247 = vld [vmem:[%s24 + $0x3c] sm:$0xf]
      %v5248 = vpack.c.bf16 %v5185, %v5184
      %v5249 = vpack.c.bf16 %v5187, %v5186
      %v5250 = vpack.c.bf16 %v5189, %v5188
      %v5251 = vpack.c.bf16 %v5191, %v5190
      %v5252 = vpack.c.bf16 %v5193, %v5192
      %v5253 = vpack.c.bf16 %v5195, %v5194
      %v5254 = vpack.c.bf16 %v5197, %v5196
      %v5255 = vpack.c.bf16 %v5199, %v5198
      %v5256 = vpack.c.bf16 %v5201, %v5200
      %v5257 = vpack.c.bf16 %v5203, %v5202
      %v5258 = vpack.c.bf16 %v5205, %v5204
      %v5259 = vpack.c.bf16 %v5207, %v5206
      %v5260 = vpack.c.bf16 %v5209, %v5208
      %v5261 = vpack.c.bf16 %v5211, %v5210
      %v5262 = vpack.c.bf16 %v5213, %v5212
      %v5263 = vpack.c.bf16 %v5215, %v5214
      %v5264 = vld [vmem:[%s25] sm:$0xf]
      %v5265 = vld [vmem:[%s25 + $0x4] sm:$0xf]
      %v5266 = vld [vmem:[%s25 + $0x8] sm:$0xf]
      %v5267 = vld [vmem:[%s25 + $0xc] sm:$0xf]
      %v5268 = vld [vmem:[%s25 + $0x10] sm:$0xf]
      %v5269 = vld [vmem:[%s25 + $0x14] sm:$0xf]
      %v5270 = vld [vmem:[%s25 + $0x18] sm:$0xf]
      %v5271 = vld [vmem:[%s25 + $0x1c] sm:$0xf]
      %v5272 = vld [vmem:[%s25 + $0x20] sm:$0xf]
      %v5273 = vld [vmem:[%s25 + $0x24] sm:$0xf]
      %v5274 = vld [vmem:[%s25 + $0x28] sm:$0xf]
      %v5275 = vld [vmem:[%s25 + $0x2c] sm:$0xf]
      %v5276 = vld [vmem:[%s25 + $0x30] sm:$0xf]
      %v5277 = vld [vmem:[%s25 + $0x34] sm:$0xf]
      %v5278 = vld [vmem:[%s25 + $0x38] sm:$0xf]
      %v5279 = vld [vmem:[%s25 + $0x3c] sm:$0xf]
      %v5296 = vunpack.c.l.b16 %v5264
      %v5297 = vunpack.c.l.b16 %v5265
      %v5298 = vunpack.c.l.b16 %v5266
      %v5299 = vunpack.c.l.b16 %v5267
      %v5300 = vunpack.c.l.b16 %v5268
      %v5301 = vunpack.c.l.b16 %v5269
      %v5302 = vunpack.c.l.b16 %v5270
      %v5303 = vunpack.c.l.b16 %v5271
      %v5304 = vunpack.c.l.b16 %v5272
      %v5305 = vunpack.c.l.b16 %v5273
      %v5306 = vunpack.c.l.b16 %v5274
      %v5307 = vunpack.c.l.b16 %v5275
      %v5308 = vunpack.c.l.b16 %v5276
      %v5309 = vunpack.c.l.b16 %v5277
      %v5310 = vunpack.c.l.b16 %v5278
      %v5311 = vunpack.c.l.b16 %v5279
      %v5312 = vpack.c.b16 %v5297, %v5296
      %v5313 = vpack.c.b16 %v5299, %v5298
      %v5314 = vpack.c.b16 %v5301, %v5300
      %v5315 = vpack.c.b16 %v5303, %v5302
      %v5316 = vpack.c.b16 %v5305, %v5304
      %v5317 = vpack.c.b16 %v5307, %v5306
      %v5318 = vpack.c.b16 %v5309, %v5308
      %v5319 = vpack.c.b16 %v5311, %v5310
      %5328 = vmatprep.subr.bf16.mxu0 0
      %5329 = vmatpush1.bf16.msra.mxu0 %v5312
      %5330 = vmatprep.subr.bf16.mxu0 0
      %5331 = vmatpush1.bf16.msra.mxu0 %v5313
      %5332 = vmatprep.subr.bf16.mxu0 0
      %5333 = vmatpush1.bf16.msra.mxu0 %v5314
      %5334 = vmatprep.subr.bf16.mxu0 0
      %5335 = vmatpush1.bf16.msra.mxu0 %v5315
      %5336 = vmatprep.subr.bf16.mxu0 0
      %5337 = vmatpush1.bf16.msra.mxu0 %v5316
      %5338 = vmatprep.subr.bf16.mxu0 0
      %5339 = vmatpush1.bf16.msra.mxu0 %v5317
      %5340 = vmatprep.subr.bf16.mxu0 0
      %5341 = vmatpush1.bf16.msra.mxu0 %v5318
      %5342 = vmatprep.subr.bf16.mxu0 0
      %5343 = vmatpush1.bf16.msra.mxu0 %v5319
      %5344 = vmatprep.subr.bf16.mxu0 0
      %5345 = vmatpush1.bf16.msra.mxu0 0
      %5346 = vmatprep.subr.bf16.mxu0 0
      %5347 = vmatpush1.bf16.msra.mxu0 0
      %5348 = vmatprep.subr.bf16.mxu0 0
      %5349 = vmatpush1.bf16.msra.mxu0 0
      %5350 = vmatprep.subr.bf16.mxu0 0
      %5351 = vmatpush1.bf16.msra.mxu0 0
      %5352 = vmatprep.subr.bf16.mxu0 0
      %5353 = vmatpush1.bf16.msra.mxu0 0
      %5354 = vmatprep.subr.bf16.mxu0 0
      %5355 = vmatpush1.bf16.msra.mxu0 0
      %5356 = vmatprep.subr.bf16.mxu0 0
      %5357 = vmatpush1.bf16.msra.mxu0 0
      %5358 = vmatprep.subr.bf16.mxu0 0
      %5359 = vmatpush1.bf16.msra.mxu0 0
      %5360 = vmatprep.mubr.bf16.mxu0 0
      %5361 = vmatmul.mubr.bf16.gmra.mrb[0].mxu0 %v5248
      %v5362 = vpop.f32.mrb[0].mxu0
      %v5363 = vadd.f32 0.0, %v5362
      %v5364 = vpop.f32.mrb[0].mxu0
      %v5365 = vpop.f32.mrb[0].mxu0
      %v5366 = vadd.f32 0.0, %v5365
      %v5367 = vpop.f32.mrb[0].mxu0
      %5368 = vmatprep.mubr.bf16.mxu0 0
      %5369 = vmatmul.mubr.bf16.gmra.mrb[0].mxu0 %v5249
      %v5370 = vpop.f32.mrb[0].mxu0
      %v5371 = vadd.f32 0.0, %v5370
      %v5372 = vpop.f32.mrb[0].mxu0
      %v5373 = vpop.f32.mrb[0].mxu0
      %v5374 = vadd.f32 0.0, %v5373
      %v5375 = vpop.f32.mrb[0].mxu0
      %5376 = vmatprep.mubr.bf16.mxu0 0
      %5377 = vmatmul.mubr.bf16.gmra.mrb[0].mxu0 %v5250
      %v5378 = vpop.f32.mrb[0].mxu0
      %v5379 = vadd.f32 0.0, %v5378
      %v5380 = vpop.f32.mrb[0].mxu0
      %v5381 = vpop.f32.mrb[0].mxu0
      %v5382 = vadd.f32 0.0, %v5381
      %v5383 = vpop.f32.mrb[0].mxu0
      %5384 = vmatprep.mubr.bf16.mxu0 0
      %5385 = vmatmul.mubr.bf16.gmra.mrb[0].mxu0 %v5251
      %v5386 = vpop.f32.mrb[0].mxu0
      %v5387 = vadd.f32 0.0, %v5386
      %v5388 = vpop.f32.mrb[0].mxu0
      %v5389 = vpop.f32.mrb[0].mxu0
      %v5390 = vadd.f32 0.0, %v5389
      %v5391 = vpop.f32.mrb[0].mxu0
      %5392 = vmatprep.mubr.bf16.mxu0 0
      %5393 = vmatmul.mubr.bf16.gmra.mrb[0].mxu0 %v5252
      %v5394 = vpop.f32.mrb[0].mxu0
      %v5395 = vadd.f32 0.0, %v5394
      %v5396 = vpop.f32.mrb[0].mxu0
      %v5397 = vpop.f32.mrb[0].mxu0
      %v5398 = vadd.f32 0.0, %v5397
      %v5399 = vpop.f32.mrb[0].mxu0
      %5400 = vmatprep.mubr.bf16.mxu0 0
      %5401 = vmatmul.mubr.bf16.gmra.mrb[0].mxu0 %v5253
      %v5402 = vpop.f32.mrb[0].mxu0
      %v5403 = vadd.f32 0.0, %v5402
      %v5404 = vpop.f32.mrb[0].mxu0
      %v5405 = vpop.f32.mrb[0].mxu0
      %v5406 = vadd.f32 0.0, %v5405
      %v5407 = vpop.f32.mrb[0].mxu0
      %5408 = vmatprep.mubr.bf16.mxu0 0
      %5409 = vmatmul.mubr.bf16.gmra.mrb[0].mxu0 %v5254
      %v5410 = vpop.f32.mrb[0].mxu0
      %v5411 = vadd.f32 0.0, %v5410
      %v5412 = vpop.f32.mrb[0].mxu0
      %v5413 = vpop.f32.mrb[0].mxu0
      %v5414 = vadd.f32 0.0, %v5413
      %v5415 = vpop.f32.mrb[0].mxu0
      %5416 = vmatprep.mubr.bf16.mxu0 0
      %5417 = vmatmul.mubr.bf16.gmra.mrb[0].mxu0 %v5255
      %v5418 = vpop.f32.mrb[0].mxu0
      %v5419 = vadd.f32 0.0, %v5418
      %v5420 = vpop.f32.mrb[0].mxu0
      %v5421 = vpop.f32.mrb[0].mxu0
      %v5422 = vadd.f32 0.0, %v5421
      %v5423 = vpop.f32.mrb[0].mxu0
      %5424 = vmatprep.mubr.bf16.mxu0 0
      %5425 = vmatmul.mubr.bf16.gmra.mrb[0].mxu0 %v5256
      %v5426 = vpop.f32.mrb[0].mxu0
      %v5427 = vadd.f32 0.0, %v5426
      %v5428 = vpop.f32.mrb[0].mxu0
      %v5429 = vpop.f32.mrb[0].mxu0
      %v5430 = vadd.f32 0.0, %v5429
      %v5431 = vpop.f32.mrb[0].mxu0
      %5432 = vmatprep.mubr.bf16.mxu0 0
      %5433 = vmatmul.mubr.bf16.gmra.mrb[0].mxu0 %v5257
      %v5434 = vpop.f32.mrb[0].mxu0
      %v5435 = vadd.f32 0.0, %v5434
      %v5436 = vpop.f32.mrb[0].mxu0
      %v5437 = vpop.f32.mrb[0].mxu0
      %v5438 = vadd.f32 0.0, %v5437
      %v5439 = vpop.f32.mrb[0].mxu0
      %5440 = vmatprep.mubr.bf16.mxu0 0
      %5441 = vmatmul.mubr.bf16.gmra.mrb[0].mxu0 %v5258
      %v5442 = vpop.f32.mrb[0].mxu0
      %v5443 = vadd.f32 0.0, %v5442
      %v5444 = vpop.f32.mrb[0].mxu0
      %v5445 = vpop.f32.mrb[0].mxu0
      %v5446 = vadd.f32 0.0, %v5445
      %v5447 = vpop.f32.mrb[0].mxu0
      %5448 = vmatprep.mubr.bf16.mxu0 0
      %5449 = vmatmul.mubr.bf16.gmra.mrb[0].mxu0 %v5259
      %v5450 = vpop.f32.mrb[0].mxu0
      %v5451 = vadd.f32 0.0, %v5450
      %v5452 = vpop.f32.mrb[0].mxu0
      %v5453 = vpop.f32.mrb[0].mxu0
      %v5454 = vadd.f32 0.0, %v5453
      %v5455 = vpop.f32.mrb[0].mxu0
      %5456 = vmatprep.mubr.bf16.mxu0 0
      %5457 = vmatmul.mubr.bf16.gmra.mrb[0].mxu0 %v5260
      %v5458 = vpop.f32.mrb[0].mxu0
      %v5459 = vadd.f32 0.0, %v5458
      %v5460 = vpop.f32.mrb[0].mxu0
      %v5461 = vpop.f32.mrb[0].mxu0
      %v5462 = vadd.f32 0.0, %v5461
      %v5463 = vpop.f32.mrb[0].mxu0
      %5464 = vmatprep.mubr.bf16.mxu0 0
      %5465 = vmatmul.mubr.bf16.gmra.mrb[0].mxu0 %v5261
      %v5466 = vpop.f32.mrb[0].mxu0
      %v5467 = vadd.f32 0.0, %v5466
      %v5468 = vpop.f32.mrb[0].mxu0
      %v5469 = vpop.f32.mrb[0].mxu0
      %v5470 = vadd.f32 0.0, %v5469
      %v5471 = vpop.f32.mrb[0].mxu0
      %5472 = vmatprep.mubr.bf16.mxu0 0
      %5473 = vmatmul.mubr.bf16.gmra.mrb[0].mxu0 %v5262
      %v5474 = vpop.f32.mrb[0].mxu0
      %v5475 = vadd.f32 0.0, %v5474
      %v5476 = vpop.f32.mrb[0].mxu0
      %v5477 = vpop.f32.mrb[0].mxu0
      %v5478 = vadd.f32 0.0, %v5477
      %v5479 = vpop.f32.mrb[0].mxu0
      %5480 = vmatprep.mubr.bf16.mxu0 0
      %5481 = vmatmul.mubr.bf16.gmra.mrb[0].mxu0 %v5263
      %v5482 = vpop.f32.mrb[0].mxu0
      %v5483 = vadd.f32 0.0, %v5482
      %v5484 = vpop.f32.mrb[0].mxu0
      %v5485 = vpop.f32.mrb[0].mxu0
      %v5486 = vadd.f32 0.0, %v5485
      %v5487 = vpop.f32.mrb[0].mxu0
      %5488 = vdwg.mxu0
      %v5505 = vunpack.c.l.b16 %v5232
      %v5506 = vunpack.c.l.b16 %v5233
      %v5507 = vunpack.c.l.b16 %v5234
      %v5508 = vunpack.c.l.b16 %v5235
      %v5509 = vunpack.c.l.b16 %v5236
      %v5510 = vunpack.c.l.b16 %v5237
      %v5511 = vunpack.c.l.b16 %v5238
      %v5512 = vunpack.c.l.b16 %v5239
      %v5513 = vunpack.c.l.b16 %v5240
      %v5514 = vunpack.c.l.b16 %v5241
      %v5515 = vunpack.c.l.b16 %v5242
      %v5516 = vunpack.c.l.b16 %v5243
      %v5517 = vunpack.c.l.b16 %v5244
      %v5518 = vunpack.c.l.b16 %v5245
      %v5519 = vunpack.c.l.b16 %v5246
      %v5520 = vunpack.c.l.b16 %v5247
      %v5521 = vpack.c.b16 %v5506, %v5505
      %v5522 = vpack.c.b16 %v5508, %v5507
      %v5523 = vpack.c.b16 %v5510, %v5509
      %v5524 = vpack.c.b16 %v5512, %v5511
      %v5525 = vpack.c.b16 %v5514, %v5513
      %v5526 = vpack.c.b16 %v5516, %v5515
      %v5527 = vpack.c.b16 %v5518, %v5517
      %v5528 = vpack.c.b16 %v5520, %v5519
      %5537 = vmatprep.subr.bf16.mxu0 0
      %5538 = vmatpush1.bf16.msra.mxu0 %v5521
      %5539 = vmatprep.subr.bf16.mxu0 0
      %5540 = vmatpush1.bf16.msra.mxu0 %v5522
      %5541 = vmatprep.subr.bf16.mxu0 0
      %5542 = vmatpush1.bf16.msra.mxu0 %v5523
      %5543 = vmatprep.subr.bf16.mxu0 0
      %5544 = vmatpush1.bf16.msra.mxu0 %v5524
      %5545 = vmatprep.subr.bf16.mxu0 0
      %5546 = vmatpush1.bf16.msra.mxu0 %v5525
      %5547 = vmatprep.subr.bf16.mxu0 0
      %5548 = vmatpush1.bf16.msra.mxu0 %v5526
      %5549 = vmatprep.subr.bf16.mxu0 0
      %5550 = vmatpush1.bf16.msra.mxu0 %v5527
      %5551 = vmatprep.subr.bf16.mxu0 0
      %5552 = vmatpush1.bf16.msra.mxu0 %v5528
      %5553 = vmatprep.subr.bf16.mxu0 0
      %5554 = vmatpush1.bf16.msra.mxu0 0
      %5555 = vmatprep.subr.bf16.mxu0 0
      %5556 = vmatpush1.bf16.msra.mxu0 0
      %5557 = vmatprep.subr.bf16.mxu0 0
      %5558 = vmatpush1.bf16.msra.mxu0 0
      %5559 = vmatprep.subr.bf16.mxu0 0
      %5560 = vmatpush1.bf16.msra.mxu0 0
      %5561 = vmatprep.subr.bf16.mxu0 0
      %5562 = vmatpush1.bf16.msra.mxu0 0
      %5563 = vmatprep.subr.bf16.mxu0 0
      %5564 = vmatpush1.bf16.msra.mxu0 0
      %5565 = vmatprep.subr.bf16.mxu0 0
      %5566 = vmatpush1.bf16.msra.mxu0 0
      %5567 = vmatprep.subr.bf16.mxu0 0
      %5568 = vmatpush1.bf16.msra.mxu0 0
      %5569 = vmatprep.mubr.bf16.mxu0 0
      %5570 = vmatmul.mubr.bf16.gmra.mrb[0].mxu0 %v5216
      %v5571 = vpop.f32.mrb[0].mxu0
      %v5572 = vadd.f32 %v5363, %v5571
      %v5573 = vpop.f32.mrb[0].mxu0
      %v5574 = vpop.f32.mrb[0].mxu0
      %v5575 = vadd.f32 %v5366, %v5574
      %v5576 = vpop.f32.mrb[0].mxu0
      %5577 = vmatprep.mubr.bf16.mxu0 0
      %5578 = vmatmul.mubr.bf16.gmra.mrb[0].mxu0 %v5217
      %v5579 = vpop.f32.mrb[0].mxu0
      %v5580 = vadd.f32 %v5371, %v5579
      %v5581 = vpop.f32.mrb[0].mxu0
      %v5582 = vpop.f32.mrb[0].mxu0
      %v5583 = vadd.f32 %v5374, %v5582
      %v5584 = vpop.f32.mrb[0].mxu0
      %5585 = vmatprep.mubr.bf16.mxu0 0
      %5586 = vmatmul.mubr.bf16.gmra.mrb[0].mxu0 %v5218
      %v5587 = vpop.f32.mrb[0].mxu0
      %v5588 = vadd.f32 %v5379, %v5587
      %v5589 = vpop.f32.mrb[0].mxu0
      %v5590 = vpop.f32.mrb[0].mxu0
      %v5591 = vadd.f32 %v5382, %v5590
      %v5592 = vpop.f32.mrb[0].mxu0
      %5593 = vmatprep.mubr.bf16.mxu0 0
      %5594 = vmatmul.mubr.bf16.gmra.mrb[0].mxu0 %v5219
      %v5595 = vpop.f32.mrb[0].mxu0
      %v5596 = vadd.f32 %v5387, %v5595
      %v5597 = vpop.f32.mrb[0].mxu0
      %v5598 = vpop.f32.mrb[0].mxu0
      %v5599 = vadd.f32 %v5390, %v5598
      %v5600 = vpop.f32.mrb[0].mxu0
      %5601 = vmatprep.mubr.bf16.mxu0 0
      %5602 = vmatmul.mubr.bf16.gmra.mrb[0].mxu0 %v5220
      %v5603 = vpop.f32.mrb[0].mxu0
      %v5604 = vadd.f32 %v5395, %v5603
      %v5605 = vpop.f32.mrb[0].mxu0
      %v5606 = vpop.f32.mrb[0].mxu0
      %v5607 = vadd.f32 %v5398, %v5606
      %v5608 = vpop.f32.mrb[0].mxu0
      %5609 = vmatprep.mubr.bf16.mxu0 0
      %5610 = vmatmul.mubr.bf16.gmra.mrb[0].mxu0 %v5221
      %v5611 = vpop.f32.mrb[0].mxu0
      %v5612 = vadd.f32 %v5403, %v5611
      %v5613 = vpop.f32.mrb[0].mxu0
      %v5614 = vpop.f32.mrb[0].mxu0
      %v5615 = vadd.f32 %v5406, %v5614
      %v5616 = vpop.f32.mrb[0].mxu0
      %5617 = vmatprep.mubr.bf16.mxu0 0
      %5618 = vmatmul.mubr.bf16.gmra.mrb[0].mxu0 %v5222
      %v5619 = vpop.f32.mrb[0].mxu0
      %v5620 = vadd.f32 %v5411, %v5619
      %v5621 = vpop.f32.mrb[0].mxu0
      %v5622 = vpop.f32.mrb[0].mxu0
      %v5623 = vadd.f32 %v5414, %v5622
      %v5624 = vpop.f32.mrb[0].mxu0
      %5625 = vmatprep.mubr.bf16.mxu0 0
      %5626 = vmatmul.mubr.bf16.gmra.mrb[0].mxu0 %v5223
      %v5627 = vpop.f32.mrb[0].mxu0
      %v5628 = vadd.f32 %v5419, %v5627
      %v5629 = vpop.f32.mrb[0].mxu0
      %v5630 = vpop.f32.mrb[0].mxu0
      %v5631 = vadd.f32 %v5422, %v5630
      %v5632 = vpop.f32.mrb[0].mxu0
      %5633 = vmatprep.mubr.bf16.mxu0 0
      %5634 = vmatmul.mubr.bf16.gmra.mrb[0].mxu0 %v5224
      %v5635 = vpop.f32.mrb[0].mxu0
      %v5636 = vadd.f32 %v5427, %v5635
      %v5637 = vpop.f32.mrb[0].mxu0
      %v5638 = vpop.f32.mrb[0].mxu0
      %v5639 = vadd.f32 %v5430, %v5638
      %v5640 = vpop.f32.mrb[0].mxu0
      %5641 = vmatprep.mubr.bf16.mxu0 0
      %5642 = vmatmul.mubr.bf16.gmra.mrb[0].mxu0 %v5225
      %v5643 = vpop.f32.mrb[0].mxu0
      %v5644 = vadd.f32 %v5435, %v5643
      %v5645 = vpop.f32.mrb[0].mxu0
      %v5646 = vpop.f32.mrb[0].mxu0
      %v5647 = vadd.f32 %v5438, %v5646
      %v5648 = vpop.f32.mrb[0].mxu0
      %5649 = vmatprep.mubr.bf16.mxu0 0
      %5650 = vmatmul.mubr.bf16.gmra.mrb[0].mxu0 %v5226
      %v5651 = vpop.f32.mrb[0].mxu0
      %v5652 = vadd.f32 %v5443, %v5651
      %v5653 = vpop.f32.mrb[0].mxu0
      %v5654 = vpop.f32.mrb[0].mxu0
      %v5655 = vadd.f32 %v5446, %v5654
      %v5656 = vpop.f32.mrb[0].mxu0
      %5657 = vmatprep.mubr.bf16.mxu0 0
      %5658 = vmatmul.mubr.bf16.gmra.mrb[0].mxu0 %v5227
      %v5659 = vpop.f32.mrb[0].mxu0
      %v5660 = vadd.f32 %v5451, %v5659
      %v5661 = vpop.f32.mrb[0].mxu0
      %v5662 = vpop.f32.mrb[0].mxu0
      %v5663 = vadd.f32 %v5454, %v5662
      %v5664 = vpop.f32.mrb[0].mxu0
      %5665 = vmatprep.mubr.bf16.mxu0 0
      %5666 = vmatmul.mubr.bf16.gmra.mrb[0].mxu0 %v5228
      %v5667 = vpop.f32.mrb[0].mxu0
      %v5668 = vadd.f32 %v5459, %v5667
      %v5669 = vpop.f32.mrb[0].mxu0
      %v5670 = vpop.f32.mrb[0].mxu0
      %v5671 = vadd.f32 %v5462, %v5670
      %v5672 = vpop.f32.mrb[0].mxu0
      %5673 = vmatprep.mubr.bf16.mxu0 0
      %5674 = vmatmul.mubr.bf16.gmra.mrb[0].mxu0 %v5229
      %v5675 = vpop.f32.mrb[0].mxu0
      %v5676 = vadd.f32 %v5467, %v5675
      %v5677 = vpop.f32.mrb[0].mxu0
      %v5678 = vpop.f32.mrb[0].mxu0
      %v5679 = vadd.f32 %v5470, %v5678
      %v5680 = vpop.f32.mrb[0].mxu0
      %5681 = vmatprep.mubr.bf16.mxu0 0
      %5682 = vmatmul.mubr.bf16.gmra.mrb[0].mxu0 %v5230
      %v5683 = vpop.f32.mrb[0].mxu0
      %v5684 = vadd.f32 %v5475, %v5683
      %v5685 = vpop.f32.mrb[0].mxu0
      %v5686 = vpop.f32.mrb[0].mxu0
      %v5687 = vadd.f32 %v5478, %v5686
      %v5688 = vpop.f32.mrb[0].mxu0
      %5689 = vmatprep.mubr.bf16.mxu0 0
      %5690 = vmatmul.mubr.bf16.gmra.mrb[0].mxu0 %v5231
      %v5691 = vpop.f32.mrb[0].mxu0
      %v5692 = vadd.f32 %v5483, %v5691
      %v5693 = vpop.f32.mrb[0].mxu0
      %v5694 = vpop.f32.mrb[0].mxu0
      %v5695 = vadd.f32 %v5486, %v5694
      %v5696 = vpop.f32.mrb[0].mxu0
      %5697 = vdwg.mxu0
      %v5698 = vld [vmem:[%s26] sm:$0x1]
      %v5700 = vlaneseq
      %v5701 = vshrl.u32 %v5700, 7
      %v5702 = vsub.s32 0, %v5701
      %v5703 = vrot.slane %v5698, %v5702
      %v5705 = vadd.f32 %v5572, %v5703
      %v5706 = vadd.f32 %v5575, %v5703
      %v5707 = vadd.f32 %v5580, %v5703
      %v5708 = vadd.f32 %v5583, %v5703
      %v5709 = vadd.f32 %v5588, %v5703
      %v5710 = vadd.f32 %v5591, %v5703
      %v5711 = vadd.f32 %v5596, %v5703
      %v5712 = vadd.f32 %v5599, %v5703
      %v5713 = vadd.f32 %v5604, %v5703
      %v5714 = vadd.f32 %v5607, %v5703
      %v5715 = vadd.f32 %v5612, %v5703
      %v5716 = vadd.f32 %v5615, %v5703
      %v5717 = vadd.f32 %v5620, %v5703
      %v5718 = vadd.f32 %v5623, %v5703
      %v5719 = vadd.f32 %v5628, %v5703
      %v5720 = vadd.f32 %v5631, %v5703
      %v5721 = vadd.f32 %v5636, %v5703
      %v5722 = vadd.f32 %v5639, %v5703
      %v5723 = vadd.f32 %v5644, %v5703
      %v5724 = vadd.f32 %v5647, %v5703
      %v5725 = vadd.f32 %v5652, %v5703
      %v5726 = vadd.f32 %v5655, %v5703
      %v5727 = vadd.f32 %v5660, %v5703
      %v5728 = vadd.f32 %v5663, %v5703
      %v5729 = vadd.f32 %v5668, %v5703
      %v5730 = vadd.f32 %v5671, %v5703
      %v5731 = vadd.f32 %v5676, %v5703
      %v5732 = vadd.f32 %v5679, %v5703
      %v5733 = vadd.f32 %v5684, %v5703
      %v5734 = vadd.f32 %v5687, %v5703
      %v5735 = vadd.f32 %v5692, %v5703
      %v5736 = vadd.f32 %v5695, %v5703
      %5737 = vst [vmem:[%s818] sm:$0xff] %v5705
      %5738 = vst [vmem:[%s818 + $0x8] sm:$0xff] %v5706
      %5739 = vst [vmem:[%s818 + $0x10] sm:$0xff] %v5707
      %5740 = vst [vmem:[%s818 + $0x18] sm:$0xff] %v5708
      %5741 = vst [vmem:[%s818 + $0x20] sm:$0xff] %v5709
      %5742 = vst [vmem:[%s818 + $0x28] sm:$0xff] %v5710
      %5743 = vst [vmem:[%s818 + $0x30] sm:$0xff] %v5711
      %5744 = vst [vmem:[%s818 + $0x38] sm:$0xff] %v5712
      %5745 = vst [vmem:[%s818 + $0x40] sm:$0xff] %v5713
      %5746 = vst [vmem:[%s818 + $0x48] sm:$0xff] %v5714
      %5747 = vst [vmem:[%s818 + $0x50] sm:$0xff] %v5715
      %5748 = vst [vmem:[%s818 + $0x58] sm:$0xff] %v5716
      %5749 = vst [vmem:[%s818 + $0x60] sm:$0xff] %v5717
      %5750 = vst [vmem:[%s818 + $0x68] sm:$0xff] %v5718
      %5751 = vst [vmem:[%s818 + $0x70] sm:$0xff] %v5719
      %5752 = vst [vmem:[%s818 + $0x78] sm:$0xff] %v5720
      %5753 = vst [vmem:[%s818 + $0x80] sm:$0xff] %v5721
      %5754 = vst [vmem:[%s818 + $0x88] sm:$0xff] %v5722
      %5755 = vst [vmem:[%s818 + $0x90] sm:$0xff] %v5723
      %5756 = vst [vmem:[%s818 + $0x98] sm:$0xff] %v5724
      %5757 = vst [vmem:[%s818 + $0xa0] sm:$0xff] %v5725
      %5758 = vst [vmem:[%s818 + $0xa8] sm:$0xff] %v5726
      %5759 = vst [vmem:[%s818 + $0xb0] sm:$0xff] %v5727
      %5760 = vst [vmem:[%s818 + $0xb8] sm:$0xff] %v5728
      %5761 = vst [vmem:[%s818 + $0xc0] sm:$0xff] %v5729
      %5762 = vst [vmem:[%s818 + $0xc8] sm:$0xff] %v5730
      %5763 = vst [vmem:[%s818 + $0xd0] sm:$0xff] %v5731
      %5764 = vst [vmem:[%s818 + $0xd8] sm:$0xff] %v5732
      %5765 = vst [vmem:[%s818 + $0xe0] sm:$0xff] %v5733
      %5766 = vst [vmem:[%s818 + $0xe8] sm:$0xff] %v5734
      %5767 = vst [vmem:[%s818 + $0xf0] sm:$0xff] %v5735
      %5768 = vst [vmem:[%s818 + $0xf8] sm:$0xff] %v5736
      %p5769 = scmp.lt.s32.totalorder %s38, 1
      %s5770 = scalar_select %p5769, %s38, 1
      %s5771 = smul.addr %s5770, 32
      %s5772 = smul.addr %s5771, 8
      %s5773 = scalar_lea.vmem %s27, %s5772
      // Predicated region
      $region129: #{dual_gcn_forward.1} parent=127 // pred_check
        %p5774 = pneg %p628
      $region130: #{dual_gcn_forward.1} parent=127 // pred_check_branch
        %5776 = sbr.rel (%p5774) target = $region132
      $region131: #{dual_gcn_forward.1} parent=127 // pred_region
        _
      $region132: #{dual_gcn_forward.1} parent=127 // pred_fallthru
        _
    $region128: #{dual_gcn_forward.1} parent=5 // pred_fallthru
      _
    %p5777 = scmp.le.s32.totalorder 2, %s33
    // Predicated region
    $region133: #{dual_gcn_forward.1} parent=5 // pred_check
      %p5778 = pneg %p5777
    $region134: #{dual_gcn_forward.1} parent=5 // pred_check_branch
      %5780 = sbr.rel (%p5778) target = $region136
    $region135: #{dual_gcn_forward.1} parent=5 // pred_region
      %s5781 = ssub.s32 %s33, 2
      // Predicated region
      $region137: #{dual_gcn_forward.1} parent=135 // pred_check
        %p5782 = pneg %p634
      $region138: #{dual_gcn_forward.1} parent=135 // pred_check_branch
        %5784 = sbr.rel (%p5782) target = $region140
      $region139: #{dual_gcn_forward.1} parent=135 // pred_region
        %p5785 = scmp.lt.s32.totalorder %s39, 1
        %s5786 = scalar_select %p5785, %s39, 1
        %s5787 = smul.addr %s5786, 32
        %s5788 = smul.addr %s5787, 8
        %s5789 = scalar_lea.vmem %s27, %s5788
      $region140: #{dual_gcn_forward.1} parent=135 // pred_fallthru
        _
    $region136: #{dual_gcn_forward.1} parent=5 // pred_fallthru
      _
  $region6: #{dual_gcn_forward.1} parent=0 // loop_footer
    %s37 = sadd.s32 1, %s33
  $region7: #{dual_gcn_forward.1} parent=0 // loop_footer_branch
    %32 = sbr.rel target = $region3
  $region8: #{dual_gcn_forward.1} parent=0 // loop_exit
    _

</llo_original>
